<compile_context>
chip_gen: v7x
topology: tpu7x:2x2x1
jax: 0.10.0
libtpu: 0.0.40
codegen_flags: <defaults>
</compile_context>

<pallas_src>
import functools
import math

import jax
import jax.numpy as jnp
from jax import lax
from jax.experimental import pallas as pl
from jax.experimental.pallas import tpu as pltpu

# Stand-ins for the undefined `st` module constants in the reference code.
SERVICE_INPUT_SIZE = 2
SERVICE_OUTPUT_SIZE = 2

_SUBLANE = 8
_LANE = 128


def _round_up(x, m):
    return (x + m - 1) // m * m


def _pad_gate_cols(w, H, Hp):
    """Pad the trailing (4*H) gate axis to (4*Hp) *per gate* (PyTorch order [i,f,g,o])."""
    lead = w.shape[:-1]
    w4 = w.reshape(lead + (4, H))
    w4 = jnp.pad(w4, [(0, 0)] * len(lead) + [(0, 0), (0, Hp - H)])
    return w4.reshape(lead + (4 * Hp,))


# ----------------------------------------------------------------------------
# Fused kernel: n_layers x LSTM -> ReLU -> Linear -> LogSoftmax
# ----------------------------------------------------------------------------
def _make_fused_kernel(n_layers, S, Bt, In, Hp, O, Op, Oc, Tc, unroll_t):
    n_chunks = S // Tc
    n_head_chunks = Op // Oc
    H4 = 4 * Hp

    def kernel(*refs):
        it = iter(refs)
        x_ref = next(it)                        # (S, Bt, In)   bf16 embedded tokens
        h0_ref = next(it)                       # (L, Bt, Hp)   f32
        c0_ref = next(it)                       # (L, Bt, Hp)   f32
        layer_refs = []
        for _ in range(n_layers):
            wih_ref = next(it)                  # (in_dim, 4Hp) bf16
            whh_ref = next(it)                  # (Hp, 4Hp)     bf16
            b_ref = next(it)                    # (1, 4Hp)      f32 (b_ih + b_hh)
            layer_refs.append((wih_ref, whh_ref, b_ref))
        wl_ref = next(it)                       # (Hp, Op)      bf16 head weight
        bl_ref = next(it)                       # (1, Op)       f32
        out_ref = next(it)                      # (S, Bt, Op)   f32 log-probs
        hn_ref = next(it)                       # (L, Bt, Hp)   f32
        cn_ref = next(it)                       # (L, Bt, Hp)   f32
        pre_ref = next(it)                      # (Tc, Bt, 4Hp) f32 scratch (input proj.)
        act_ref = next(it)                      # (S, Bt, Hp)   bf16 scratch (layer outs)

        def run_layer(l, in_ref, in_dim):
            wih_ref, whh_ref, b_ref = layer_refs[l]
            whh = whh_ref[...]                  # hoisted out of the serial loop
            bias = b_ref[...]

            def chunk_body(ci, carry):
                h, c = carry
                t0 = pl.multiple_of(ci * Tc, Tc)
                # Hoisted input projection for this time chunk: one well-shaped matmul,
                # off the serial critical path.
                chunk_in = in_ref[pl.ds(t0, Tc)]                     # (Tc, Bt, in_dim) bf16
                pre = jnp.dot(chunk_in.reshape(Tc * Bt, in_dim), wih_ref[...],
                              preferred_element_type=jnp.float32) + bias
                pre_ref[...] = pre.reshape(Tc, Bt, H4)

                def step(t, carry2):
                    h2, c2 = carry2
                    gates = pre_ref[t] + jnp.dot(h2.astype(jnp.bfloat16), whh,
                                                 preferred_element_type=jnp.float32)
                    # Hp is a multiple of 128 -> lane-aligned gate slices (no relayout).
                    i_g = jax.nn.sigmoid(gates[:, 0 * Hp:1 * Hp])
                    f_g = jax.nn.sigmoid(gates[:, 1 * Hp:2 * Hp])
                    g_g = jnp.tanh(gates[:, 2 * Hp:3 * Hp])
                    o_g = jax.nn.sigmoid(gates[:, 3 * Hp:4 * Hp])
                    c_new = f_g * c2 + i_g * g_g
                    h_new = o_g * jnp.tanh(c_new)
                    act_ref[t0 + t] = h_new.astype(jnp.bfloat16)
                    return (h_new, c_new)

                return lax.fori_loop(0, Tc, step, (h, c), unroll=unroll_t)

            h_fin, c_fin = lax.fori_loop(
                0, n_chunks, chunk_body, (h0_ref[l], c0_ref[l]),
                unroll=(n_chunks == 1))
            # Final states written once, after the recurrence.
            hn_ref[l] = h_fin
            cn_ref[l] = c_fin

        # Layer 0 consumes the embedded tokens; later layers consume act_ref (in place:
        # each chunk is read into `pre` before its positions are overwritten).
        run_layer(0, x_ref, In)
        for l in range(1, n_layers):
            # TODO(synk): training-mode inter-layer dropout skipped (inference identity).
            run_layer(l, act_ref, Hp)

        # Head: ReLU -> Linear -> LogSoftmax, lane-dense 128-multiple stores, vocab-chunked.
        feats = jnp.maximum(act_ref[...].reshape(S * Bt, Hp), 0)     # bf16
        if n_head_chunks == 1:
            logits = jnp.dot(feats, wl_ref[...],
                             preferred_element_type=jnp.float32) + bl_ref[...]
            col = lax.broadcasted_iota(jnp.int32, (S * Bt, Op), 1)
            logits = jnp.where(col < O, logits, jnp.float32(-1e30))  # mask padded columns
            m = jnp.max(logits, axis=-1, keepdims=True)
            lse = m + jnp.log(jnp.sum(jnp.exp(logits - m), axis=-1, keepdims=True))
            out_ref[...] = (logits - lse).reshape(S, Bt, Op)
        else:
            # Online logsumexp across vocab chunks; logits streamed straight to out_ref,
            # normalized in a second pass.
            m_run = jnp.full((S * Bt, 1), -1e30, jnp.float32)
            s_run = jnp.zeros((S * Bt, 1), jnp.float32)
            for hc in range(n_head_chunks):
                j0 = hc * Oc
                wblk = wl_ref[:, pl.ds(j0, Oc)]
                bblk = bl_ref[:, pl.ds(j0, Oc)]
                logits = jnp.dot(feats, wblk,
                                 preferred_element_type=jnp.float32) + bblk
                col = lax.broadcasted_iota(jnp.int32, (S * Bt, Oc), 1) + j0
                logits = jnp.where(col < O, logits, jnp.float32(-1e30))
                out_ref[:, :, pl.ds(j0, Oc)] = logits.reshape(S, Bt, Oc)
                m_new = jnp.maximum(m_run, jnp.max(logits, axis=-1, keepdims=True))
                s_run = (s_run * jnp.exp(m_run - m_new)
                         + jnp.sum(jnp.exp(logits - m_new), axis=-1, keepdims=True))
                m_run = m_new
            lse = (m_run + jnp.log(s_run)).reshape(S, Bt, 1)
            out_ref[...] = out_ref[...] - lse

    return kernel


def _fused_forward(x_emb, h0, c0, lstm_params, l1_w_t, l1_b, n_layers, hid_size):
    """x_emb: (S, B, In) f32; h0/c0: (L, B, H) f32. Returns ((S,B,O) logp, (h_n, c_n))."""
    S, B, In = x_emb.shape
    H = hid_size
    O = l1_w_t.shape[1]

    Hp = _round_up(H, _LANE)          # lane-aligned gates (padded lanes are inert)
    Op = _round_up(O, _LANE)          # lane-dense head output

    # Batch tiling: 2 "parallel" tiles (v7x megacore) only when each keeps >= 8 rows.
    Bp0 = _round_up(max(B, 1), _SUBLANE)
    if Bp0 >= 2 * _SUBLANE:
        Bt = _round_up(-(-Bp0 // 2), _SUBLANE)
        n_bt = 2
    else:
        Bt = Bp0
        n_bt = 1
    Bp = Bt * n_bt

    # Time chunk for the hoisted input projection (bounds the pre-gate scratch).
    if S <= 64:
        Tc = S
    else:
        Tc = 1
        for d in (64, 32, 16, 8, 4, 2):
            if S % d == 0:
                Tc = d
                break
    unroll_t = Tc if Tc <= 16 else 8

    # Head vocab chunk (lane-dense, divides Op).
    if Op <= 512:
        Oc = Op
    elif Op % 512 == 0:
        Oc = 512
    else:
        Oc = _LANE

    # ---- pad / cast operands (wrapper-side layout plumbing) ----
    xp = jnp.pad(x_emb, ((0, 0), (0, Bp - B), (0, 0))).astype(jnp.bfloat16)
    h0p = jnp.pad(h0, ((0, 0), (0, Bp - B), (0, Hp - H))).astype(jnp.float32)
    c0p = jnp.pad(c0, ((0, 0), (0, Bp - B), (0, Hp - H))).astype(jnp.float32)

    lstm_args = []
    for li, p in enumerate(lstm_params):
        w_ih_p = _pad_gate_cols(p["w_ih_t"], H, Hp)                 # (in_dim, 4Hp)
        if li > 0:
            w_ih_p = jnp.pad(w_ih_p, ((0, Hp - H), (0, 0)))         # (Hp, 4Hp)
        w_hh_p = jnp.pad(_pad_gate_cols(p["w_hh_t"], H, Hp), ((0, Hp - H), (0, 0)))
        b_p = _pad_gate_cols(p["b"], H, Hp)
        lstm_args += [w_ih_p.astype(jnp.bfloat16),
                      w_hh_p.astype(jnp.bfloat16),
                      b_p.astype(jnp.float32)]

    wlp = jnp.pad(l1_w_t, ((0, Hp - H), (0, Op - O))).astype(jnp.bfloat16)
    blp = jnp.pad(l1_b, ((0, 0), (0, Op - O))).astype(jnp.float32)

    args = [xp, h0p, c0p] + lstm_args + [wlp, blp]

    # ---- explicit BlockSpecs (batch-tiled activations/states, resident weights) ----
    in_specs = [
        pl.BlockSpec((S, Bt, In), lambda b: (0, b, 0)),
        pl.BlockSpec((n_layers, Bt, Hp), lambda b: (0, b, 0)),
        pl.BlockSpec((n_layers, Bt, Hp), lambda b: (0, b, 0)),
    ]
    for li in range(n_layers):
        in_dim = In if li == 0 else Hp
        in_specs += [
            pl.BlockSpec((in_dim, 4 * Hp), lambda b: (0, 0)),
            pl.BlockSpec((Hp, 4 * Hp), lambda b: (0, 0)),
            pl.BlockSpec((1, 4 * Hp), lambda b: (0, 0)),
        ]
    in_specs += [
        pl.BlockSpec((Hp, Op), lambda b: (0, 0)),
        pl.BlockSpec((1, Op), lambda b: (0, 0)),
    ]
    out_specs = (
        pl.BlockSpec((S, Bt, Op), lambda b: (0, b, 0)),
        pl.BlockSpec((n_layers, Bt, Hp), lambda b: (0, b, 0)),
        pl.BlockSpec((n_layers, Bt, Hp), lambda b: (0, b, 0)),
    )
    out_shapes = (
        jax.ShapeDtypeStruct((S, Bp, Op), jnp.float32),
        jax.ShapeDtypeStruct((n_layers, Bp, Hp), jnp.float32),
        jax.ShapeDtypeStruct((n_layers, Bp, Hp), jnp.float32),
    )
    scratch_shapes = [
        pltpu.VMEM((Tc, Bt, 4 * Hp), jnp.float32),   # hoisted input projections (chunked)
        pltpu.VMEM((S, Bt, Hp), jnp.bfloat16),       # inter-layer activations
    ]

    # ---- VMEM budget estimate (2x for double buffering) + explicit limit ----
    def nbytes(shape, dtype):
        return math.prod(shape) * jnp.dtype(dtype).itemsize

    est = 2 * nbytes((S, Bt, In), jnp.bfloat16)
    est += 2 * 2 * nbytes((n_layers, Bt, Hp), jnp.float32)
    for li in range(n_layers):
        in_dim = In if li == 0 else Hp
        est += 2 * (nbytes((in_dim, 4 * Hp), jnp.bfloat16)
                    + nbytes((Hp, 4 * Hp), jnp.bfloat16)
                    + nbytes((1, 4 * Hp), jnp.float32))
    est += 2 * (nbytes((Hp, Op), jnp.bfloat16) + nbytes((1, Op), jnp.float32))
    est += 2 * nbytes((S, Bt, Op), jnp.float32)
    est += 2 * 2 * nbytes((n_layers, Bt, Hp), jnp.float32)
    est += nbytes((Tc, Bt, 4 * Hp), jnp.float32) + nbytes((S, Bt, Hp), jnp.bfloat16)
    vmem_limit = int(min(max(est + (4 << 20), 32 << 20), 64 << 20))

    kernel = _make_fused_kernel(n_layers, S, Bt, In, Hp, O, Op, Oc, Tc, unroll_t)
    out3d, hn, cn = pl.pallas_call(
        kernel,
        grid=(n_bt,),
        in_specs=in_specs,
        out_specs=out_specs,
        out_shape=out_shapes,
        scratch_shapes=scratch_shapes,
        compiler_params=pltpu.CompilerParams(
            dimension_semantics=("parallel",),
            vmem_limit_bytes=vmem_limit),
    )(*args)

    logp = out3d[:, :B, :O]
    return logp, (hn[:, :B, :H], cn[:, :B, :H])


# ----------------------------------------------------------------------------
# Parameters (deterministic init, PyTorch-like U(-1/sqrt(H), 1/sqrt(H)))
# ----------------------------------------------------------------------------
def init_params(key, vocabulary_size, input_size, hid_size, n_layers):
    out_size = vocabulary_size + SERVICE_OUTPUT_SIZE
    enc_rows = vocabulary_size + SERVICE_INPUT_SIZE
    keys = jax.random.split(key, 2 + 4 * n_layers + 2)
    k_iter = iter(keys)

    params = {}
    params["embedding"] = jax.random.normal(
        next(k_iter), (enc_rows, input_size), jnp.float32)

    bound = 1.0 / jnp.sqrt(jnp.float32(hid_size))
    layers = []
    for layer in range(n_layers):
        in_dim = input_size if layer == 0 else hid_size
        w_ih = jax.random.uniform(next(k_iter), (4 * hid_size, in_dim),
                                  jnp.float32, -bound, bound)
        w_hh = jax.random.uniform(next(k_iter), (4 * hid_size, hid_size),
                                  jnp.float32, -bound, bound)
        b_ih = jax.random.uniform(next(k_iter), (4 * hid_size,),
                                  jnp.float32, -bound, bound)
        b_hh = jax.random.uniform(next(k_iter), (4 * hid_size,),
                                  jnp.float32, -bound, bound)
        layers.append({
            "w_ih_t": w_ih.T,                              # (in_dim, 4H)
            "w_hh_t": w_hh.T,                              # (H, 4H)
            "b": (b_ih + b_hh).reshape(1, 4 * hid_size),   # (1, 4H)
        })
    params["lstm"] = layers

    w_l1 = jax.random.uniform(next(k_iter), (out_size, hid_size),
                              jnp.float32, -bound, bound)
    b_l1 = jax.random.uniform(next(k_iter), (out_size,),
                              jnp.float32, -bound, bound)
    params["l1_w_t"] = w_l1.T                 # (H, O)
    params["l1_b"] = b_l1.reshape(1, out_size)
    return params


# ----------------------------------------------------------------------------
# Forward pass (mirrors RnnTextGen.forward)
# ----------------------------------------------------------------------------
@functools.partial(jax.jit, static_argnames=("n_layers", "hid_size"))
def rnn_text_gen_forward(params, x_tokens, n_layers, hid_size, hidden=None):
    # x_tokens: (S, B) int32 (batch_first=False, PyTorch nn.LSTM default)
    S, B = x_tokens.shape
    # Embedding lookup (gather) stays in plain JAX glue.
    x = jnp.take(params["embedding"], x_tokens, axis=0)   # (S, B, input_size)

    if hidden is None:
        h0 = jnp.zeros((n_layers, B, hid_size), jnp.float32)
        c0 = jnp.zeros((n_layers, B, hid_size), jnp.float32)
    else:
        h0, c0 = hidden

    return _fused_forward(x, h0, c0, params["lstm"],
                          params["l1_w_t"], params["l1_b"],
                          n_layers, hid_size)


# ----------------------------------------------------------------------------
# Pure-JAX reference (for correctness check)
# ----------------------------------------------------------------------------
def _reference_forward(params, x_tokens, n_layers, hid_size, hidden=None):
    S, B = x_tokens.shape
    x = jnp.take(params["embedding"], x_tokens, axis=0)
    if hidden is None:
        h = jnp.zeros((n_layers, B, hid_size), jnp.float32)
        c = jnp.zeros((n_layers, B, hid_size), jnp.float32)
    else:
        h, c = hidden
    layer_in = x
    hs, cs = [], []
    for l in range(n_layers):
        p = params["lstm"][l]

        def step(carry, x_t, p=p):
            h_t, c_t = carry
            gates = x_t @ p["w_ih_t"] + h_t @ p["w_hh_t"] + p["b"]
            i_g, f_g, g_g, o_g = jnp.split(gates, 4, axis=-1)
            i_g = jax.nn.sigmoid(i_g)
            f_g = jax.nn.sigmoid(f_g)
            g_g = jnp.tanh(g_g)
            o_g = jax.nn.sigmoid(o_g)
            c_n = f_g * c_t + i_g * g_g
            h_n = o_g * jnp.tanh(c_n)
            return (h_n, c_n), h_n

        (h_f, c_f), outs = lax.scan(step, (h[l], c[l]), layer_in)
        hs.append(h_f)
        cs.append(c_f)
        layer_in = outs
    out = jnp.maximum(layer_in, 0.0)
    logits = out @ params["l1_w_t"] + params["l1_b"]
    logp = jax.nn.log_softmax(logits, axis=-1)
    return logp, (jnp.stack(hs, axis=0), jnp.stack(cs, axis=0))


if __name__ == "__main__":
    vocabulary_size = 16
    input_size = 16
    hid_size = 32
    n_layers = 2
    seq_len = 8
    batch = 2

    key = jax.random.PRNGKey(0)
    k_param, k_tok = jax.random.split(key)

    params = init_params(k_param, vocabulary_size, input_size, hid_size, n_layers)
    x_tokens = jax.random.randint(
        k_tok, (seq_len, batch), 0, vocabulary_size + SERVICE_INPUT_SIZE,
        dtype=jnp.int32)

    out, (h_n, c_n) = rnn_text_gen_forward(params, x_tokens, n_layers, hid_size)
    jax.block_until_ready((out, h_n, c_n))

    out_size = vocabulary_size + SERVICE_OUTPUT_SIZE
    assert out.shape == (seq_len, batch, out_size)
    assert h_n.shape == (n_layers, batch, hid_size)
    assert c_n.shape == (n_layers, batch, hid_size)
    # log-softmax rows should exponentiate-sum to ~1
    assert jnp.allclose(jnp.sum(jnp.exp(out), axis=-1), 1.0, atol=1e-4)

    # Cross-check against a pure-JAX reference (loose tol: bf16 MXU matmuls).
    ref_out, (ref_h, ref_c) = _reference_forward(
        params, x_tokens, n_layers, hid_size)
    assert jnp.allclose(out, ref_out, atol=5e-2, rtol=5e-2)
    assert jnp.allclose(h_n, ref_h, atol=5e-2, rtol=5e-2)
    assert jnp.allclose(c_n, ref_c, atol=5e-2, rtol=5e-2)

    print("KERNEL_OK")
</pallas_src>

<mosaic_0001>
module attributes {stable_mosaic.version = 11 : i64} {
  func.func @kernel(%arg0: i32, %arg1: memref<8x8x16xbf16, #tpu.memory_space<vmem>>, %arg2: memref<2x8x128xf32, #tpu.memory_space<vmem>>, %arg3: memref<2x8x128xf32, #tpu.memory_space<vmem>>, %arg4: memref<16x512xbf16, #tpu.memory_space<vmem>>, %arg5: memref<128x512xbf16, #tpu.memory_space<vmem>>, %arg6: memref<1x512xf32, #tpu.memory_space<vmem>>, %arg7: memref<128x512xbf16, #tpu.memory_space<vmem>>, %arg8: memref<128x512xbf16, #tpu.memory_space<vmem>>, %arg9: memref<1x512xf32, #tpu.memory_space<vmem>>, %arg10: memref<128x128xbf16, #tpu.memory_space<vmem>>, %arg11: memref<1x128xf32, #tpu.memory_space<vmem>>, %arg12: memref<8x8x128xf32, #tpu.memory_space<vmem>>, %arg13: memref<2x8x128xf32, #tpu.memory_space<vmem>>, %arg14: memref<2x8x128xf32, #tpu.memory_space<vmem>>, %arg15: memref<8x8x512xf32, #tpu.memory_space<vmem>>, %arg16: memref<8x8x128xbf16, #tpu.memory_space<vmem>>) attributes {dimension_semantics = [#tpu.dimension_semantics<parallel>], iteration_bounds = array<i64: 1>, scalar_prefetch = 0 : i64, scratch_operands = 2 : i64, tpu.core_type = #tpu.core_type<tc>, window_params = [{transform_indices = @transform_0, window_bounds = array<i64: 8, 8, 16>}, {transform_indices = @transform_1, window_bounds = array<i64: 2, 8, 128>}, {transform_indices = @transform_2, window_bounds = array<i64: 2, 8, 128>}, {pipeline_mode = #tpu.pipeline_mode<synchronous>, transform_indices = @transform_3, window_bounds = array<i64: 16, 512>}, {pipeline_mode = #tpu.pipeline_mode<synchronous>, transform_indices = @transform_4, window_bounds = array<i64: 128, 512>}, {pipeline_mode = #tpu.pipeline_mode<synchronous>, transform_indices = @transform_5, window_bounds = array<i64: 1, 512>}, {pipeline_mode = #tpu.pipeline_mode<synchronous>, transform_indices = @transform_6, window_bounds = array<i64: 128, 512>}, {pipeline_mode = #tpu.pipeline_mode<synchronous>, transform_indices = @transform_7, window_bounds = array<i64: 128, 512>}, {pipeline_mode = #tpu.pipeline_mode<synchronous>, transform_indices = @transform_8, window_bounds = array<i64: 1, 512>}, {pipeline_mode = #tpu.pipeline_mode<synchronous>, transform_indices = @transform_9, window_bounds = array<i64: 128, 128>}, {pipeline_mode = #tpu.pipeline_mode<synchronous>, transform_indices = @transform_10, window_bounds = array<i64: 1, 128>}, {transform_indices = @transform_11, window_bounds = array<i64: 8, 8, 128>}, {transform_indices = @transform_12, window_bounds = array<i64: 2, 8, 128>}, {transform_indices = @transform_13, window_bounds = array<i64: 2, 8, 128>}]} {
    %c0 = arith.constant 0 : index
    %c0_0 = arith.constant 0 : index
    %0 = vector.load %arg5[%c0, %c0_0] : memref<128x512xbf16, #tpu.memory_space<vmem>>, vector<128x512xbf16>
    %c0_1 = arith.constant 0 : index
    %c0_2 = arith.constant 0 : index
    %1 = vector.load %arg6[%c0_1, %c0_2] : memref<1x512xf32, #tpu.memory_space<vmem>>, vector<1x512xf32>
    %c0_3 = arith.constant 0 : index
    %c0_4 = arith.constant 0 : index
    %c0_5 = arith.constant 0 : index
    %2 = vector.load %arg2[%c0_3, %c0_4, %c0_5] : memref<2x8x128xf32, #tpu.memory_space<vmem>>, vector<1x8x128xf32>
    %3 = vector.shape_cast %2 : vector<1x8x128xf32> to vector<8x128xf32>
    %c0_6 = arith.constant 0 : index
    %c0_7 = arith.constant 0 : index
    %c0_8 = arith.constant 0 : index
    %4 = vector.load %arg3[%c0_6, %c0_7, %c0_8] : memref<2x8x128xf32, #tpu.memory_space<vmem>>, vector<1x8x128xf32>
    %5 = vector.shape_cast %4 : vector<1x8x128xf32> to vector<8x128xf32>
    %c0_i32 = arith.constant 0 : i32
    %c8_i32 = arith.constant 8 : i32
    %6 = arith.muli %c0_i32, %c8_i32 : i32
    %7 = tpu.assume_multiple %6, 8 : i32
    %8 = arith.index_cast %7 : i32 to index
    %c0_9 = arith.constant 0 : index
    %c0_10 = arith.constant 0 : index
    %9 = vector.load %arg1[%8, %c0_9, %c0_10] : memref<8x8x16xbf16, #tpu.memory_space<vmem>>, vector<8x8x16xbf16>
    %10 = vector.shape_cast %9 : vector<8x8x16xbf16> to vector<64x16xbf16>
    %c0_11 = arith.constant 0 : index
    %c0_12 = arith.constant 0 : index
    %11 = vector.load %arg4[%c0_11, %c0_12] : memref<16x512xbf16, #tpu.memory_space<vmem>>, vector<16x512xbf16>
    %cst = arith.constant dense<0.000000e+00> : vector<64x512xf32>
    %12 = tpu.matmul %10, %11, %cst {dimension_numbers = #tpu.dot_dimension_numbers<[1], [0], [0], [1], [0, 0, 1, 1], [], []>} : vector<64x16xbf16>, vector<16x512xbf16>, vector<64x512xf32> -> vector<64x512xf32>
    %13 = vector.broadcast %1 : vector<1x512xf32> to vector<64x512xf32>
    %14 = arith.addf %12, %13 : vector<64x512xf32>
    %15 = vector.shape_cast %14 : vector<64x512xf32> to vector<8x8x512xf32>
    %c0_13 = arith.constant 0 : index
    %c0_14 = arith.constant 0 : index
    %c0_15 = arith.constant 0 : index
    %16 = vector.load %arg15[%c0_13, %c0_14, %c0_15] : memref<8x8x512xf32, #tpu.memory_space<vmem>>, vector<8x8x512xf32>
    tpu.vector_store %arg15[%c0_13, %c0_14, %c0_15], %15 {strides = array<i32>} : memref<8x8x512xf32, #tpu.memory_space<vmem>>, vector<8x8x512xf32>,
    %c0_i32_16 = arith.constant 0 : i32
    %17 = arith.index_cast %c0_i32_16 : i32 to index
    %c0_17 = arith.constant 0 : index
    %c0_18 = arith.constant 0 : index
    %18 = vector.load %arg15[%17, %c0_17, %c0_18] : memref<8x8x512xf32, #tpu.memory_space<vmem>>, vector<1x8x512xf32>
    %19 = vector.shape_cast %18 : vector<1x8x512xf32> to vector<8x512xf32>
    %20 = arith.truncf %3 : vector<8x128xf32> to vector<8x128xbf16>
    %cst_19 = arith.constant dense<0.000000e+00> : vector<8x512xf32>
    %21 = tpu.matmul %20, %0, %cst_19 {dimension_numbers = #tpu.dot_dimension_numbers<[1], [0], [0], [1], [0, 0, 1, 1], [], []>} : vector<8x128xbf16>, vector<128x512xbf16>, vector<8x512xf32> -> vector<8x512xf32>
    %22 = arith.addf %19, %21 : vector<8x512xf32>
    %23 = vector.extract_strided_slice %22 {offsets = [0, 0], sizes = [8, 128], strides = [1, 1]} : vector<8x512xf32> to vector<8x128xf32>
    %24 = arith.negf %23 : vector<8x128xf32>
    %25 = math.exp %24 : vector<8x128xf32>
    %cst_20 = arith.constant 1.000000e+00 : f32
    %26 = vector.broadcast %cst_20 : f32 to vector<8x128xf32>
    %27 = arith.addf %26, %25 : vector<8x128xf32>
    %28 = arith.divf %26, %27 : vector<8x128xf32>
    %29 = vector.extract_strided_slice %22 {offsets = [0, 128], sizes = [8, 128], strides = [1, 1]} : vector<8x512xf32> to vector<8x128xf32>
    %30 = arith.negf %29 : vector<8x128xf32>
    %31 = math.exp %30 : vector<8x128xf32>
    %cst_21 = arith.constant 1.000000e+00 : f32
    %32 = vector.broadcast %cst_21 : f32 to vector<8x128xf32>
    %33 = arith.addf %32, %31 : vector<8x128xf32>
    %34 = arith.divf %32, %33 : vector<8x128xf32>
    %35 = vector.extract_strided_slice %22 {offsets = [0, 256], sizes = [8, 128], strides = [1, 1]} : vector<8x512xf32> to vector<8x128xf32>
    %36 = math.tanh %35 : vector<8x128xf32>
    %37 = vector.extract_strided_slice %22 {offsets = [0, 384], sizes = [8, 128], strides = [1, 1]} : vector<8x512xf32> to vector<8x128xf32>
    %38 = arith.negf %37 : vector<8x128xf32>
    %39 = math.exp %38 : vector<8x128xf32>
    %cst_22 = arith.constant 1.000000e+00 : f32
    %40 = vector.broadcast %cst_22 : f32 to vector<8x128xf32>
    %41 = arith.addf %40, %39 : vector<8x128xf32>
    %42 = arith.divf %40, %41 : vector<8x128xf32>
    %43 = arith.mulf %34, %5 : vector<8x128xf32>
    %44 = arith.mulf %28, %36 : vector<8x128xf32>
    %45 = arith.addf %43, %44 : vector<8x128xf32>
    %46 = math.tanh %45 : vector<8x128xf32>
    %47 = arith.mulf %42, %46 : vector<8x128xf32>
    %48 = arith.truncf %47 : vector<8x128xf32> to vector<8x128xbf16>
    %49 = arith.addi %7, %c0_i32_16 : i32
    %50 = arith.index_cast %49 : i32 to index
    %c0_23 = arith.constant 0 : index
    %c0_24 = arith.constant 0 : index
    %51 = vector.load %arg16[%50, %c0_23, %c0_24] : memref<8x8x128xbf16, #tpu.memory_space<vmem>>, vector<1x8x128xbf16>
    %52 = vector.shape_cast %51 : vector<1x8x128xbf16> to vector<8x128xbf16>
    %53 = vector.shape_cast %48 : vector<8x128xbf16> to vector<1x8x128xbf16>
    tpu.vector_store %arg16[%50, %c0_23, %c0_24], %53 {strides = array<i32>} : memref<8x8x128xbf16, #tpu.memory_space<vmem>>, vector<1x8x128xbf16>,
    %c1_i32 = arith.constant 1 : i32
    %54 = arith.index_cast %c1_i32 : i32 to index
    %c0_25 = arith.constant 0 : index
    %c0_26 = arith.constant 0 : index
    %55 = vector.load %arg15[%54, %c0_25, %c0_26] : memref<8x8x512xf32, #tpu.memory_space<vmem>>, vector<1x8x512xf32>
    %56 = vector.shape_cast %55 : vector<1x8x512xf32> to vector<8x512xf32>
    %57 = arith.truncf %47 : vector<8x128xf32> to vector<8x128xbf16>
    %cst_27 = arith.constant dense<0.000000e+00> : vector<8x512xf32>
    %58 = tpu.matmul %57, %0, %cst_27 {dimension_numbers = #tpu.dot_dimension_numbers<[1], [0], [0], [1], [0, 0, 1, 1], [], []>} : vector<8x128xbf16>, vector<128x512xbf16>, vector<8x512xf32> -> vector<8x512xf32>
    %59 = arith.addf %56, %58 : vector<8x512xf32>
    %60 = vector.extract_strided_slice %59 {offsets = [0, 0], sizes = [8, 128], strides = [1, 1]} : vector<8x512xf32> to vector<8x128xf32>
    %61 = arith.negf %60 : vector<8x128xf32>
    %62 = math.exp %61 : vector<8x128xf32>
    %cst_28 = arith.constant 1.000000e+00 : f32
    %63 = vector.broadcast %cst_28 : f32 to vector<8x128xf32>
    %64 = arith.addf %63, %62 : vector<8x128xf32>
    %65 = arith.divf %63, %64 : vector<8x128xf32>
    %66 = vector.extract_strided_slice %59 {offsets = [0, 128], sizes = [8, 128], strides = [1, 1]} : vector<8x512xf32> to vector<8x128xf32>
    %67 = arith.negf %66 : vector<8x128xf32>
    %68 = math.exp %67 : vector<8x128xf32>
    %cst_29 = arith.constant 1.000000e+00 : f32
    %69 = vector.broadcast %cst_29 : f32 to vector<8x128xf32>
    %70 = arith.addf %69, %68 : vector<8x128xf32>
    %71 = arith.divf %69, %70 : vector<8x128xf32>
    %72 = vector.extract_strided_slice %59 {offsets = [0, 256], sizes = [8, 128], strides = [1, 1]} : vector<8x512xf32> to vector<8x128xf32>
    %73 = math.tanh %72 : vector<8x128xf32>
    %74 = vector.extract_strided_slice %59 {offsets = [0, 384], sizes = [8, 128], strides = [1, 1]} : vector<8x512xf32> to vector<8x128xf32>
    %75 = arith.negf %74 : vector<8x128xf32>
    %76 = math.exp %75 : vector<8x128xf32>
    %cst_30 = arith.constant 1.000000e+00 : f32
    %77 = vector.broadcast %cst_30 : f32 to vector<8x128xf32>
    %78 = arith.addf %77, %76 : vector<8x128xf32>
    %79 = arith.divf %77, %78 : vector<8x128xf32>
    %80 = arith.mulf %71, %45 : vector<8x128xf32>
    %81 = arith.mulf %65, %73 : vector<8x128xf32>
    %82 = arith.addf %80, %81 : vector<8x128xf32>
    %83 = math.tanh %82 : vector<8x128xf32>
    %84 = arith.mulf %79, %83 : vector<8x128xf32>
    %85 = arith.truncf %84 : vector<8x128xf32> to vector<8x128xbf16>
    %86 = arith.addi %7, %c1_i32 : i32
    %87 = arith.index_cast %86 : i32 to index
    %c0_31 = arith.constant 0 : index
    %c0_32 = arith.constant 0 : index
    %88 = vector.load %arg16[%87, %c0_31, %c0_32] : memref<8x8x128xbf16, #tpu.memory_space<vmem>>, vector<1x8x128xbf16>
    %89 = vector.shape_cast %88 : vector<1x8x128xbf16> to vector<8x128xbf16>
    %90 = vector.shape_cast %85 : vector<8x128xbf16> to vector<1x8x128xbf16>
    tpu.vector_store %arg16[%87, %c0_31, %c0_32], %90 {strides = array<i32>} : memref<8x8x128xbf16, #tpu.memory_space<vmem>>, vector<1x8x128xbf16>,
    %c2_i32 = arith.constant 2 : i32
    %91 = arith.index_cast %c2_i32 : i32 to index
    %c0_33 = arith.constant 0 : index
    %c0_34 = arith.constant 0 : index
    %92 = vector.load %arg15[%91, %c0_33, %c0_34] : memref<8x8x512xf32, #tpu.memory_space<vmem>>, vector<1x8x512xf32>
    %93 = vector.shape_cast %92 : vector<1x8x512xf32> to vector<8x512xf32>
    %94 = arith.truncf %84 : vector<8x128xf32> to vector<8x128xbf16>
    %cst_35 = arith.constant dense<0.000000e+00> : vector<8x512xf32>
    %95 = tpu.matmul %94, %0, %cst_35 {dimension_numbers = #tpu.dot_dimension_numbers<[1], [0], [0], [1], [0, 0, 1, 1], [], []>} : vector<8x128xbf16>, vector<128x512xbf16>, vector<8x512xf32> -> vector<8x512xf32>
    %96 = arith.addf %93, %95 : vector<8x512xf32>
    %97 = vector.extract_strided_slice %96 {offsets = [0, 0], sizes = [8, 128], strides = [1, 1]} : vector<8x512xf32> to vector<8x128xf32>
    %98 = arith.negf %97 : vector<8x128xf32>
    %99 = math.exp %98 : vector<8x128xf32>
    %cst_36 = arith.constant 1.000000e+00 : f32
    %100 = vector.broadcast %cst_36 : f32 to vector<8x128xf32>
    %101 = arith.addf %100, %99 : vector<8x128xf32>
    %102 = arith.divf %100, %101 : vector<8x128xf32>
    %103 = vector.extract_strided_slice %96 {offsets = [0, 128], sizes = [8, 128], strides = [1, 1]} : vector<8x512xf32> to vector<8x128xf32>
    %104 = arith.negf %103 : vector<8x128xf32>
    %105 = math.exp %104 : vector<8x128xf32>
    %cst_37 = arith.constant 1.000000e+00 : f32
    %106 = vector.broadcast %cst_37 : f32 to vector<8x128xf32>
    %107 = arith.addf %106, %105 : vector<8x128xf32>
    %108 = arith.divf %106, %107 : vector<8x128xf32>
    %109 = vector.extract_strided_slice %96 {offsets = [0, 256], sizes = [8, 128], strides = [1, 1]} : vector<8x512xf32> to vector<8x128xf32>
    %110 = math.tanh %109 : vector<8x128xf32>
    %111 = vector.extract_strided_slice %96 {offsets = [0, 384], sizes = [8, 128], strides = [1, 1]} : vector<8x512xf32> to vector<8x128xf32>
    %112 = arith.negf %111 : vector<8x128xf32>
    %113 = math.exp %112 : vector<8x128xf32>
    %cst_38 = arith.constant 1.000000e+00 : f32
    %114 = vector.broadcast %cst_38 : f32 to vector<8x128xf32>
    %115 = arith.addf %114, %113 : vector<8x128xf32>
    %116 = arith.divf %114, %115 : vector<8x128xf32>
    %117 = arith.mulf %108, %82 : vector<8x128xf32>
    %118 = arith.mulf %102, %110 : vector<8x128xf32>
    %119 = arith.addf %117, %118 : vector<8x128xf32>
    %120 = math.tanh %119 : vector<8x128xf32>
    %121 = arith.mulf %116, %120 : vector<8x128xf32>
    %122 = arith.truncf %121 : vector<8x128xf32> to vector<8x128xbf16>
    %123 = arith.addi %7, %c2_i32 : i32
    %124 = arith.index_cast %123 : i32 to index
    %c0_39 = arith.constant 0 : index
    %c0_40 = arith.constant 0 : index
    %125 = vector.load %arg16[%124, %c0_39, %c0_40] : memref<8x8x128xbf16, #tpu.memory_space<vmem>>, vector<1x8x128xbf16>
    %126 = vector.shape_cast %125 : vector<1x8x128xbf16> to vector<8x128xbf16>
    %127 = vector.shape_cast %122 : vector<8x128xbf16> to vector<1x8x128xbf16>
    tpu.vector_store %arg16[%124, %c0_39, %c0_40], %127 {strides = array<i32>} : memref<8x8x128xbf16, #tpu.memory_space<vmem>>, vector<1x8x128xbf16>,
    %c3_i32 = arith.constant 3 : i32
    %128 = arith.index_cast %c3_i32 : i32 to index
    %c0_41 = arith.constant 0 : index
    %c0_42 = arith.constant 0 : index
    %129 = vector.load %arg15[%128, %c0_41, %c0_42] : memref<8x8x512xf32, #tpu.memory_space<vmem>>, vector<1x8x512xf32>
    %130 = vector.shape_cast %129 : vector<1x8x512xf32> to vector<8x512xf32>
    %131 = arith.truncf %121 : vector<8x128xf32> to vector<8x128xbf16>
    %cst_43 = arith.constant dense<0.000000e+00> : vector<8x512xf32>
    %132 = tpu.matmul %131, %0, %cst_43 {dimension_numbers = #tpu.dot_dimension_numbers<[1], [0], [0], [1], [0, 0, 1, 1], [], []>} : vector<8x128xbf16>, vector<128x512xbf16>, vector<8x512xf32> -> vector<8x512xf32>
    %133 = arith.addf %130, %132 : vector<8x512xf32>
    %134 = vector.extract_strided_slice %133 {offsets = [0, 0], sizes = [8, 128], strides = [1, 1]} : vector<8x512xf32> to vector<8x128xf32>
    %135 = arith.negf %134 : vector<8x128xf32>
    %136 = math.exp %135 : vector<8x128xf32>
    %cst_44 = arith.constant 1.000000e+00 : f32
    %137 = vector.broadcast %cst_44 : f32 to vector<8x128xf32>
    %138 = arith.addf %137, %136 : vector<8x128xf32>
    %139 = arith.divf %137, %138 : vector<8x128xf32>
    %140 = vector.extract_strided_slice %133 {offsets = [0, 128], sizes = [8, 128], strides = [1, 1]} : vector<8x512xf32> to vector<8x128xf32>
    %141 = arith.negf %140 : vector<8x128xf32>
    %142 = math.exp %141 : vector<8x128xf32>
    %cst_45 = arith.constant 1.000000e+00 : f32
    %143 = vector.broadcast %cst_45 : f32 to vector<8x128xf32>
    %144 = arith.addf %143, %142 : vector<8x128xf32>
    %145 = arith.divf %143, %144 : vector<8x128xf32>
    %146 = vector.extract_strided_slice %133 {offsets = [0, 256], sizes = [8, 128], strides = [1, 1]} : vector<8x512xf32> to vector<8x128xf32>
    %147 = math.tanh %146 : vector<8x128xf32>
    %148 = vector.extract_strided_slice %133 {offsets = [0, 384], sizes = [8, 128], strides = [1, 1]} : vector<8x512xf32> to vector<8x128xf32>
    %149 = arith.negf %148 : vector<8x128xf32>
    %150 = math.exp %149 : vector<8x128xf32>
    %cst_46 = arith.constant 1.000000e+00 : f32
    %151 = vector.broadcast %cst_46 : f32 to vector<8x128xf32>
    %152 = arith.addf %151, %150 : vector<8x128xf32>
    %153 = arith.divf %151, %152 : vector<8x128xf32>
    %154 = arith.mulf %145, %119 : vector<8x128xf32>
    %155 = arith.mulf %139, %147 : vector<8x128xf32>
    %156 = arith.addf %154, %155 : vector<8x128xf32>
    %157 = math.tanh %156 : vector<8x128xf32>
    %158 = arith.mulf %153, %157 : vector<8x128xf32>
    %159 = arith.truncf %158 : vector<8x128xf32> to vector<8x128xbf16>
    %160 = arith.addi %7, %c3_i32 : i32
    %161 = arith.index_cast %160 : i32 to index
    %c0_47 = arith.constant 0 : index
    %c0_48 = arith.constant 0 : index
    %162 = vector.load %arg16[%161, %c0_47, %c0_48] : memref<8x8x128xbf16, #tpu.memory_space<vmem>>, vector<1x8x128xbf16>
    %163 = vector.shape_cast %162 : vector<1x8x128xbf16> to vector<8x128xbf16>
    %164 = vector.shape_cast %159 : vector<8x128xbf16> to vector<1x8x128xbf16>
    tpu.vector_store %arg16[%161, %c0_47, %c0_48], %164 {strides = array<i32>} : memref<8x8x128xbf16, #tpu.memory_space<vmem>>, vector<1x8x128xbf16>,
    %c4_i32 = arith.constant 4 : i32
    %165 = arith.index_cast %c4_i32 : i32 to index
    %c0_49 = arith.constant 0 : index
    %c0_50 = arith.constant 0 : index
    %166 = vector.load %arg15[%165, %c0_49, %c0_50] : memref<8x8x512xf32, #tpu.memory_space<vmem>>, vector<1x8x512xf32>
    %167 = vector.shape_cast %166 : vector<1x8x512xf32> to vector<8x512xf32>
    %168 = arith.truncf %158 : vector<8x128xf32> to vector<8x128xbf16>
    %cst_51 = arith.constant dense<0.000000e+00> : vector<8x512xf32>
    %169 = tpu.matmul %168, %0, %cst_51 {dimension_numbers = #tpu.dot_dimension_numbers<[1], [0], [0], [1], [0, 0, 1, 1], [], []>} : vector<8x128xbf16>, vector<128x512xbf16>, vector<8x512xf32> -> vector<8x512xf32>
    %170 = arith.addf %167, %169 : vector<8x512xf32>
    %171 = vector.extract_strided_slice %170 {offsets = [0, 0], sizes = [8, 128], strides = [1, 1]} : vector<8x512xf32> to vector<8x128xf32>
    %172 = arith.negf %171 : vector<8x128xf32>
    %173 = math.exp %172 : vector<8x128xf32>
    %cst_52 = arith.constant 1.000000e+00 : f32
    %174 = vector.broadcast %cst_52 : f32 to vector<8x128xf32>
    %175 = arith.addf %174, %173 : vector<8x128xf32>
    %176 = arith.divf %174, %175 : vector<8x128xf32>
    %177 = vector.extract_strided_slice %170 {offsets = [0, 128], sizes = [8, 128], strides = [1, 1]} : vector<8x512xf32> to vector<8x128xf32>
    %178 = arith.negf %177 : vector<8x128xf32>
    %179 = math.exp %178 : vector<8x128xf32>
    %cst_53 = arith.constant 1.000000e+00 : f32
    %180 = vector.broadcast %cst_53 : f32 to vector<8x128xf32>
    %181 = arith.addf %180, %179 : vector<8x128xf32>
    %182 = arith.divf %180, %181 : vector<8x128xf32>
    %183 = vector.extract_strided_slice %170 {offsets = [0, 256], sizes = [8, 128], strides = [1, 1]} : vector<8x512xf32> to vector<8x128xf32>
    %184 = math.tanh %183 : vector<8x128xf32>
    %185 = vector.extract_strided_slice %170 {offsets = [0, 384], sizes = [8, 128], strides = [1, 1]} : vector<8x512xf32> to vector<8x128xf32>
    %186 = arith.negf %185 : vector<8x128xf32>
    %187 = math.exp %186 : vector<8x128xf32>
    %cst_54 = arith.constant 1.000000e+00 : f32
    %188 = vector.broadcast %cst_54 : f32 to vector<8x128xf32>
    %189 = arith.addf %188, %187 : vector<8x128xf32>
    %190 = arith.divf %188, %189 : vector<8x128xf32>
    %191 = arith.mulf %182, %156 : vector<8x128xf32>
    %192 = arith.mulf %176, %184 : vector<8x128xf32>
    %193 = arith.addf %191, %192 : vector<8x128xf32>
    %194 = math.tanh %193 : vector<8x128xf32>
    %195 = arith.mulf %190, %194 : vector<8x128xf32>
    %196 = arith.truncf %195 : vector<8x128xf32> to vector<8x128xbf16>
    %197 = arith.addi %7, %c4_i32 : i32
    %198 = arith.index_cast %197 : i32 to index
    %c0_55 = arith.constant 0 : index
    %c0_56 = arith.constant 0 : index
    %199 = vector.load %arg16[%198, %c0_55, %c0_56] : memref<8x8x128xbf16, #tpu.memory_space<vmem>>, vector<1x8x128xbf16>
    %200 = vector.shape_cast %199 : vector<1x8x128xbf16> to vector<8x128xbf16>
    %201 = vector.shape_cast %196 : vector<8x128xbf16> to vector<1x8x128xbf16>
    tpu.vector_store %arg16[%198, %c0_55, %c0_56], %201 {strides = array<i32>} : memref<8x8x128xbf16, #tpu.memory_space<vmem>>, vector<1x8x128xbf16>,
    %c5_i32 = arith.constant 5 : i32
    %202 = arith.index_cast %c5_i32 : i32 to index
    %c0_57 = arith.constant 0 : index
    %c0_58 = arith.constant 0 : index
    %203 = vector.load %arg15[%202, %c0_57, %c0_58] : memref<8x8x512xf32, #tpu.memory_space<vmem>>, vector<1x8x512xf32>
    %204 = vector.shape_cast %203 : vector<1x8x512xf32> to vector<8x512xf32>
    %205 = arith.truncf %195 : vector<8x128xf32> to vector<8x128xbf16>
    %cst_59 = arith.constant dense<0.000000e+00> : vector<8x512xf32>
    %206 = tpu.matmul %205, %0, %cst_59 {dimension_numbers = #tpu.dot_dimension_numbers<[1], [0], [0], [1], [0, 0, 1, 1], [], []>} : vector<8x128xbf16>, vector<128x512xbf16>, vector<8x512xf32> -> vector<8x512xf32>
    %207 = arith.addf %204, %206 : vector<8x512xf32>
    %208 = vector.extract_strided_slice %207 {offsets = [0, 0], sizes = [8, 128], strides = [1, 1]} : vector<8x512xf32> to vector<8x128xf32>
    %209 = arith.negf %208 : vector<8x128xf32>
    %210 = math.exp %209 : vector<8x128xf32>
    %cst_60 = arith.constant 1.000000e+00 : f32
    %211 = vector.broadcast %cst_60 : f32 to vector<8x128xf32>
    %212 = arith.addf %211, %210 : vector<8x128xf32>
    %213 = arith.divf %211, %212 : vector<8x128xf32>
    %214 = vector.extract_strided_slice %207 {offsets = [0, 128], sizes = [8, 128], strides = [1, 1]} : vector<8x512xf32> to vector<8x128xf32>
    %215 = arith.negf %214 : vector<8x128xf32>
    %216 = math.exp %215 : vector<8x128xf32>
    %cst_61 = arith.constant 1.000000e+00 : f32
    %217 = vector.broadcast %cst_61 : f32 to vector<8x128xf32>
    %218 = arith.addf %217, %216 : vector<8x128xf32>
    %219 = arith.divf %217, %218 : vector<8x128xf32>
    %220 = vector.extract_strided_slice %207 {offsets = [0, 256], sizes = [8, 128], strides = [1, 1]} : vector<8x512xf32> to vector<8x128xf32>
    %221 = math.tanh %220 : vector<8x128xf32>
    %222 = vector.extract_strided_slice %207 {offsets = [0, 384], sizes = [8, 128], strides = [1, 1]} : vector<8x512xf32> to vector<8x128xf32>
    %223 = arith.negf %222 : vector<8x128xf32>
    %224 = math.exp %223 : vector<8x128xf32>
    %cst_62 = arith.constant 1.000000e+00 : f32
    %225 = vector.broadcast %cst_62 : f32 to vector<8x128xf32>
    %226 = arith.addf %225, %224 : vector<8x128xf32>
    %227 = arith.divf %225, %226 : vector<8x128xf32>
    %228 = arith.mulf %219, %193 : vector<8x128xf32>
    %229 = arith.mulf %213, %221 : vector<8x128xf32>
    %230 = arith.addf %228, %229 : vector<8x128xf32>
    %231 = math.tanh %230 : vector<8x128xf32>
    %232 = arith.mulf %227, %231 : vector<8x128xf32>
    %233 = arith.truncf %232 : vector<8x128xf32> to vector<8x128xbf16>
    %234 = arith.addi %7, %c5_i32 : i32
    %235 = arith.index_cast %234 : i32 to index
    %c0_63 = arith.constant 0 : index
    %c0_64 = arith.constant 0 : index
    %236 = vector.load %arg16[%235, %c0_63, %c0_64] : memref<8x8x128xbf16, #tpu.memory_space<vmem>>, vector<1x8x128xbf16>
    %237 = vector.shape_cast %236 : vector<1x8x128xbf16> to vector<8x128xbf16>
    %238 = vector.shape_cast %233 : vector<8x128xbf16> to vector<1x8x128xbf16>
    tpu.vector_store %arg16[%235, %c0_63, %c0_64], %238 {strides = array<i32>} : memref<8x8x128xbf16, #tpu.memory_space<vmem>>, vector<1x8x128xbf16>,
    %c6_i32 = arith.constant 6 : i32
    %239 = arith.index_cast %c6_i32 : i32 to index
    %c0_65 = arith.constant 0 : index
    %c0_66 = arith.constant 0 : index
    %240 = vector.load %arg15[%239, %c0_65, %c0_66] : memref<8x8x512xf32, #tpu.memory_space<vmem>>, vector<1x8x512xf32>
    %241 = vector.shape_cast %240 : vector<1x8x512xf32> to vector<8x512xf32>
    %242 = arith.truncf %232 : vector<8x128xf32> to vector<8x128xbf16>
    %cst_67 = arith.constant dense<0.000000e+00> : vector<8x512xf32>
    %243 = tpu.matmul %242, %0, %cst_67 {dimension_numbers = #tpu.dot_dimension_numbers<[1], [0], [0], [1], [0, 0, 1, 1], [], []>} : vector<8x128xbf16>, vector<128x512xbf16>, vector<8x512xf32> -> vector<8x512xf32>
    %244 = arith.addf %241, %243 : vector<8x512xf32>
    %245 = vector.extract_strided_slice %244 {offsets = [0, 0], sizes = [8, 128], strides = [1, 1]} : vector<8x512xf32> to vector<8x128xf32>
    %246 = arith.negf %245 : vector<8x128xf32>
    %247 = math.exp %246 : vector<8x128xf32>
    %cst_68 = arith.constant 1.000000e+00 : f32
    %248 = vector.broadcast %cst_68 : f32 to vector<8x128xf32>
    %249 = arith.addf %248, %247 : vector<8x128xf32>
    %250 = arith.divf %248, %249 : vector<8x128xf32>
    %251 = vector.extract_strided_slice %244 {offsets = [0, 128], sizes = [8, 128], strides = [1, 1]} : vector<8x512xf32> to vector<8x128xf32>
    %252 = arith.negf %251 : vector<8x128xf32>
    %253 = math.exp %252 : vector<8x128xf32>
    %cst_69 = arith.constant 1.000000e+00 : f32
    %254 = vector.broadcast %cst_69 : f32 to vector<8x128xf32>
    %255 = arith.addf %254, %253 : vector<8x128xf32>
    %256 = arith.divf %254, %255 : vector<8x128xf32>
    %257 = vector.extract_strided_slice %244 {offsets = [0, 256], sizes = [8, 128], strides = [1, 1]} : vector<8x512xf32> to vector<8x128xf32>
    %258 = math.tanh %257 : vector<8x128xf32>
    %259 = vector.extract_strided_slice %244 {offsets = [0, 384], sizes = [8, 128], strides = [1, 1]} : vector<8x512xf32> to vector<8x128xf32>
    %260 = arith.negf %259 : vector<8x128xf32>
    %261 = math.exp %260 : vector<8x128xf32>
    %cst_70 = arith.constant 1.000000e+00 : f32
    %262 = vector.broadcast %cst_70 : f32 to vector<8x128xf32>
    %263 = arith.addf %262, %261 : vector<8x128xf32>
    %264 = arith.divf %262, %263 : vector<8x128xf32>
    %265 = arith.mulf %256, %230 : vector<8x128xf32>
    %266 = arith.mulf %250, %258 : vector<8x128xf32>
    %267 = arith.addf %265, %266 : vector<8x128xf32>
    %268 = math.tanh %267 : vector<8x128xf32>
    %269 = arith.mulf %264, %268 : vector<8x128xf32>
    %270 = arith.truncf %269 : vector<8x128xf32> to vector<8x128xbf16>
    %271 = arith.addi %7, %c6_i32 : i32
    %272 = arith.index_cast %271 : i32 to index
    %c0_71 = arith.constant 0 : index
    %c0_72 = arith.constant 0 : index
    %273 = vector.load %arg16[%272, %c0_71, %c0_72] : memref<8x8x128xbf16, #tpu.memory_space<vmem>>, vector<1x8x128xbf16>
    %274 = vector.shape_cast %273 : vector<1x8x128xbf16> to vector<8x128xbf16>
    %275 = vector.shape_cast %270 : vector<8x128xbf16> to vector<1x8x128xbf16>
    tpu.vector_store %arg16[%272, %c0_71, %c0_72], %275 {strides = array<i32>} : memref<8x8x128xbf16, #tpu.memory_space<vmem>>, vector<1x8x128xbf16>,
    %c7_i32 = arith.constant 7 : i32
    %276 = arith.index_cast %c7_i32 : i32 to index
    %c0_73 = arith.constant 0 : index
    %c0_74 = arith.constant 0 : index
    %277 = vector.load %arg15[%276, %c0_73, %c0_74] : memref<8x8x512xf32, #tpu.memory_space<vmem>>, vector<1x8x512xf32>
    %278 = vector.shape_cast %277 : vector<1x8x512xf32> to vector<8x512xf32>
    %279 = arith.truncf %269 : vector<8x128xf32> to vector<8x128xbf16>
    %cst_75 = arith.constant dense<0.000000e+00> : vector<8x512xf32>
    %280 = tpu.matmul %279, %0, %cst_75 {dimension_numbers = #tpu.dot_dimension_numbers<[1], [0], [0], [1], [0, 0, 1, 1], [], []>} : vector<8x128xbf16>, vector<128x512xbf16>, vector<8x512xf32> -> vector<8x512xf32>
    %281 = arith.addf %278, %280 : vector<8x512xf32>
    %282 = vector.extract_strided_slice %281 {offsets = [0, 0], sizes = [8, 128], strides = [1, 1]} : vector<8x512xf32> to vector<8x128xf32>
    %283 = arith.negf %282 : vector<8x128xf32>
    %284 = math.exp %283 : vector<8x128xf32>
    %cst_76 = arith.constant 1.000000e+00 : f32
    %285 = vector.broadcast %cst_76 : f32 to vector<8x128xf32>
    %286 = arith.addf %285, %284 : vector<8x128xf32>
    %287 = arith.divf %285, %286 : vector<8x128xf32>
    %288 = vector.extract_strided_slice %281 {offsets = [0, 128], sizes = [8, 128], strides = [1, 1]} : vector<8x512xf32> to vector<8x128xf32>
    %289 = arith.negf %288 : vector<8x128xf32>
    %290 = math.exp %289 : vector<8x128xf32>
    %cst_77 = arith.constant 1.000000e+00 : f32
    %291 = vector.broadcast %cst_77 : f32 to vector<8x128xf32>
    %292 = arith.addf %291, %290 : vector<8x128xf32>
    %293 = arith.divf %291, %292 : vector<8x128xf32>
    %294 = vector.extract_strided_slice %281 {offsets = [0, 256], sizes = [8, 128], strides = [1, 1]} : vector<8x512xf32> to vector<8x128xf32>
    %295 = math.tanh %294 : vector<8x128xf32>
    %296 = vector.extract_strided_slice %281 {offsets = [0, 384], sizes = [8, 128], strides = [1, 1]} : vector<8x512xf32> to vector<8x128xf32>
    %297 = arith.negf %296 : vector<8x128xf32>
    %298 = math.exp %297 : vector<8x128xf32>
    %cst_78 = arith.constant 1.000000e+00 : f32
    %299 = vector.broadcast %cst_78 : f32 to vector<8x128xf32>
    %300 = arith.addf %299, %298 : vector<8x128xf32>
    %301 = arith.divf %299, %300 : vector<8x128xf32>
    %302 = arith.mulf %293, %267 : vector<8x128xf32>
    %303 = arith.mulf %287, %295 : vector<8x128xf32>
    %304 = arith.addf %302, %303 : vector<8x128xf32>
    %305 = math.tanh %304 : vector<8x128xf32>
    %306 = arith.mulf %301, %305 : vector<8x128xf32>
    %307 = arith.truncf %306 : vector<8x128xf32> to vector<8x128xbf16>
    %308 = arith.addi %7, %c7_i32 : i32
    %309 = arith.index_cast %308 : i32 to index
    %c0_79 = arith.constant 0 : index
    %c0_80 = arith.constant 0 : index
    %310 = vector.load %arg16[%309, %c0_79, %c0_80] : memref<8x8x128xbf16, #tpu.memory_space<vmem>>, vector<1x8x128xbf16>
    %311 = vector.shape_cast %310 : vector<1x8x128xbf16> to vector<8x128xbf16>
    %312 = vector.shape_cast %307 : vector<8x128xbf16> to vector<1x8x128xbf16>
    tpu.vector_store %arg16[%309, %c0_79, %c0_80], %312 {strides = array<i32>} : memref<8x8x128xbf16, #tpu.memory_space<vmem>>, vector<1x8x128xbf16>,
    %c8_i32_81 = arith.constant 8 : i32
    %c1_i32_82 = arith.constant 1 : i32
    %c0_83 = arith.constant 0 : index
    %c0_84 = arith.constant 0 : index
    %c0_85 = arith.constant 0 : index
    %313 = vector.load %arg13[%c0_83, %c0_84, %c0_85] : memref<2x8x128xf32, #tpu.memory_space<vmem>>, vector<1x8x128xf32>
    %314 = vector.shape_cast %313 : vector<1x8x128xf32> to vector<8x128xf32>
    %315 = vector.shape_cast %306 : vector<8x128xf32> to vector<1x8x128xf32>
    tpu.vector_store %arg13[%c0_83, %c0_84, %c0_85], %315 {strides = array<i32>} : memref<2x8x128xf32, #tpu.memory_space<vmem>>, vector<1x8x128xf32>,
    %c0_86 = arith.constant 0 : index
    %c0_87 = arith.constant 0 : index
    %c0_88 = arith.constant 0 : index
    %316 = vector.load %arg14[%c0_86, %c0_87, %c0_88] : memref<2x8x128xf32, #tpu.memory_space<vmem>>, vector<1x8x128xf32>
    %317 = vector.shape_cast %316 : vector<1x8x128xf32> to vector<8x128xf32>
    %318 = vector.shape_cast %304 : vector<8x128xf32> to vector<1x8x128xf32>
    tpu.vector_store %arg14[%c0_86, %c0_87, %c0_88], %318 {strides = array<i32>} : memref<2x8x128xf32, #tpu.memory_space<vmem>>, vector<1x8x128xf32>,
    %c0_89 = arith.constant 0 : index
    %c0_90 = arith.constant 0 : index
    %319 = vector.load %arg8[%c0_89, %c0_90] : memref<128x512xbf16, #tpu.memory_space<vmem>>, vector<128x512xbf16>
    %c0_91 = arith.constant 0 : index
    %c0_92 = arith.constant 0 : index
    %320 = vector.load %arg9[%c0_91, %c0_92] : memref<1x512xf32, #tpu.memory_space<vmem>>, vector<1x512xf32>
    %c1 = arith.constant 1 : index
    %c0_93 = arith.constant 0 : index
    %c0_94 = arith.constant 0 : index
    %321 = vector.load %arg2[%c1, %c0_93, %c0_94] : memref<2x8x128xf32, #tpu.memory_space<vmem>>, vector<1x8x128xf32>
    %322 = vector.shape_cast %321 : vector<1x8x128xf32> to vector<8x128xf32>
    %c1_95 = arith.constant 1 : index
    %c0_96 = arith.constant 0 : index
    %c0_97 = arith.constant 0 : index
    %323 = vector.load %arg3[%c1_95, %c0_96, %c0_97] : memref<2x8x128xf32, #tpu.memory_space<vmem>>, vector<1x8x128xf32>
    %324 = vector.shape_cast %323 : vector<1x8x128xf32> to vector<8x128xf32>
    %c0_i32_98 = arith.constant 0 : i32
    %c8_i32_99 = arith.constant 8 : i32
    %325 = arith.muli %c0_i32_98, %c8_i32_99 : i32
    %326 = tpu.assume_multiple %325, 8 : i32
    %327 = arith.index_cast %326 : i32 to index
    %c0_100 = arith.constant 0 : index
    %c0_101 = arith.constant 0 : index
    %328 = vector.load %arg16[%327, %c0_100, %c0_101] : memref<8x8x128xbf16, #tpu.memory_space<vmem>>, vector<8x8x128xbf16>
    %329 = vector.shape_cast %328 : vector<8x8x128xbf16> to vector<64x128xbf16>
    %c0_102 = arith.constant 0 : index
    %c0_103 = arith.constant 0 : index
    %330 = vector.load %arg7[%c0_102, %c0_103] : memref<128x512xbf16, #tpu.memory_space<vmem>>, vector<128x512xbf16>
    %cst_104 = arith.constant dense<0.000000e+00> : vector<64x512xf32>
    %331 = tpu.matmul %329, %330, %cst_104 {dimension_numbers = #tpu.dot_dimension_numbers<[1], [0], [0], [1], [0, 0, 1, 1], [], []>} : vector<64x128xbf16>, vector<128x512xbf16>, vector<64x512xf32> -> vector<64x512xf32>
    %332 = vector.broadcast %320 : vector<1x512xf32> to vector<64x512xf32>
    %333 = arith.addf %331, %332 : vector<64x512xf32>
    %334 = vector.shape_cast %333 : vector<64x512xf32> to vector<8x8x512xf32>
    %c0_105 = arith.constant 0 : index
    %c0_106 = arith.constant 0 : index
    %c0_107 = arith.constant 0 : index
    %335 = vector.load %arg15[%c0_105, %c0_106, %c0_107] : memref<8x8x512xf32, #tpu.memory_space<vmem>>, vector<8x8x512xf32>
    tpu.vector_store %arg15[%c0_105, %c0_106, %c0_107], %334 {strides = array<i32>} : memref<8x8x512xf32, #tpu.memory_space<vmem>>, vector<8x8x512xf32>,
    %c0_i32_108 = arith.constant 0 : i32
    %336 = arith.index_cast %c0_i32_108 : i32 to index
    %c0_109 = arith.constant 0 : index
    %c0_110 = arith.constant 0 : index
    %337 = vector.load %arg15[%336, %c0_109, %c0_110] : memref<8x8x512xf32, #tpu.memory_space<vmem>>, vector<1x8x512xf32>
    %338 = vector.shape_cast %337 : vector<1x8x512xf32> to vector<8x512xf32>
    %339 = arith.truncf %322 : vector<8x128xf32> to vector<8x128xbf16>
    %cst_111 = arith.constant dense<0.000000e+00> : vector<8x512xf32>
    %340 = tpu.matmul %339, %319, %cst_111 {dimension_numbers = #tpu.dot_dimension_numbers<[1], [0], [0], [1], [0, 0, 1, 1], [], []>} : vector<8x128xbf16>, vector<128x512xbf16>, vector<8x512xf32> -> vector<8x512xf32>
    %341 = arith.addf %338, %340 : vector<8x512xf32>
    %342 = vector.extract_strided_slice %341 {offsets = [0, 0], sizes = [8, 128], strides = [1, 1]} : vector<8x512xf32> to vector<8x128xf32>
    %343 = arith.negf %342 : vector<8x128xf32>
    %344 = math.exp %343 : vector<8x128xf32>
    %cst_112 = arith.constant 1.000000e+00 : f32
    %345 = vector.broadcast %cst_112 : f32 to vector<8x128xf32>
    %346 = arith.addf %345, %344 : vector<8x128xf32>
    %347 = arith.divf %345, %346 : vector<8x128xf32>
    %348 = vector.extract_strided_slice %341 {offsets = [0, 128], sizes = [8, 128], strides = [1, 1]} : vector<8x512xf32> to vector<8x128xf32>
    %349 = arith.negf %348 : vector<8x128xf32>
    %350 = math.exp %349 : vector<8x128xf32>
    %cst_113 = arith.constant 1.000000e+00 : f32
    %351 = vector.broadcast %cst_113 : f32 to vector<8x128xf32>
    %352 = arith.addf %351, %350 : vector<8x128xf32>
    %353 = arith.divf %351, %352 : vector<8x128xf32>
    %354 = vector.extract_strided_slice %341 {offsets = [0, 256], sizes = [8, 128], strides = [1, 1]} : vector<8x512xf32> to vector<8x128xf32>
    %355 = math.tanh %354 : vector<8x128xf32>
    %356 = vector.extract_strided_slice %341 {offsets = [0, 384], sizes = [8, 128], strides = [1, 1]} : vector<8x512xf32> to vector<8x128xf32>
    %357 = arith.negf %356 : vector<8x128xf32>
    %358 = math.exp %357 : vector<8x128xf32>
    %cst_114 = arith.constant 1.000000e+00 : f32
    %359 = vector.broadcast %cst_114 : f32 to vector<8x128xf32>
    %360 = arith.addf %359, %358 : vector<8x128xf32>
    %361 = arith.divf %359, %360 : vector<8x128xf32>
    %362 = arith.mulf %353, %324 : vector<8x128xf32>
    %363 = arith.mulf %347, %355 : vector<8x128xf32>
    %364 = arith.addf %362, %363 : vector<8x128xf32>
    %365 = math.tanh %364 : vector<8x128xf32>
    %366 = arith.mulf %361, %365 : vector<8x128xf32>
    %367 = arith.truncf %366 : vector<8x128xf32> to vector<8x128xbf16>
    %368 = arith.addi %326, %c0_i32_108 : i32
    %369 = arith.index_cast %368 : i32 to index
    %c0_115 = arith.constant 0 : index
    %c0_116 = arith.constant 0 : index
    %370 = vector.load %arg16[%369, %c0_115, %c0_116] : memref<8x8x128xbf16, #tpu.memory_space<vmem>>, vector<1x8x128xbf16>
    %371 = vector.shape_cast %370 : vector<1x8x128xbf16> to vector<8x128xbf16>
    %372 = vector.shape_cast %367 : vector<8x128xbf16> to vector<1x8x128xbf16>
    tpu.vector_store %arg16[%369, %c0_115, %c0_116], %372 {strides = array<i32>} : memref<8x8x128xbf16, #tpu.memory_space<vmem>>, vector<1x8x128xbf16>,
    %c1_i32_117 = arith.constant 1 : i32
    %373 = arith.index_cast %c1_i32_117 : i32 to index
    %c0_118 = arith.constant 0 : index
    %c0_119 = arith.constant 0 : index
    %374 = vector.load %arg15[%373, %c0_118, %c0_119] : memref<8x8x512xf32, #tpu.memory_space<vmem>>, vector<1x8x512xf32>
    %375 = vector.shape_cast %374 : vector<1x8x512xf32> to vector<8x512xf32>
    %376 = arith.truncf %366 : vector<8x128xf32> to vector<8x128xbf16>
    %cst_120 = arith.constant dense<0.000000e+00> : vector<8x512xf32>
    %377 = tpu.matmul %376, %319, %cst_120 {dimension_numbers = #tpu.dot_dimension_numbers<[1], [0], [0], [1], [0, 0, 1, 1], [], []>} : vector<8x128xbf16>, vector<128x512xbf16>, vector<8x512xf32> -> vector<8x512xf32>
    %378 = arith.addf %375, %377 : vector<8x512xf32>
    %379 = vector.extract_strided_slice %378 {offsets = [0, 0], sizes = [8, 128], strides = [1, 1]} : vector<8x512xf32> to vector<8x128xf32>
    %380 = arith.negf %379 : vector<8x128xf32>
    %381 = math.exp %380 : vector<8x128xf32>
    %cst_121 = arith.constant 1.000000e+00 : f32
    %382 = vector.broadcast %cst_121 : f32 to vector<8x128xf32>
    %383 = arith.addf %382, %381 : vector<8x128xf32>
    %384 = arith.divf %382, %383 : vector<8x128xf32>
    %385 = vector.extract_strided_slice %378 {offsets = [0, 128], sizes = [8, 128], strides = [1, 1]} : vector<8x512xf32> to vector<8x128xf32>
    %386 = arith.negf %385 : vector<8x128xf32>
    %387 = math.exp %386 : vector<8x128xf32>
    %cst_122 = arith.constant 1.000000e+00 : f32
    %388 = vector.broadcast %cst_122 : f32 to vector<8x128xf32>
    %389 = arith.addf %388, %387 : vector<8x128xf32>
    %390 = arith.divf %388, %389 : vector<8x128xf32>
    %391 = vector.extract_strided_slice %378 {offsets = [0, 256], sizes = [8, 128], strides = [1, 1]} : vector<8x512xf32> to vector<8x128xf32>
    %392 = math.tanh %391 : vector<8x128xf32>
    %393 = vector.extract_strided_slice %378 {offsets = [0, 384], sizes = [8, 128], strides = [1, 1]} : vector<8x512xf32> to vector<8x128xf32>
    %394 = arith.negf %393 : vector<8x128xf32>
    %395 = math.exp %394 : vector<8x128xf32>
    %cst_123 = arith.constant 1.000000e+00 : f32
    %396 = vector.broadcast %cst_123 : f32 to vector<8x128xf32>
    %397 = arith.addf %396, %395 : vector<8x128xf32>
    %398 = arith.divf %396, %397 : vector<8x128xf32>
    %399 = arith.mulf %390, %364 : vector<8x128xf32>
    %400 = arith.mulf %384, %392 : vector<8x128xf32>
    %401 = arith.addf %399, %400 : vector<8x128xf32>
    %402 = math.tanh %401 : vector<8x128xf32>
    %403 = arith.mulf %398, %402 : vector<8x128xf32>
    %404 = arith.truncf %403 : vector<8x128xf32> to vector<8x128xbf16>
    %405 = arith.addi %326, %c1_i32_117 : i32
    %406 = arith.index_cast %405 : i32 to index
    %c0_124 = arith.constant 0 : index
    %c0_125 = arith.constant 0 : index
    %407 = vector.load %arg16[%406, %c0_124, %c0_125] : memref<8x8x128xbf16, #tpu.memory_space<vmem>>, vector<1x8x128xbf16>
    %408 = vector.shape_cast %407 : vector<1x8x128xbf16> to vector<8x128xbf16>
    %409 = vector.shape_cast %404 : vector<8x128xbf16> to vector<1x8x128xbf16>
    tpu.vector_store %arg16[%406, %c0_124, %c0_125], %409 {strides = array<i32>} : memref<8x8x128xbf16, #tpu.memory_space<vmem>>, vector<1x8x128xbf16>,
    %c2_i32_126 = arith.constant 2 : i32
    %410 = arith.index_cast %c2_i32_126 : i32 to index
    %c0_127 = arith.constant 0 : index
    %c0_128 = arith.constant 0 : index
    %411 = vector.load %arg15[%410, %c0_127, %c0_128] : memref<8x8x512xf32, #tpu.memory_space<vmem>>, vector<1x8x512xf32>
    %412 = vector.shape_cast %411 : vector<1x8x512xf32> to vector<8x512xf32>
    %413 = arith.truncf %403 : vector<8x128xf32> to vector<8x128xbf16>
    %cst_129 = arith.constant dense<0.000000e+00> : vector<8x512xf32>
    %414 = tpu.matmul %413, %319, %cst_129 {dimension_numbers = #tpu.dot_dimension_numbers<[1], [0], [0], [1], [0, 0, 1, 1], [], []>} : vector<8x128xbf16>, vector<128x512xbf16>, vector<8x512xf32> -> vector<8x512xf32>
    %415 = arith.addf %412, %414 : vector<8x512xf32>
    %416 = vector.extract_strided_slice %415 {offsets = [0, 0], sizes = [8, 128], strides = [1, 1]} : vector<8x512xf32> to vector<8x128xf32>
    %417 = arith.negf %416 : vector<8x128xf32>
    %418 = math.exp %417 : vector<8x128xf32>
    %cst_130 = arith.constant 1.000000e+00 : f32
    %419 = vector.broadcast %cst_130 : f32 to vector<8x128xf32>
    %420 = arith.addf %419, %418 : vector<8x128xf32>
    %421 = arith.divf %419, %420 : vector<8x128xf32>
    %422 = vector.extract_strided_slice %415 {offsets = [0, 128], sizes = [8, 128], strides = [1, 1]} : vector<8x512xf32> to vector<8x128xf32>
    %423 = arith.negf %422 : vector<8x128xf32>
    %424 = math.exp %423 : vector<8x128xf32>
    %cst_131 = arith.constant 1.000000e+00 : f32
    %425 = vector.broadcast %cst_131 : f32 to vector<8x128xf32>
    %426 = arith.addf %425, %424 : vector<8x128xf32>
    %427 = arith.divf %425, %426 : vector<8x128xf32>
    %428 = vector.extract_strided_slice %415 {offsets = [0, 256], sizes = [8, 128], strides = [1, 1]} : vector<8x512xf32> to vector<8x128xf32>
    %429 = math.tanh %428 : vector<8x128xf32>
    %430 = vector.extract_strided_slice %415 {offsets = [0, 384], sizes = [8, 128], strides = [1, 1]} : vector<8x512xf32> to vector<8x128xf32>
    %431 = arith.negf %430 : vector<8x128xf32>
    %432 = math.exp %431 : vector<8x128xf32>
    %cst_132 = arith.constant 1.000000e+00 : f32
    %433 = vector.broadcast %cst_132 : f32 to vector<8x128xf32>
    %434 = arith.addf %433, %432 : vector<8x128xf32>
    %435 = arith.divf %433, %434 : vector<8x128xf32>
    %436 = arith.mulf %427, %401 : vector<8x128xf32>
    %437 = arith.mulf %421, %429 : vector<8x128xf32>
    %438 = arith.addf %436, %437 : vector<8x128xf32>
    %439 = math.tanh %438 : vector<8x128xf32>
    %440 = arith.mulf %435, %439 : vector<8x128xf32>
    %441 = arith.truncf %440 : vector<8x128xf32> to vector<8x128xbf16>
    %442 = arith.addi %326, %c2_i32_126 : i32
    %443 = arith.index_cast %442 : i32 to index
    %c0_133 = arith.constant 0 : index
    %c0_134 = arith.constant 0 : index
    %444 = vector.load %arg16[%443, %c0_133, %c0_134] : memref<8x8x128xbf16, #tpu.memory_space<vmem>>, vector<1x8x128xbf16>
    %445 = vector.shape_cast %444 : vector<1x8x128xbf16> to vector<8x128xbf16>
    %446 = vector.shape_cast %441 : vector<8x128xbf16> to vector<1x8x128xbf16>
    tpu.vector_store %arg16[%443, %c0_133, %c0_134], %446 {strides = array<i32>} : memref<8x8x128xbf16, #tpu.memory_space<vmem>>, vector<1x8x128xbf16>,
    %c3_i32_135 = arith.constant 3 : i32
    %447 = arith.index_cast %c3_i32_135 : i32 to index
    %c0_136 = arith.constant 0 : index
    %c0_137 = arith.constant 0 : index
    %448 = vector.load %arg15[%447, %c0_136, %c0_137] : memref<8x8x512xf32, #tpu.memory_space<vmem>>, vector<1x8x512xf32>
    %449 = vector.shape_cast %448 : vector<1x8x512xf32> to vector<8x512xf32>
    %450 = arith.truncf %440 : vector<8x128xf32> to vector<8x128xbf16>
    %cst_138 = arith.constant dense<0.000000e+00> : vector<8x512xf32>
    %451 = tpu.matmul %450, %319, %cst_138 {dimension_numbers = #tpu.dot_dimension_numbers<[1], [0], [0], [1], [0, 0, 1, 1], [], []>} : vector<8x128xbf16>, vector<128x512xbf16>, vector<8x512xf32> -> vector<8x512xf32>
    %452 = arith.addf %449, %451 : vector<8x512xf32>
    %453 = vector.extract_strided_slice %452 {offsets = [0, 0], sizes = [8, 128], strides = [1, 1]} : vector<8x512xf32> to vector<8x128xf32>
    %454 = arith.negf %453 : vector<8x128xf32>
    %455 = math.exp %454 : vector<8x128xf32>
    %cst_139 = arith.constant 1.000000e+00 : f32
    %456 = vector.broadcast %cst_139 : f32 to vector<8x128xf32>
    %457 = arith.addf %456, %455 : vector<8x128xf32>
    %458 = arith.divf %456, %457 : vector<8x128xf32>
    %459 = vector.extract_strided_slice %452 {offsets = [0, 128], sizes = [8, 128], strides = [1, 1]} : vector<8x512xf32> to vector<8x128xf32>
    %460 = arith.negf %459 : vector<8x128xf32>
    %461 = math.exp %460 : vector<8x128xf32>
    %cst_140 = arith.constant 1.000000e+00 : f32
    %462 = vector.broadcast %cst_140 : f32 to vector<8x128xf32>
    %463 = arith.addf %462, %461 : vector<8x128xf32>
    %464 = arith.divf %462, %463 : vector<8x128xf32>
    %465 = vector.extract_strided_slice %452 {offsets = [0, 256], sizes = [8, 128], strides = [1, 1]} : vector<8x512xf32> to vector<8x128xf32>
    %466 = math.tanh %465 : vector<8x128xf32>
    %467 = vector.extract_strided_slice %452 {offsets = [0, 384], sizes = [8, 128], strides = [1, 1]} : vector<8x512xf32> to vector<8x128xf32>
    %468 = arith.negf %467 : vector<8x128xf32>
    %469 = math.exp %468 : vector<8x128xf32>
    %cst_141 = arith.constant 1.000000e+00 : f32
    %470 = vector.broadcast %cst_141 : f32 to vector<8x128xf32>
    %471 = arith.addf %470, %469 : vector<8x128xf32>
    %472 = arith.divf %470, %471 : vector<8x128xf32>
    %473 = arith.mulf %464, %438 : vector<8x128xf32>
    %474 = arith.mulf %458, %466 : vector<8x128xf32>
    %475 = arith.addf %473, %474 : vector<8x128xf32>
    %476 = math.tanh %475 : vector<8x128xf32>
    %477 = arith.mulf %472, %476 : vector<8x128xf32>
    %478 = arith.truncf %477 : vector<8x128xf32> to vector<8x128xbf16>
    %479 = arith.addi %326, %c3_i32_135 : i32
    %480 = arith.index_cast %479 : i32 to index
    %c0_142 = arith.constant 0 : index
    %c0_143 = arith.constant 0 : index
    %481 = vector.load %arg16[%480, %c0_142, %c0_143] : memref<8x8x128xbf16, #tpu.memory_space<vmem>>, vector<1x8x128xbf16>
    %482 = vector.shape_cast %481 : vector<1x8x128xbf16> to vector<8x128xbf16>
    %483 = vector.shape_cast %478 : vector<8x128xbf16> to vector<1x8x128xbf16>
    tpu.vector_store %arg16[%480, %c0_142, %c0_143], %483 {strides = array<i32>} : memref<8x8x128xbf16, #tpu.memory_space<vmem>>, vector<1x8x128xbf16>,
    %c4_i32_144 = arith.constant 4 : i32
    %484 = arith.index_cast %c4_i32_144 : i32 to index
    %c0_145 = arith.constant 0 : index
    %c0_146 = arith.constant 0 : index
    %485 = vector.load %arg15[%484, %c0_145, %c0_146] : memref<8x8x512xf32, #tpu.memory_space<vmem>>, vector<1x8x512xf32>
    %486 = vector.shape_cast %485 : vector<1x8x512xf32> to vector<8x512xf32>
    %487 = arith.truncf %477 : vector<8x128xf32> to vector<8x128xbf16>
    %cst_147 = arith.constant dense<0.000000e+00> : vector<8x512xf32>
    %488 = tpu.matmul %487, %319, %cst_147 {dimension_numbers = #tpu.dot_dimension_numbers<[1], [0], [0], [1], [0, 0, 1, 1], [], []>} : vector<8x128xbf16>, vector<128x512xbf16>, vector<8x512xf32> -> vector<8x512xf32>
    %489 = arith.addf %486, %488 : vector<8x512xf32>
    %490 = vector.extract_strided_slice %489 {offsets = [0, 0], sizes = [8, 128], strides = [1, 1]} : vector<8x512xf32> to vector<8x128xf32>
    %491 = arith.negf %490 : vector<8x128xf32>
    %492 = math.exp %491 : vector<8x128xf32>
    %cst_148 = arith.constant 1.000000e+00 : f32
    %493 = vector.broadcast %cst_148 : f32 to vector<8x128xf32>
    %494 = arith.addf %493, %492 : vector<8x128xf32>
    %495 = arith.divf %493, %494 : vector<8x128xf32>
    %496 = vector.extract_strided_slice %489 {offsets = [0, 128], sizes = [8, 128], strides = [1, 1]} : vector<8x512xf32> to vector<8x128xf32>
    %497 = arith.negf %496 : vector<8x128xf32>
    %498 = math.exp %497 : vector<8x128xf32>
    %cst_149 = arith.constant 1.000000e+00 : f32
    %499 = vector.broadcast %cst_149 : f32 to vector<8x128xf32>
    %500 = arith.addf %499, %498 : vector<8x128xf32>
    %501 = arith.divf %499, %500 : vector<8x128xf32>
    %502 = vector.extract_strided_slice %489 {offsets = [0, 256], sizes = [8, 128], strides = [1, 1]} : vector<8x512xf32> to vector<8x128xf32>
    %503 = math.tanh %502 : vector<8x128xf32>
    %504 = vector.extract_strided_slice %489 {offsets = [0, 384], sizes = [8, 128], strides = [1, 1]} : vector<8x512xf32> to vector<8x128xf32>
    %505 = arith.negf %504 : vector<8x128xf32>
    %506 = math.exp %505 : vector<8x128xf32>
    %cst_150 = arith.constant 1.000000e+00 : f32
    %507 = vector.broadcast %cst_150 : f32 to vector<8x128xf32>
    %508 = arith.addf %507, %506 : vector<8x128xf32>
    %509 = arith.divf %507, %508 : vector<8x128xf32>
    %510 = arith.mulf %501, %475 : vector<8x128xf32>
    %511 = arith.mulf %495, %503 : vector<8x128xf32>
    %512 = arith.addf %510, %511 : vector<8x128xf32>
    %513 = math.tanh %512 : vector<8x128xf32>
    %514 = arith.mulf %509, %513 : vector<8x128xf32>
    %515 = arith.truncf %514 : vector<8x128xf32> to vector<8x128xbf16>
    %516 = arith.addi %326, %c4_i32_144 : i32
    %517 = arith.index_cast %516 : i32 to index
    %c0_151 = arith.constant 0 : index
    %c0_152 = arith.constant 0 : index
    %518 = vector.load %arg16[%517, %c0_151, %c0_152] : memref<8x8x128xbf16, #tpu.memory_space<vmem>>, vector<1x8x128xbf16>
    %519 = vector.shape_cast %518 : vector<1x8x128xbf16> to vector<8x128xbf16>
    %520 = vector.shape_cast %515 : vector<8x128xbf16> to vector<1x8x128xbf16>
    tpu.vector_store %arg16[%517, %c0_151, %c0_152], %520 {strides = array<i32>} : memref<8x8x128xbf16, #tpu.memory_space<vmem>>, vector<1x8x128xbf16>,
    %c5_i32_153 = arith.constant 5 : i32
    %521 = arith.index_cast %c5_i32_153 : i32 to index
    %c0_154 = arith.constant 0 : index
    %c0_155 = arith.constant 0 : index
    %522 = vector.load %arg15[%521, %c0_154, %c0_155] : memref<8x8x512xf32, #tpu.memory_space<vmem>>, vector<1x8x512xf32>
    %523 = vector.shape_cast %522 : vector<1x8x512xf32> to vector<8x512xf32>
    %524 = arith.truncf %514 : vector<8x128xf32> to vector<8x128xbf16>
    %cst_156 = arith.constant dense<0.000000e+00> : vector<8x512xf32>
    %525 = tpu.matmul %524, %319, %cst_156 {dimension_numbers = #tpu.dot_dimension_numbers<[1], [0], [0], [1], [0, 0, 1, 1], [], []>} : vector<8x128xbf16>, vector<128x512xbf16>, vector<8x512xf32> -> vector<8x512xf32>
    %526 = arith.addf %523, %525 : vector<8x512xf32>
    %527 = vector.extract_strided_slice %526 {offsets = [0, 0], sizes = [8, 128], strides = [1, 1]} : vector<8x512xf32> to vector<8x128xf32>
    %528 = arith.negf %527 : vector<8x128xf32>
    %529 = math.exp %528 : vector<8x128xf32>
    %cst_157 = arith.constant 1.000000e+00 : f32
    %530 = vector.broadcast %cst_157 : f32 to vector<8x128xf32>
    %531 = arith.addf %530, %529 : vector<8x128xf32>
    %532 = arith.divf %530, %531 : vector<8x128xf32>
    %533 = vector.extract_strided_slice %526 {offsets = [0, 128], sizes = [8, 128], strides = [1, 1]} : vector<8x512xf32> to vector<8x128xf32>
    %534 = arith.negf %533 : vector<8x128xf32>
    %535 = math.exp %534 : vector<8x128xf32>
    %cst_158 = arith.constant 1.000000e+00 : f32
    %536 = vector.broadcast %cst_158 : f32 to vector<8x128xf32>
    %537 = arith.addf %536, %535 : vector<8x128xf32>
    %538 = arith.divf %536, %537 : vector<8x128xf32>
    %539 = vector.extract_strided_slice %526 {offsets = [0, 256], sizes = [8, 128], strides = [1, 1]} : vector<8x512xf32> to vector<8x128xf32>
    %540 = math.tanh %539 : vector<8x128xf32>
    %541 = vector.extract_strided_slice %526 {offsets = [0, 384], sizes = [8, 128], strides = [1, 1]} : vector<8x512xf32> to vector<8x128xf32>
    %542 = arith.negf %541 : vector<8x128xf32>
    %543 = math.exp %542 : vector<8x128xf32>
    %cst_159 = arith.constant 1.000000e+00 : f32
    %544 = vector.broadcast %cst_159 : f32 to vector<8x128xf32>
    %545 = arith.addf %544, %543 : vector<8x128xf32>
    %546 = arith.divf %544, %545 : vector<8x128xf32>
    %547 = arith.mulf %538, %512 : vector<8x128xf32>
    %548 = arith.mulf %532, %540 : vector<8x128xf32>
    %549 = arith.addf %547, %548 : vector<8x128xf32>
    %550 = math.tanh %549 : vector<8x128xf32>
    %551 = arith.mulf %546, %550 : vector<8x128xf32>
    %552 = arith.truncf %551 : vector<8x128xf32> to vector<8x128xbf16>
    %553 = arith.addi %326, %c5_i32_153 : i32
    %554 = arith.index_cast %553 : i32 to index
    %c0_160 = arith.constant 0 : index
    %c0_161 = arith.constant 0 : index
    %555 = vector.load %arg16[%554, %c0_160, %c0_161] : memref<8x8x128xbf16, #tpu.memory_space<vmem>>, vector<1x8x128xbf16>
    %556 = vector.shape_cast %555 : vector<1x8x128xbf16> to vector<8x128xbf16>
    %557 = vector.shape_cast %552 : vector<8x128xbf16> to vector<1x8x128xbf16>
    tpu.vector_store %arg16[%554, %c0_160, %c0_161], %557 {strides = array<i32>} : memref<8x8x128xbf16, #tpu.memory_space<vmem>>, vector<1x8x128xbf16>,
    %c6_i32_162 = arith.constant 6 : i32
    %558 = arith.index_cast %c6_i32_162 : i32 to index
    %c0_163 = arith.constant 0 : index
    %c0_164 = arith.constant 0 : index
    %559 = vector.load %arg15[%558, %c0_163, %c0_164] : memref<8x8x512xf32, #tpu.memory_space<vmem>>, vector<1x8x512xf32>
    %560 = vector.shape_cast %559 : vector<1x8x512xf32> to vector<8x512xf32>
    %561 = arith.truncf %551 : vector<8x128xf32> to vector<8x128xbf16>
    %cst_165 = arith.constant dense<0.000000e+00> : vector<8x512xf32>
    %562 = tpu.matmul %561, %319, %cst_165 {dimension_numbers = #tpu.dot_dimension_numbers<[1], [0], [0], [1], [0, 0, 1, 1], [], []>} : vector<8x128xbf16>, vector<128x512xbf16>, vector<8x512xf32> -> vector<8x512xf32>
    %563 = arith.addf %560, %562 : vector<8x512xf32>
    %564 = vector.extract_strided_slice %563 {offsets = [0, 0], sizes = [8, 128], strides = [1, 1]} : vector<8x512xf32> to vector<8x128xf32>
    %565 = arith.negf %564 : vector<8x128xf32>
    %566 = math.exp %565 : vector<8x128xf32>
    %cst_166 = arith.constant 1.000000e+00 : f32
    %567 = vector.broadcast %cst_166 : f32 to vector<8x128xf32>
    %568 = arith.addf %567, %566 : vector<8x128xf32>
    %569 = arith.divf %567, %568 : vector<8x128xf32>
    %570 = vector.extract_strided_slice %563 {offsets = [0, 128], sizes = [8, 128], strides = [1, 1]} : vector<8x512xf32> to vector<8x128xf32>
    %571 = arith.negf %570 : vector<8x128xf32>
    %572 = math.exp %571 : vector<8x128xf32>
    %cst_167 = arith.constant 1.000000e+00 : f32
    %573 = vector.broadcast %cst_167 : f32 to vector<8x128xf32>
    %574 = arith.addf %573, %572 : vector<8x128xf32>
    %575 = arith.divf %573, %574 : vector<8x128xf32>
    %576 = vector.extract_strided_slice %563 {offsets = [0, 256], sizes = [8, 128], strides = [1, 1]} : vector<8x512xf32> to vector<8x128xf32>
    %577 = math.tanh %576 : vector<8x128xf32>
    %578 = vector.extract_strided_slice %563 {offsets = [0, 384], sizes = [8, 128], strides = [1, 1]} : vector<8x512xf32> to vector<8x128xf32>
    %579 = arith.negf %578 : vector<8x128xf32>
    %580 = math.exp %579 : vector<8x128xf32>
    %cst_168 = arith.constant 1.000000e+00 : f32
    %581 = vector.broadcast %cst_168 : f32 to vector<8x128xf32>
    %582 = arith.addf %581, %580 : vector<8x128xf32>
    %583 = arith.divf %581, %582 : vector<8x128xf32>
    %584 = arith.mulf %575, %549 : vector<8x128xf32>
    %585 = arith.mulf %569, %577 : vector<8x128xf32>
    %586 = arith.addf %584, %585 : vector<8x128xf32>
    %587 = math.tanh %586 : vector<8x128xf32>
    %588 = arith.mulf %583, %587 : vector<8x128xf32>
    %589 = arith.truncf %588 : vector<8x128xf32> to vector<8x128xbf16>
    %590 = arith.addi %326, %c6_i32_162 : i32
    %591 = arith.index_cast %590 : i32 to index
    %c0_169 = arith.constant 0 : index
    %c0_170 = arith.constant 0 : index
    %592 = vector.load %arg16[%591, %c0_169, %c0_170] : memref<8x8x128xbf16, #tpu.memory_space<vmem>>, vector<1x8x128xbf16>
    %593 = vector.shape_cast %592 : vector<1x8x128xbf16> to vector<8x128xbf16>
    %594 = vector.shape_cast %589 : vector<8x128xbf16> to vector<1x8x128xbf16>
    tpu.vector_store %arg16[%591, %c0_169, %c0_170], %594 {strides = array<i32>} : memref<8x8x128xbf16, #tpu.memory_space<vmem>>, vector<1x8x128xbf16>,
    %c7_i32_171 = arith.constant 7 : i32
    %595 = arith.index_cast %c7_i32_171 : i32 to index
    %c0_172 = arith.constant 0 : index
    %c0_173 = arith.constant 0 : index
    %596 = vector.load %arg15[%595, %c0_172, %c0_173] : memref<8x8x512xf32, #tpu.memory_space<vmem>>, vector<1x8x512xf32>
    %597 = vector.shape_cast %596 : vector<1x8x512xf32> to vector<8x512xf32>
    %598 = arith.truncf %588 : vector<8x128xf32> to vector<8x128xbf16>
    %cst_174 = arith.constant dense<0.000000e+00> : vector<8x512xf32>
    %599 = tpu.matmul %598, %319, %cst_174 {dimension_numbers = #tpu.dot_dimension_numbers<[1], [0], [0], [1], [0, 0, 1, 1], [], []>} : vector<8x128xbf16>, vector<128x512xbf16>, vector<8x512xf32> -> vector<8x512xf32>
    %600 = arith.addf %597, %599 : vector<8x512xf32>
    %601 = vector.extract_strided_slice %600 {offsets = [0, 0], sizes = [8, 128], strides = [1, 1]} : vector<8x512xf32> to vector<8x128xf32>
    %602 = arith.negf %601 : vector<8x128xf32>
    %603 = math.exp %602 : vector<8x128xf32>
    %cst_175 = arith.constant 1.000000e+00 : f32
    %604 = vector.broadcast %cst_175 : f32 to vector<8x128xf32>
    %605 = arith.addf %604, %603 : vector<8x128xf32>
    %606 = arith.divf %604, %605 : vector<8x128xf32>
    %607 = vector.extract_strided_slice %600 {offsets = [0, 128], sizes = [8, 128], strides = [1, 1]} : vector<8x512xf32> to vector<8x128xf32>
    %608 = arith.negf %607 : vector<8x128xf32>
    %609 = math.exp %608 : vector<8x128xf32>
    %cst_176 = arith.constant 1.000000e+00 : f32
    %610 = vector.broadcast %cst_176 : f32 to vector<8x128xf32>
    %611 = arith.addf %610, %609 : vector<8x128xf32>
    %612 = arith.divf %610, %611 : vector<8x128xf32>
    %613 = vector.extract_strided_slice %600 {offsets = [0, 256], sizes = [8, 128], strides = [1, 1]} : vector<8x512xf32> to vector<8x128xf32>
    %614 = math.tanh %613 : vector<8x128xf32>
    %615 = vector.extract_strided_slice %600 {offsets = [0, 384], sizes = [8, 128], strides = [1, 1]} : vector<8x512xf32> to vector<8x128xf32>
    %616 = arith.negf %615 : vector<8x128xf32>
    %617 = math.exp %616 : vector<8x128xf32>
    %cst_177 = arith.constant 1.000000e+00 : f32
    %618 = vector.broadcast %cst_177 : f32 to vector<8x128xf32>
    %619 = arith.addf %618, %617 : vector<8x128xf32>
    %620 = arith.divf %618, %619 : vector<8x128xf32>
    %621 = arith.mulf %612, %586 : vector<8x128xf32>
    %622 = arith.mulf %606, %614 : vector<8x128xf32>
    %623 = arith.addf %621, %622 : vector<8x128xf32>
    %624 = math.tanh %623 : vector<8x128xf32>
    %625 = arith.mulf %620, %624 : vector<8x128xf32>
    %626 = arith.truncf %625 : vector<8x128xf32> to vector<8x128xbf16>
    %627 = arith.addi %326, %c7_i32_171 : i32
    %628 = arith.index_cast %627 : i32 to index
    %c0_178 = arith.constant 0 : index
    %c0_179 = arith.constant 0 : index
    %629 = vector.load %arg16[%628, %c0_178, %c0_179] : memref<8x8x128xbf16, #tpu.memory_space<vmem>>, vector<1x8x128xbf16>
    %630 = vector.shape_cast %629 : vector<1x8x128xbf16> to vector<8x128xbf16>
    %631 = vector.shape_cast %626 : vector<8x128xbf16> to vector<1x8x128xbf16>
    tpu.vector_store %arg16[%628, %c0_178, %c0_179], %631 {strides = array<i32>} : memref<8x8x128xbf16, #tpu.memory_space<vmem>>, vector<1x8x128xbf16>,
    %c8_i32_180 = arith.constant 8 : i32
    %c1_i32_181 = arith.constant 1 : i32
    %c1_182 = arith.constant 1 : index
    %c0_183 = arith.constant 0 : index
    %c0_184 = arith.constant 0 : index
    %632 = vector.load %arg13[%c1_182, %c0_183, %c0_184] : memref<2x8x128xf32, #tpu.memory_space<vmem>>, vector<1x8x128xf32>
    %633 = vector.shape_cast %632 : vector<1x8x128xf32> to vector<8x128xf32>
    %634 = vector.shape_cast %625 : vector<8x128xf32> to vector<1x8x128xf32>
    tpu.vector_store %arg13[%c1_182, %c0_183, %c0_184], %634 {strides = array<i32>} : memref<2x8x128xf32, #tpu.memory_space<vmem>>, vector<1x8x128xf32>,
    %c1_185 = arith.constant 1 : index
    %c0_186 = arith.constant 0 : index
    %c0_187 = arith.constant 0 : index
    %635 = vector.load %arg14[%c1_185, %c0_186, %c0_187] : memref<2x8x128xf32, #tpu.memory_space<vmem>>, vector<1x8x128xf32>
    %636 = vector.shape_cast %635 : vector<1x8x128xf32> to vector<8x128xf32>
    %637 = vector.shape_cast %623 : vector<8x128xf32> to vector<1x8x128xf32>
    tpu.vector_store %arg14[%c1_185, %c0_186, %c0_187], %637 {strides = array<i32>} : memref<2x8x128xf32, #tpu.memory_space<vmem>>, vector<1x8x128xf32>,
    %c0_188 = arith.constant 0 : index
    %c0_189 = arith.constant 0 : index
    %c0_190 = arith.constant 0 : index
    %638 = vector.load %arg16[%c0_188, %c0_189, %c0_190] : memref<8x8x128xbf16, #tpu.memory_space<vmem>>, vector<8x8x128xbf16>
    %639 = vector.shape_cast %638 : vector<8x8x128xbf16> to vector<64x128xbf16>
    %cst_191 = arith.constant 0.000000e+00 : bf16
    %640 = vector.broadcast %cst_191 : bf16 to vector<64x128xbf16>
    %641 = arith.maximumf %639, %640 : vector<64x128xbf16>
    %c0_192 = arith.constant 0 : index
    %c0_193 = arith.constant 0 : index
    %642 = vector.load %arg10[%c0_192, %c0_193] : memref<128x128xbf16, #tpu.memory_space<vmem>>, vector<128x128xbf16>
    %cst_194 = arith.constant dense<0.000000e+00> : vector<64x128xf32>
    %643 = tpu.matmul %641, %642, %cst_194 {dimension_numbers = #tpu.dot_dimension_numbers<[1], [0], [0], [1], [0, 0, 1, 1], [], []>} : vector<64x128xbf16>, vector<128x128xbf16>, vector<64x128xf32> -> vector<64x128xf32>
    %c0_195 = arith.constant 0 : index
    %c0_196 = arith.constant 0 : index
    %644 = vector.load %arg11[%c0_195, %c0_196] : memref<1x128xf32, #tpu.memory_space<vmem>>, vector<1x128xf32>
    %645 = vector.broadcast %644 : vector<1x128xf32> to vector<64x128xf32>
    %646 = arith.addf %643, %645 : vector<64x128xf32>
    %647 = tpu.iota {dimensions = array<i32: 1>} : vector<64x128xi32>
    %c18_i32 = arith.constant 18 : i32
    %648 = vector.broadcast %c18_i32 : i32 to vector<64x128xi32>
    %649 = arith.cmpi slt, %647, %648 : vector<64x128xi32>
    %cst_197 = arith.constant -1.000000e+30 : f32
    %650 = vector.broadcast %cst_197 : f32 to vector<64x128xf32>
    %651 = arith.select %649, %646, %650 : vector<64x128xi1>, vector<64x128xf32>
    %cst_198 = arith.constant dense<0xFF800000> : vector<64xf32>
    %652 = vector.multi_reduction <maximumf>, %651, %cst_198 [1] : vector<64x128xf32> to vector<64xf32>
    %653 = vector.shape_cast %652 : vector<64xf32> to vector<64x1xf32>
    %654 = vector.broadcast %653 : vector<64x1xf32> to vector<64x128xf32>
    %655 = arith.subf %651, %654 : vector<64x128xf32>
    %656 = math.exp %655 : vector<64x128xf32>
    %cst_199 = arith.constant dense<0.000000e+00> : vector<64xf32>
    %657 = vector.multi_reduction <add>, %656, %cst_199 [1] : vector<64x128xf32> to vector<64xf32>
    %658 = vector.shape_cast %657 : vector<64xf32> to vector<64x1xf32>
    %659 = math.log %658 : vector<64x1xf32>
    %660 = arith.addf %653, %659 : vector<64x1xf32>
    %661 = vector.broadcast %660 : vector<64x1xf32> to vector<64x128xf32>
    %662 = arith.subf %651, %661 : vector<64x128xf32>
    %663 = vector.shape_cast %662 : vector<64x128xf32> to vector<8x8x128xf32>
    %c0_200 = arith.constant 0 : index
    %c0_201 = arith.constant 0 : index
    %c0_202 = arith.constant 0 : index
    %664 = vector.load %arg12[%c0_200, %c0_201, %c0_202] : memref<8x8x128xf32, #tpu.memory_space<vmem>>, vector<8x8x128xf32>
    tpu.vector_store %arg12[%c0_200, %c0_201, %c0_202], %663 {strides = array<i32>} : memref<8x8x128xf32, #tpu.memory_space<vmem>>, vector<8x8x128xf32>,
    return
  }
  func.func @transform_0(%arg0: i32) -> (i32, i32, i32) {
    %c0_i32 = arith.constant 0 : i32
    %c0_i32_0 = arith.constant 0 : i32
    %c0_i32_1 = arith.constant 0 : i32
    return %c0_i32, %arg0, %c0_i32_0 : i32, i32, i32
  }
  func.func @transform_1(%arg0: i32) -> (i32, i32, i32) {
    %c0_i32 = arith.constant 0 : i32
    %c0_i32_0 = arith.constant 0 : i32
    %c0_i32_1 = arith.constant 0 : i32
    return %c0_i32, %arg0, %c0_i32_0 : i32, i32, i32
  }
  func.func @transform_2(%arg0: i32) -> (i32, i32, i32) {
    %c0_i32 = arith.constant 0 : i32
    %c0_i32_0 = arith.constant 0 : i32
    %c0_i32_1 = arith.constant 0 : i32
    return %c0_i32, %arg0, %c0_i32_0 : i32, i32, i32
  }
  func.func @transform_3(%arg0: i32) -> (i32, i32) {
    %c0_i32 = arith.constant 0 : i32
    %c0_i32_0 = arith.constant 0 : i32
    %c0_i32_1 = arith.constant 0 : i32
    return %c0_i32, %c0_i32_0 : i32, i32
  }
  func.func @transform_4(%arg0: i32) -> (i32, i32) {
    %c0_i32 = arith.constant 0 : i32
    %c0_i32_0 = arith.constant 0 : i32
    %c0_i32_1 = arith.constant 0 : i32
    return %c0_i32, %c0_i32_0 : i32, i32
  }
  func.func @transform_5(%arg0: i32) -> (i32, i32) {
    %c0_i32 = arith.constant 0 : i32
    %c0_i32_0 = arith.constant 0 : i32
    %c0_i32_1 = arith.constant 0 : i32
    return %c0_i32, %c0_i32_0 : i32, i32
  }
  func.func @transform_6(%arg0: i32) -> (i32, i32) {
    %c0_i32 = arith.constant 0 : i32
    %c0_i32_0 = arith.constant 0 : i32
    %c0_i32_1 = arith.constant 0 : i32
    return %c0_i32, %c0_i32_0 : i32, i32
  }
  func.func @transform_7(%arg0: i32) -> (i32, i32) {
    %c0_i32 = arith.constant 0 : i32
    %c0_i32_0 = arith.constant 0 : i32
    %c0_i32_1 = arith.constant 0 : i32
    return %c0_i32, %c0_i32_0 : i32, i32
  }
  func.func @transform_8(%arg0: i32) -> (i32, i32) {
    %c0_i32 = arith.constant 0 : i32
    %c0_i32_0 = arith.constant 0 : i32
    %c0_i32_1 = arith.constant 0 : i32
    return %c0_i32, %c0_i32_0 : i32, i32
  }
  func.func @transform_9(%arg0: i32) -> (i32, i32) {
    %c0_i32 = arith.constant 0 : i32
    %c0_i32_0 = arith.constant 0 : i32
    %c0_i32_1 = arith.constant 0 : i32
    return %c0_i32, %c0_i32_0 : i32, i32
  }
  func.func @transform_10(%arg0: i32) -> (i32, i32) {
    %c0_i32 = arith.constant 0 : i32
    %c0_i32_0 = arith.constant 0 : i32
    %c0_i32_1 = arith.constant 0 : i32
    return %c0_i32, %c0_i32_0 : i32, i32
  }
  func.func @transform_11(%arg0: i32) -> (i32, i32, i32) {
    %c0_i32 = arith.constant 0 : i32
    %c0_i32_0 = arith.constant 0 : i32
    %c0_i32_1 = arith.constant 0 : i32
    return %c0_i32, %arg0, %c0_i32_0 : i32, i32, i32
  }
  func.func @transform_12(%arg0: i32) -> (i32, i32, i32) {
    %c0_i32 = arith.constant 0 : i32
    %c0_i32_0 = arith.constant 0 : i32
    %c0_i32_1 = arith.constant 0 : i32
    return %c0_i32, %arg0, %c0_i32_0 : i32, i32, i32
  }
  func.func @transform_13(%arg0: i32) -> (i32, i32, i32) {
    %c0_i32 = arith.constant 0 : i32
    %c0_i32_0 = arith.constant 0 : i32
    %c0_i32_1 = arith.constant 0 : i32
    return %c0_i32, %arg0, %c0_i32_0 : i32, i32, i32
  }
}

</mosaic_0001>

<llo_original>
// kernel: rnn_text_gen_forward.1
$region0: #{rnn_text_gen_forward.1}
  #allocation0 [shape = 'u32[]', space=smem, size = 0x4, offset = 0x4, fixed_abs, tag = 'smem constant byte address 0x4 - core index']
  #allocation1 [shape = 'u32[144,128]{1,0:T(1,128)}', space=vmem, size = 0x12000, scoped, tag = 'internal scratch']
  #allocation2 [shape = 'f32[8,8,512]{2,1,0:T(8,128)}', space=vmem, size = 0x20000, scoped, tag = 'scratch operand']
  #allocation3 [shape = 'bf16[8,8,128]{2,1,0:T(8,128)(2,1)}', space=vmem, size = 0x4000, scoped, tag = 'scratch operand']
  %s0 = inlined_call_operand.vmem [shape: bf16[8,8,16], index: 0, kind: input, shape index: {}]
  %s1 = inlined_call_operand.vmem [shape: f32[2,8,128], index: 1, kind: input, shape index: {}, may-alias: {1,2}]
  %s2 = inlined_call_operand.vmem [shape: f32[2,8,128], index: 2, kind: input, shape index: {}, may-alias: {1,2}]
  %s3 = inlined_call_operand.vmem [shape: bf16[16,512], index: 3, kind: input, shape index: {}]
  %s4 = inlined_call_operand.vmem [shape: bf16[128,512], index: 4, kind: input, shape index: {}]
  %s5 = inlined_call_operand.vmem [shape: f32[1,512], index: 5, kind: input, shape index: {}]
  %s6 = inlined_call_operand.vmem [shape: bf16[128,512], index: 6, kind: input, shape index: {}]
  %s7 = inlined_call_operand.vmem [shape: bf16[128,512], index: 7, kind: input, shape index: {}]
  %s8 = inlined_call_operand.vmem [shape: f32[1,512], index: 8, kind: input, shape index: {}]
  %s9 = inlined_call_operand.vmem [shape: bf16[128,128], index: 9, kind: input, shape index: {}]
  %s10 = inlined_call_operand.vmem [shape: f32[1,128], index: 10, kind: input, shape index: {}]
  %s11 = inlined_call_operand.vmem [shape: f32[8,8,128], index: 11, kind: output, shape index: {0}]
  %s12 = inlined_call_operand.vmem [shape: f32[2,8,128], index: 12, kind: output, shape index: {1}]
  %s13 = inlined_call_operand.vmem [shape: f32[2,8,128], index: 13, kind: output, shape index: {2}]
  %14 = xla_tuple %s11, %s12, %s13
  %s15 = sld [smem:[#allocation0]]
  $region70: #{rnn_text_gen_forward.1} parent=0
    _
  %s17 = ssub.s32 1, %s15
  %s18 = scalar_select 0, %s17, %s15
  // Predicated region
  $region2: #{rnn_text_gen_forward.1} parent=0 // pred_check
    _
  $region3: #{rnn_text_gen_forward.1} parent=0 // pred_check_branch
    %20 = sbr.rel (0) target = $region5
  $region4: #{rnn_text_gen_forward.1} parent=0 // pred_region
    _
  $region5: #{rnn_text_gen_forward.1} parent=0 // pred_fallthru
    _
  // Predicated region
  $region6: #{rnn_text_gen_forward.1} parent=0 // pred_check
    _
  $region7: #{rnn_text_gen_forward.1} parent=0 // pred_check_branch
    %22 = sbr.rel (0) target = $region9
  $region8: #{rnn_text_gen_forward.1} parent=0 // pred_region
    _
  $region9: #{rnn_text_gen_forward.1} parent=0 // pred_fallthru
    _
  // Predicated region
  $region10: #{rnn_text_gen_forward.1} parent=0 // pred_check
    _
  $region11: #{rnn_text_gen_forward.1} parent=0 // pred_check_branch
    %24 = sbr.rel (0) target = $region13
  $region12: #{rnn_text_gen_forward.1} parent=0 // pred_region
    _
  $region13: #{rnn_text_gen_forward.1} parent=0 // pred_fallthru
    _
  // Predicated region
  $region14: #{rnn_text_gen_forward.1} parent=0 // pred_check
    _
  $region15: #{rnn_text_gen_forward.1} parent=0 // pred_check_branch
    %26 = sbr.rel (0) target = $region17
  $region16: #{rnn_text_gen_forward.1} parent=0 // pred_region
    _
  $region17: #{rnn_text_gen_forward.1} parent=0 // pred_fallthru
    _
  // Predicated region
  $region18: #{rnn_text_gen_forward.1} parent=0 // pred_check
    _
  $region19: #{rnn_text_gen_forward.1} parent=0 // pred_check_branch
    %28 = sbr.rel (0) target = $region21
  $region20: #{rnn_text_gen_forward.1} parent=0 // pred_region
    _
  $region21: #{rnn_text_gen_forward.1} parent=0 // pred_fallthru
    _
  // Predicated region
  $region22: #{rnn_text_gen_forward.1} parent=0 // pred_check
    _
  $region23: #{rnn_text_gen_forward.1} parent=0 // pred_check_branch
    %30 = sbr.rel (0) target = $region25
  $region24: #{rnn_text_gen_forward.1} parent=0 // pred_region
    _
  $region25: #{rnn_text_gen_forward.1} parent=0 // pred_fallthru
    _
  // Predicated region
  $region26: #{rnn_text_gen_forward.1} parent=0 // pred_check
    _
  $region27: #{rnn_text_gen_forward.1} parent=0 // pred_check_branch
    %32 = sbr.rel (0) target = $region29
  $region28: #{rnn_text_gen_forward.1} parent=0 // pred_region
    _
  $region29: #{rnn_text_gen_forward.1} parent=0 // pred_fallthru
    _
  // Predicated region
  $region30: #{rnn_text_gen_forward.1} parent=0 // pred_check
    _
  $region31: #{rnn_text_gen_forward.1} parent=0 // pred_check_branch
    %34 = sbr.rel (0) target = $region33
  $region32: #{rnn_text_gen_forward.1} parent=0 // pred_region
    _
  $region33: #{rnn_text_gen_forward.1} parent=0 // pred_fallthru
    _
  // Predicated region
  $region34: #{rnn_text_gen_forward.1} parent=0 // pred_check
    _
  $region35: #{rnn_text_gen_forward.1} parent=0 // pred_check_branch
    %36 = sbr.rel (0) target = $region37
  $region36: #{rnn_text_gen_forward.1} parent=0 // pred_region
    _
  $region37: #{rnn_text_gen_forward.1} parent=0 // pred_fallthru
    _
  // Predicated region
  $region38: #{rnn_text_gen_forward.1} parent=0 // pred_check
    _
  $region39: #{rnn_text_gen_forward.1} parent=0 // pred_check_branch
    %38 = sbr.rel (0) target = $region41
  $region40: #{rnn_text_gen_forward.1} parent=0 // pred_region
    _
  $region41: #{rnn_text_gen_forward.1} parent=0 // pred_fallthru
    _
  // Predicated region
  $region42: #{rnn_text_gen_forward.1} parent=0 // pred_check
    _
  $region43: #{rnn_text_gen_forward.1} parent=0 // pred_check_branch
    %40 = sbr.rel (0) target = $region45
  $region44: #{rnn_text_gen_forward.1} parent=0 // pred_region
    _
  $region45: #{rnn_text_gen_forward.1} parent=0 // pred_fallthru
    _
  %v42 = vld [vmem:[%s4] sm:$0xff]
  %v43 = vld [vmem:[%s4 + $0x8] sm:$0xff]
  %v44 = vld [vmem:[%s4 + $0x10] sm:$0xff]
  %v45 = vld [vmem:[%s4 + $0x18] sm:$0xff]
  %v46 = vld [vmem:[%s4 + $0x20] sm:$0xff]
  %v47 = vld [vmem:[%s4 + $0x28] sm:$0xff]
  %v48 = vld [vmem:[%s4 + $0x30] sm:$0xff]
  %v49 = vld [vmem:[%s4 + $0x38] sm:$0xff]
  %v50 = vld [vmem:[%s4 + $0x40] sm:$0xff]
  %v51 = vld [vmem:[%s4 + $0x48] sm:$0xff]
  %v52 = vld [vmem:[%s4 + $0x50] sm:$0xff]
  %v53 = vld [vmem:[%s4 + $0x58] sm:$0xff]
  %v54 = vld [vmem:[%s4 + $0x60] sm:$0xff]
  %v55 = vld [vmem:[%s4 + $0x68] sm:$0xff]
  %v56 = vld [vmem:[%s4 + $0x70] sm:$0xff]
  %v57 = vld [vmem:[%s4 + $0x78] sm:$0xff]
  %v58 = vld [vmem:[%s4 + $0x80] sm:$0xff]
  %v59 = vld [vmem:[%s4 + $0x88] sm:$0xff]
  %v60 = vld [vmem:[%s4 + $0x90] sm:$0xff]
  %v61 = vld [vmem:[%s4 + $0x98] sm:$0xff]
  %v62 = vld [vmem:[%s4 + $0xa0] sm:$0xff]
  %v63 = vld [vmem:[%s4 + $0xa8] sm:$0xff]
  %v64 = vld [vmem:[%s4 + $0xb0] sm:$0xff]
  %v65 = vld [vmem:[%s4 + $0xb8] sm:$0xff]
  %v66 = vld [vmem:[%s4 + $0xc0] sm:$0xff]
  %v67 = vld [vmem:[%s4 + $0xc8] sm:$0xff]
  %v68 = vld [vmem:[%s4 + $0xd0] sm:$0xff]
  %v69 = vld [vmem:[%s4 + $0xd8] sm:$0xff]
  %v70 = vld [vmem:[%s4 + $0xe0] sm:$0xff]
  %v71 = vld [vmem:[%s4 + $0xe8] sm:$0xff]
  %v72 = vld [vmem:[%s4 + $0xf0] sm:$0xff]
  %v73 = vld [vmem:[%s4 + $0xf8] sm:$0xff]
  %v74 = vld [vmem:[%s5] sm:$0xf]
  %v75 = vld [vmem:[%s1] sm:$0xff]
  %v76 = vld [vmem:[%s2] sm:$0xff]
  %v77 = vld [vmem:[%s0] sm:$0xf]
  %v78 = vld [vmem:[%s0 + $0x4] sm:$0xf]
  %v79 = vld [vmem:[%s0 + $0x8] sm:$0xf]
  %v80 = vld [vmem:[%s0 + $0xc] sm:$0xf]
  %v81 = vld [vmem:[%s0 + $0x10] sm:$0xf]
  %v82 = vld [vmem:[%s0 + $0x14] sm:$0xf]
  %v83 = vld [vmem:[%s0 + $0x18] sm:$0xf]
  %v84 = vld [vmem:[%s0 + $0x1c] sm:$0xf]
  %v85 = vld [vmem:[%s3] sm:$0xff]
  %v86 = vld [vmem:[%s3 + $0x8] sm:$0xff]
  %v87 = vld [vmem:[%s3 + $0x10] sm:$0xff]
  %v88 = vld [vmem:[%s3 + $0x18] sm:$0xff]
  %v90 = vlaneseq
  %v91 = vshrl.u32 %v90, 7
  %v92 = vsub.s32 0, %v91
  %v93 = vrot.slane %v74, %v92
  %v94 = vlaneseq
  %v95 = vshrl.u32 %v94, 7
  %v96 = vsub.s32 1, %v95
  %v97 = vrot.slane %v74, %v96
  %v98 = vlaneseq
  %v99 = vshrl.u32 %v98, 7
  %v100 = vsub.s32 2, %v99
  %v101 = vrot.slane %v74, %v100
  %v102 = vlaneseq
  %v103 = vshrl.u32 %v102, 7
  %v104 = vsub.s32 3, %v103
  %v105 = vrot.slane %v74, %v104
  %v118 = vunpack.c.l.b16 %v77
  %v119 = vunpack.c.l.b16 %v78
  %v120 = vunpack.c.l.b16 %v79
  %v121 = vunpack.c.l.b16 %v80
  %v122 = vunpack.c.l.b16 %v81
  %v123 = vunpack.c.l.b16 %v82
  %v124 = vunpack.c.l.b16 %v83
  %v125 = vunpack.c.l.b16 %v84
  %v126 = vpack.c.b16 %v119, %v118
  %v127 = vpack.c.b16 %v121, %v120
  %v128 = vpack.c.b16 %v123, %v122
  %v129 = vpack.c.b16 %v125, %v124
  %v134 = vunpack.c.l.b16 %v85
  %v135 = vunpack.c.h.b16 %v85
  %v136 = vunpack.c.l.b16 %v86
  %v137 = vunpack.c.h.b16 %v86
  %v138 = vunpack.c.l.b16 %v87
  %v139 = vunpack.c.h.b16 %v87
  %v140 = vunpack.c.l.b16 %v88
  %v141 = vunpack.c.h.b16 %v88
  %v142 = vpack.c.b16 %v138, %v134
  %v143 = vpack.c.b16 %v139, %v135
  %v144 = vpack.c.b16 %v140, %v136
  %v145 = vpack.c.b16 %v141, %v137
  %vm150 = vcmask 130048
  %v152 = vsel %vm150, %v126, 0
  %v155 = vsel %vm150, %v127, 0
  %v158 = vsel %vm150, %v128, 0
  %v161 = vsel %vm150, %v129, 0
  %163 = vmatprep.subr.bf16.mxu0 %v143
  %164 = vmatpush1.bf16.msra.mxu0 %v142
  %165 = vmatprep.subr.bf16.mxu0 0
  %166 = vmatpush1.bf16.msra.mxu0 0
  %167 = vmatprep.subr.bf16.mxu0 0
  %168 = vmatpush1.bf16.msra.mxu0 0
  %169 = vmatprep.subr.bf16.mxu0 0
  %170 = vmatpush1.bf16.msra.mxu0 0
  %171 = vmatprep.subr.bf16.mxu0 0
  %172 = vmatpush1.bf16.msra.mxu0 0
  %173 = vmatprep.subr.bf16.mxu0 0
  %174 = vmatpush1.bf16.msra.mxu0 0
  %175 = vmatprep.subr.bf16.mxu0 0
  %176 = vmatpush1.bf16.msra.mxu0 0
  %177 = vmatprep.subr.bf16.mxu0 0
  %178 = vmatpush1.bf16.msra.mxu0 0
  %179 = vmatprep.subr.bf16.mxu0 0
  %180 = vmatpush1.bf16.msra.mxu0 0
  %181 = vmatprep.subr.bf16.mxu0 0
  %182 = vmatpush1.bf16.msra.mxu0 0
  %183 = vmatprep.subr.bf16.mxu0 0
  %184 = vmatpush1.bf16.msra.mxu0 0
  %185 = vmatprep.subr.bf16.mxu0 0
  %186 = vmatpush1.bf16.msra.mxu0 0
  %187 = vmatprep.subr.bf16.mxu0 0
  %188 = vmatpush1.bf16.msra.mxu0 0
  %189 = vmatprep.subr.bf16.mxu0 0
  %190 = vmatpush1.bf16.msra.mxu0 0
  %191 = vmatprep.subr.bf16.mxu0 0
  %192 = vmatpush1.bf16.msra.mxu0 0
  %193 = vmatprep.subr.bf16.mxu0 0
  %194 = vmatpush1.bf16.msra.mxu0 0
  %195 = vmatprep.mubr.bf16.mxu0 0
  %196 = vmatmul.mubr.bf16.gmra.mrb[0].mxu0 %v152
  %v197 = vpop.f32.mrb[0].mxu0
  %v198 = vadd.f32 %v93, %v197
  %v199 = vpop.f32.mrb[0].mxu0
  %v200 = vadd.f32 %v97, %v199
  %v201 = vpop.f32.mrb[0].mxu0
  %v202 = vadd.f32 %v93, %v201
  %v203 = vpop.f32.mrb[0].mxu0
  %v204 = vadd.f32 %v97, %v203
  %205 = vmatprep.mubr.bf16.mxu0 0
  %206 = vmatmul.mubr.bf16.gmra.mrb[0].mxu0 %v155
  %v207 = vpop.f32.mrb[0].mxu0
  %v208 = vadd.f32 %v93, %v207
  %v209 = vpop.f32.mrb[0].mxu0
  %v210 = vadd.f32 %v97, %v209
  %v211 = vpop.f32.mrb[0].mxu0
  %v212 = vadd.f32 %v93, %v211
  %v213 = vpop.f32.mrb[0].mxu0
  %v214 = vadd.f32 %v97, %v213
  %215 = vmatprep.mubr.bf16.mxu0 0
  %216 = vmatmul.mubr.bf16.gmra.mrb[0].mxu0 %v158
  %v217 = vpop.f32.mrb[0].mxu0
  %v218 = vadd.f32 %v93, %v217
  %v219 = vpop.f32.mrb[0].mxu0
  %v220 = vadd.f32 %v97, %v219
  %v221 = vpop.f32.mrb[0].mxu0
  %v222 = vadd.f32 %v93, %v221
  %v223 = vpop.f32.mrb[0].mxu0
  %v224 = vadd.f32 %v97, %v223
  %225 = vmatprep.mubr.bf16.mxu0 0
  %226 = vmatmul.mubr.bf16.gmra.mrb[0].mxu0 %v161
  %v227 = vpop.f32.mrb[0].mxu0
  %v228 = vadd.f32 %v93, %v227
  %v229 = vpop.f32.mrb[0].mxu0
  %v230 = vadd.f32 %v97, %v229
  %v231 = vpop.f32.mrb[0].mxu0
  %v232 = vadd.f32 %v93, %v231
  %v233 = vpop.f32.mrb[0].mxu0
  %v234 = vadd.f32 %v97, %v233
  %235 = vdwg.mxu0
  %236 = vmatprep.subr.bf16.mxu0 %v145
  %237 = vmatpush1.bf16.msra.mxu0 %v144
  %238 = vmatprep.subr.bf16.mxu0 0
  %239 = vmatpush1.bf16.msra.mxu0 0
  %240 = vmatprep.subr.bf16.mxu0 0
  %241 = vmatpush1.bf16.msra.mxu0 0
  %242 = vmatprep.subr.bf16.mxu0 0
  %243 = vmatpush1.bf16.msra.mxu0 0
  %244 = vmatprep.subr.bf16.mxu0 0
  %245 = vmatpush1.bf16.msra.mxu0 0
  %246 = vmatprep.subr.bf16.mxu0 0
  %247 = vmatpush1.bf16.msra.mxu0 0
  %248 = vmatprep.subr.bf16.mxu0 0
  %249 = vmatpush1.bf16.msra.mxu0 0
  %250 = vmatprep.subr.bf16.mxu0 0
  %251 = vmatpush1.bf16.msra.mxu0 0
  %252 = vmatprep.subr.bf16.mxu0 0
  %253 = vmatpush1.bf16.msra.mxu0 0
  %254 = vmatprep.subr.bf16.mxu0 0
  %255 = vmatpush1.bf16.msra.mxu0 0
  %256 = vmatprep.subr.bf16.mxu0 0
  %257 = vmatpush1.bf16.msra.mxu0 0
  %258 = vmatprep.subr.bf16.mxu0 0
  %259 = vmatpush1.bf16.msra.mxu0 0
  %260 = vmatprep.subr.bf16.mxu0 0
  %261 = vmatpush1.bf16.msra.mxu0 0
  %262 = vmatprep.subr.bf16.mxu0 0
  %263 = vmatpush1.bf16.msra.mxu0 0
  %264 = vmatprep.subr.bf16.mxu0 0
  %265 = vmatpush1.bf16.msra.mxu0 0
  %266 = vmatprep.subr.bf16.mxu0 0
  %267 = vmatpush1.bf16.msra.mxu0 0
  %268 = vmatprep.mubr.bf16.mxu0 0
  %269 = vmatmul.mubr.bf16.gmra.mrb[0].mxu0 %v152
  %v270 = vpop.f32.mrb[0].mxu0
  %v271 = vadd.f32 %v101, %v270
  %v272 = vpop.f32.mrb[0].mxu0
  %v273 = vadd.f32 %v105, %v272
  %v274 = vpop.f32.mrb[0].mxu0
  %v275 = vadd.f32 %v101, %v274
  %v276 = vpop.f32.mrb[0].mxu0
  %v277 = vadd.f32 %v105, %v276
  %278 = vmatprep.mubr.bf16.mxu0 0
  %279 = vmatmul.mubr.bf16.gmra.mrb[0].mxu0 %v155
  %v280 = vpop.f32.mrb[0].mxu0
  %v281 = vadd.f32 %v101, %v280
  %v282 = vpop.f32.mrb[0].mxu0
  %v283 = vadd.f32 %v105, %v282
  %v284 = vpop.f32.mrb[0].mxu0
  %v285 = vadd.f32 %v101, %v284
  %v286 = vpop.f32.mrb[0].mxu0
  %v287 = vadd.f32 %v105, %v286
  %288 = vmatprep.mubr.bf16.mxu0 0
  %289 = vmatmul.mubr.bf16.gmra.mrb[0].mxu0 %v158
  %v290 = vpop.f32.mrb[0].mxu0
  %v291 = vadd.f32 %v101, %v290
  %v292 = vpop.f32.mrb[0].mxu0
  %v293 = vadd.f32 %v105, %v292
  %v294 = vpop.f32.mrb[0].mxu0
  %v295 = vadd.f32 %v101, %v294
  %v296 = vpop.f32.mrb[0].mxu0
  %v297 = vadd.f32 %v105, %v296
  %298 = vmatprep.mubr.bf16.mxu0 0
  %299 = vmatmul.mubr.bf16.gmra.mrb[0].mxu0 %v161
  %v300 = vpop.f32.mrb[0].mxu0
  %v301 = vadd.f32 %v101, %v300
  %v302 = vpop.f32.mrb[0].mxu0
  %v303 = vadd.f32 %v105, %v302
  %v304 = vpop.f32.mrb[0].mxu0
  %v305 = vadd.f32 %v101, %v304
  %v306 = vpop.f32.mrb[0].mxu0
  %v307 = vadd.f32 %v105, %v306
  %308 = vdwg.mxu0
  %309 = vst [vmem:[#allocation2] sm:$0xff] %v198
  %310 = vst [vmem:[#allocation2 + $0x8] sm:$0xff] %v200
  %311 = vst [vmem:[#allocation2 + $0x10] sm:$0xff] %v271
  %312 = vst [vmem:[#allocation2 + $0x18] sm:$0xff] %v273
  %313 = vst [vmem:[#allocation2 + $0x20] sm:$0xff] %v202
  %314 = vst [vmem:[#allocation2 + $0x28] sm:$0xff] %v204
  %315 = vst [vmem:[#allocation2 + $0x30] sm:$0xff] %v275
  %316 = vst [vmem:[#allocation2 + $0x38] sm:$0xff] %v277
  %317 = vst [vmem:[#allocation2 + $0x40] sm:$0xff] %v208
  %318 = vst [vmem:[#allocation2 + $0x48] sm:$0xff] %v210
  %319 = vst [vmem:[#allocation2 + $0x50] sm:$0xff] %v281
  %320 = vst [vmem:[#allocation2 + $0x58] sm:$0xff] %v283
  %321 = vst [vmem:[#allocation2 + $0x60] sm:$0xff] %v212
  %322 = vst [vmem:[#allocation2 + $0x68] sm:$0xff] %v214
  %323 = vst [vmem:[#allocation2 + $0x70] sm:$0xff] %v285
  %324 = vst [vmem:[#allocation2 + $0x78] sm:$0xff] %v287
  %325 = vst [vmem:[#allocation2 + $0x80] sm:$0xff] %v218
  %326 = vst [vmem:[#allocation2 + $0x88] sm:$0xff] %v220
  %327 = vst [vmem:[#allocation2 + $0x90] sm:$0xff] %v291
  %328 = vst [vmem:[#allocation2 + $0x98] sm:$0xff] %v293
  %329 = vst [vmem:[#allocation2 + $0xa0] sm:$0xff] %v222
  %330 = vst [vmem:[#allocation2 + $0xa8] sm:$0xff] %v224
  %331 = vst [vmem:[#allocation2 + $0xb0] sm:$0xff] %v295
  %332 = vst [vmem:[#allocation2 + $0xb8] sm:$0xff] %v297
  %333 = vst [vmem:[#allocation2 + $0xc0] sm:$0xff] %v228
  %334 = vst [vmem:[#allocation2 + $0xc8] sm:$0xff] %v230
  %335 = vst [vmem:[#allocation2 + $0xd0] sm:$0xff] %v301
  %336 = vst [vmem:[#allocation2 + $0xd8] sm:$0xff] %v303
  %337 = vst [vmem:[#allocation2 + $0xe0] sm:$0xff] %v232
  %338 = vst [vmem:[#allocation2 + $0xe8] sm:$0xff] %v234
  %339 = vst [vmem:[#allocation2 + $0xf0] sm:$0xff] %v305
  %340 = vst [vmem:[#allocation2 + $0xf8] sm:$0xff] %v307
  %v341 = vld [vmem:[#allocation2] sm:$0xff]
  %v342 = vld [vmem:[#allocation2 + $0x8] sm:$0xff]
  %v343 = vld [vmem:[#allocation2 + $0x10] sm:$0xff]
  %v344 = vld [vmem:[#allocation2 + $0x18] sm:$0xff]
  %v345 = vpack.c.bf16 %v75, %v75
  %v378 = vunpack.c.l.b16 %v42
  %v379 = vunpack.c.h.b16 %v42
  %v380 = vunpack.c.l.b16 %v43
  %v381 = vunpack.c.h.b16 %v43
  %v382 = vunpack.c.l.b16 %v44
  %v383 = vunpack.c.h.b16 %v44
  %v384 = vunpack.c.l.b16 %v45
  %v385 = vunpack.c.h.b16 %v45
  %v386 = vunpack.c.l.b16 %v46
  %v387 = vunpack.c.h.b16 %v46
  %v388 = vunpack.c.l.b16 %v47
  %v389 = vunpack.c.h.b16 %v47
  %v390 = vunpack.c.l.b16 %v48
  %v391 = vunpack.c.h.b16 %v48
  %v392 = vunpack.c.l.b16 %v49
  %v393 = vunpack.c.h.b16 %v49
  %v394 = vunpack.c.l.b16 %v50
  %v395 = vunpack.c.h.b16 %v50
  %v396 = vunpack.c.l.b16 %v51
  %v397 = vunpack.c.h.b16 %v51
  %v398 = vunpack.c.l.b16 %v52
  %v399 = vunpack.c.h.b16 %v52
  %v400 = vunpack.c.l.b16 %v53
  %v401 = vunpack.c.h.b16 %v53
  %v402 = vunpack.c.l.b16 %v54
  %v403 = vunpack.c.h.b16 %v54
  %v404 = vunpack.c.l.b16 %v55
  %v405 = vunpack.c.h.b16 %v55
  %v406 = vunpack.c.l.b16 %v56
  %v407 = vunpack.c.h.b16 %v56
  %v408 = vunpack.c.l.b16 %v57
  %v409 = vunpack.c.h.b16 %v57
  %v410 = vunpack.c.l.b16 %v58
  %v411 = vunpack.c.h.b16 %v58
  %v412 = vunpack.c.l.b16 %v59
  %v413 = vunpack.c.h.b16 %v59
  %v414 = vunpack.c.l.b16 %v60
  %v415 = vunpack.c.h.b16 %v60
  %v416 = vunpack.c.l.b16 %v61
  %v417 = vunpack.c.h.b16 %v61
  %v418 = vunpack.c.l.b16 %v62
  %v419 = vunpack.c.h.b16 %v62
  %v420 = vunpack.c.l.b16 %v63
  %v421 = vunpack.c.h.b16 %v63
  %v422 = vunpack.c.l.b16 %v64
  %v423 = vunpack.c.h.b16 %v64
  %v424 = vunpack.c.l.b16 %v65
  %v425 = vunpack.c.h.b16 %v65
  %v426 = vunpack.c.l.b16 %v66
  %v427 = vunpack.c.h.b16 %v66
  %v428 = vunpack.c.l.b16 %v67
  %v429 = vunpack.c.h.b16 %v67
  %v430 = vunpack.c.l.b16 %v68
  %v431 = vunpack.c.h.b16 %v68
  %v432 = vunpack.c.l.b16 %v69
  %v433 = vunpack.c.h.b16 %v69
  %v434 = vunpack.c.l.b16 %v70
  %v435 = vunpack.c.h.b16 %v70
  %v436 = vunpack.c.l.b16 %v71
  %v437 = vunpack.c.h.b16 %v71
  %v438 = vunpack.c.l.b16 %v72
  %v439 = vunpack.c.h.b16 %v72
  %v440 = vunpack.c.l.b16 %v73
  %v441 = vunpack.c.h.b16 %v73
  %v442 = vpack.c.b16 %v382, %v378
  %v443 = vpack.c.b16 %v383, %v379
  %v444 = vpack.c.b16 %v384, %v380
  %v445 = vpack.c.b16 %v385, %v381
  %v446 = vpack.c.b16 %v390, %v386
  %v447 = vpack.c.b16 %v391, %v387
  %v448 = vpack.c.b16 %v392, %v388
  %v449 = vpack.c.b16 %v393, %v389
  %v450 = vpack.c.b16 %v398, %v394
  %v451 = vpack.c.b16 %v399, %v395
  %v452 = vpack.c.b16 %v400, %v396
  %v453 = vpack.c.b16 %v401, %v397
  %v454 = vpack.c.b16 %v406, %v402
  %v455 = vpack.c.b16 %v407, %v403
  %v456 = vpack.c.b16 %v408, %v404
  %v457 = vpack.c.b16 %v409, %v405
  %v458 = vpack.c.b16 %v414, %v410
  %v459 = vpack.c.b16 %v415, %v411
  %v460 = vpack.c.b16 %v416, %v412
  %v461 = vpack.c.b16 %v417, %v413
  %v462 = vpack.c.b16 %v422, %v418
  %v463 = vpack.c.b16 %v423, %v419
  %v464 = vpack.c.b16 %v424, %v420
  %v465 = vpack.c.b16 %v425, %v421
  %v466 = vpack.c.b16 %v430, %v426
  %v467 = vpack.c.b16 %v431, %v427
  %v468 = vpack.c.b16 %v432, %v428
  %v469 = vpack.c.b16 %v433, %v429
  %v470 = vpack.c.b16 %v438, %v434
  %v471 = vpack.c.b16 %v439, %v435
  %v472 = vpack.c.b16 %v440, %v436
  %v473 = vpack.c.b16 %v441, %v437
  %506 = vmatprep.subr.bf16.mxu0 %v443
  %507 = vmatpush1.bf16.msra.mxu0 %v442
  %508 = vmatprep.subr.bf16.mxu0 %v447
  %509 = vmatpush1.bf16.msra.mxu0 %v446
  %510 = vmatprep.subr.bf16.mxu0 %v451
  %511 = vmatpush1.bf16.msra.mxu0 %v450
  %512 = vmatprep.subr.bf16.mxu0 %v455
  %513 = vmatpush1.bf16.msra.mxu0 %v454
  %514 = vmatprep.subr.bf16.mxu0 %v459
  %515 = vmatpush1.bf16.msra.mxu0 %v458
  %516 = vmatprep.subr.bf16.mxu0 %v463
  %517 = vmatpush1.bf16.msra.mxu0 %v462
  %518 = vmatprep.subr.bf16.mxu0 %v467
  %519 = vmatpush1.bf16.msra.mxu0 %v466
  %520 = vmatprep.subr.bf16.mxu0 %v471
  %521 = vmatpush1.bf16.msra.mxu0 %v470
  %522 = vmatprep.subr.bf16.mxu0 0
  %523 = vmatpush1.bf16.msra.mxu0 0
  %524 = vmatprep.subr.bf16.mxu0 0
  %525 = vmatpush1.bf16.msra.mxu0 0
  %526 = vmatprep.subr.bf16.mxu0 0
  %527 = vmatpush1.bf16.msra.mxu0 0
  %528 = vmatprep.subr.bf16.mxu0 0
  %529 = vmatpush1.bf16.msra.mxu0 0
  %530 = vmatprep.subr.bf16.mxu0 0
  %531 = vmatpush1.bf16.msra.mxu0 0
  %532 = vmatprep.subr.bf16.mxu0 0
  %533 = vmatpush1.bf16.msra.mxu0 0
  %534 = vmatprep.subr.bf16.mxu0 0
  %535 = vmatpush1.bf16.msra.mxu0 0
  %536 = vmatprep.subr.bf16.mxu0 0
  %537 = vmatpush1.bf16.msra.mxu0 0
  %538 = vmatprep.mubr.bf16.mxu0 0
  %539 = vmatmul.mubr.bf16.gmra.mrb[0].mxu0 %v345
  %v540 = vpop.f32.mrb[0].mxu0
  %v541 = vadd.f32 0.0, %v540
  %v542 = vpop.f32.mrb[0].mxu0
  %v543 = vadd.f32 0.0, %v542
  %v544 = vpop.f32.mrb[0].mxu0
  %v545 = vpop.f32.mrb[0].mxu0
  %546 = vdwg.mxu0
  %547 = vmatprep.subr.bf16.mxu0 %v445
  %548 = vmatpush1.bf16.msra.mxu0 %v444
  %549 = vmatprep.subr.bf16.mxu0 %v449
  %550 = vmatpush1.bf16.msra.mxu0 %v448
  %551 = vmatprep.subr.bf16.mxu0 %v453
  %552 = vmatpush1.bf16.msra.mxu0 %v452
  %553 = vmatprep.subr.bf16.mxu0 %v457
  %554 = vmatpush1.bf16.msra.mxu0 %v456
  %555 = vmatprep.subr.bf16.mxu0 %v461
  %556 = vmatpush1.bf16.msra.mxu0 %v460
  %557 = vmatprep.subr.bf16.mxu0 %v465
  %558 = vmatpush1.bf16.msra.mxu0 %v464
  %559 = vmatprep.subr.bf16.mxu0 %v469
  %560 = vmatpush1.bf16.msra.mxu0 %v468
  %561 = vmatprep.subr.bf16.mxu0 %v473
  %562 = vmatpush1.bf16.msra.mxu0 %v472
  %563 = vmatprep.subr.bf16.mxu0 0
  %564 = vmatpush1.bf16.msra.mxu0 0
  %565 = vmatprep.subr.bf16.mxu0 0
  %566 = vmatpush1.bf16.msra.mxu0 0
  %567 = vmatprep.subr.bf16.mxu0 0
  %568 = vmatpush1.bf16.msra.mxu0 0
  %569 = vmatprep.subr.bf16.mxu0 0
  %570 = vmatpush1.bf16.msra.mxu0 0
  %571 = vmatprep.subr.bf16.mxu0 0
  %572 = vmatpush1.bf16.msra.mxu0 0
  %573 = vmatprep.subr.bf16.mxu0 0
  %574 = vmatpush1.bf16.msra.mxu0 0
  %575 = vmatprep.subr.bf16.mxu0 0
  %576 = vmatpush1.bf16.msra.mxu0 0
  %577 = vmatprep.subr.bf16.mxu0 0
  %578 = vmatpush1.bf16.msra.mxu0 0
  %579 = vmatprep.mubr.bf16.mxu0 0
  %580 = vmatmul.mubr.bf16.gmra.mrb[0].mxu0 %v345
  %v581 = vpop.f32.mrb[0].mxu0
  %v582 = vadd.f32 0.0, %v581
  %v583 = vpop.f32.mrb[0].mxu0
  %v584 = vadd.f32 0.0, %v583
  %v585 = vpop.f32.mrb[0].mxu0
  %v586 = vpop.f32.mrb[0].mxu0
  %587 = vdwg.mxu0
  %v588 = vadd.f32 %v341, %v541
  %v589 = vadd.f32 %v342, %v543
  %v590 = vadd.f32 %v343, %v582
  %v591 = vadd.f32 %v344, %v584
  %v592 = vxor.u32 %v588, 2147483648
  %v593 = vmul.f32 %v592, 1.442695
  %v594 = vpow.pop %v593
  %v595 = vadd.f32 %v594, 1.0
  %v596 = vrcp.pop %v595
  %v597 = vmul.f32 1.0, %v596
  %v598 = vxor.u32 %v589, 2147483648
  %v599 = vmul.f32 %v598, 1.442695
  %v600 = vpow.pop %v599
  %v601 = vadd.f32 %v600, 1.0
  %v602 = vrcp.pop %v601
  %v603 = vmul.f32 1.0, %v602
  %v604 = vtanh.pop %v590
  %v605 = vxor.u32 %v591, 2147483648
  %v606 = vmul.f32 %v605, 1.442695
  %v607 = vpow.pop %v606
  %v608 = vadd.f32 %v607, 1.0
  %v609 = vrcp.pop %v608
  %v610 = vmul.f32 1.0, %v609
  %v611 = vmul.f32 %v603, %v76
  %v612 = vmul.f32 %v597, %v604
  %v613 = vadd.f32 %v611, %v612
  %v614 = vtanh.pop %v613
  %v615 = vmul.f32 %v610, %v614
  %v616 = vpack.c.bf16 %v615, %v615
  %617 = vst [vmem:[#allocation3] sm:$0xf] %v616
  %s618 = scalar_lea.vmem [#allocation2], 32
  %v619 = vld [vmem:[%s618] sm:$0xff]
  %v620 = vld [vmem:[%s618 + $0x8] sm:$0xff]
  %v621 = vld [vmem:[%s618 + $0x10] sm:$0xff]
  %v622 = vld [vmem:[%s618 + $0x18] sm:$0xff]
  %623 = vmatprep.subr.bf16.mxu0 %v443
  %624 = vmatpush1.bf16.msra.mxu0 %v442
  %625 = vmatprep.subr.bf16.mxu0 %v447
  %626 = vmatpush1.bf16.msra.mxu0 %v446
  %627 = vmatprep.subr.bf16.mxu0 %v451
  %628 = vmatpush1.bf16.msra.mxu0 %v450
  %629 = vmatprep.subr.bf16.mxu0 %v455
  %630 = vmatpush1.bf16.msra.mxu0 %v454
  %631 = vmatprep.subr.bf16.mxu0 %v459
  %632 = vmatpush1.bf16.msra.mxu0 %v458
  %633 = vmatprep.subr.bf16.mxu0 %v463
  %634 = vmatpush1.bf16.msra.mxu0 %v462
  %635 = vmatprep.subr.bf16.mxu0 %v467
  %636 = vmatpush1.bf16.msra.mxu0 %v466
  %637 = vmatprep.subr.bf16.mxu0 %v471
  %638 = vmatpush1.bf16.msra.mxu0 %v470
  %639 = vmatprep.subr.bf16.mxu0 0
  %640 = vmatpush1.bf16.msra.mxu0 0
  %641 = vmatprep.subr.bf16.mxu0 0
  %642 = vmatpush1.bf16.msra.mxu0 0
  %643 = vmatprep.subr.bf16.mxu0 0
  %644 = vmatpush1.bf16.msra.mxu0 0
  %645 = vmatprep.subr.bf16.mxu0 0
  %646 = vmatpush1.bf16.msra.mxu0 0
  %647 = vmatprep.subr.bf16.mxu0 0
  %648 = vmatpush1.bf16.msra.mxu0 0
  %649 = vmatprep.subr.bf16.mxu0 0
  %650 = vmatpush1.bf16.msra.mxu0 0
  %651 = vmatprep.subr.bf16.mxu0 0
  %652 = vmatpush1.bf16.msra.mxu0 0
  %653 = vmatprep.subr.bf16.mxu0 0
  %654 = vmatpush1.bf16.msra.mxu0 0
  %655 = vmatprep.mubr.bf16.mxu0 0
  %656 = vmatmul.mubr.bf16.gmra.mrb[0].mxu0 %v616
  %v657 = vpop.f32.mrb[0].mxu0
  %v658 = vadd.f32 0.0, %v657
  %v659 = vpop.f32.mrb[0].mxu0
  %v660 = vadd.f32 0.0, %v659
  %v661 = vpop.f32.mrb[0].mxu0
  %v662 = vpop.f32.mrb[0].mxu0
  %663 = vdwg.mxu0
  %664 = vmatprep.subr.bf16.mxu0 %v445
  %665 = vmatpush1.bf16.msra.mxu0 %v444
  %666 = vmatprep.subr.bf16.mxu0 %v449
  %667 = vmatpush1.bf16.msra.mxu0 %v448
  %668 = vmatprep.subr.bf16.mxu0 %v453
  %669 = vmatpush1.bf16.msra.mxu0 %v452
  %670 = vmatprep.subr.bf16.mxu0 %v457
  %671 = vmatpush1.bf16.msra.mxu0 %v456
  %672 = vmatprep.subr.bf16.mxu0 %v461
  %673 = vmatpush1.bf16.msra.mxu0 %v460
  %674 = vmatprep.subr.bf16.mxu0 %v465
  %675 = vmatpush1.bf16.msra.mxu0 %v464
  %676 = vmatprep.subr.bf16.mxu0 %v469
  %677 = vmatpush1.bf16.msra.mxu0 %v468
  %678 = vmatprep.subr.bf16.mxu0 %v473
  %679 = vmatpush1.bf16.msra.mxu0 %v472
  %680 = vmatprep.subr.bf16.mxu0 0
  %681 = vmatpush1.bf16.msra.mxu0 0
  %682 = vmatprep.subr.bf16.mxu0 0
  %683 = vmatpush1.bf16.msra.mxu0 0
  %684 = vmatprep.subr.bf16.mxu0 0
  %685 = vmatpush1.bf16.msra.mxu0 0
  %686 = vmatprep.subr.bf16.mxu0 0
  %687 = vmatpush1.bf16.msra.mxu0 0
  %688 = vmatprep.subr.bf16.mxu0 0
  %689 = vmatpush1.bf16.msra.mxu0 0
  %690 = vmatprep.subr.bf16.mxu0 0
  %691 = vmatpush1.bf16.msra.mxu0 0
  %692 = vmatprep.subr.bf16.mxu0 0
  %693 = vmatpush1.bf16.msra.mxu0 0
  %694 = vmatprep.subr.bf16.mxu0 0
  %695 = vmatpush1.bf16.msra.mxu0 0
  %696 = vmatprep.mubr.bf16.mxu0 0
  %697 = vmatmul.mubr.bf16.gmra.mrb[0].mxu0 %v616
  %v698 = vpop.f32.mrb[0].mxu0
  %v699 = vadd.f32 0.0, %v698
  %v700 = vpop.f32.mrb[0].mxu0
  %v701 = vadd.f32 0.0, %v700
  %v702 = vpop.f32.mrb[0].mxu0
  %v703 = vpop.f32.mrb[0].mxu0
  %704 = vdwg.mxu0
  %v705 = vadd.f32 %v619, %v658
  %v706 = vadd.f32 %v620, %v660
  %v707 = vadd.f32 %v621, %v699
  %v708 = vadd.f32 %v622, %v701
  %v709 = vxor.u32 %v705, 2147483648
  %v710 = vmul.f32 %v709, 1.442695
  %v711 = vpow.pop %v710
  %v712 = vadd.f32 %v711, 1.0
  %v713 = vrcp.pop %v712
  %v714 = vmul.f32 1.0, %v713
  %v715 = vxor.u32 %v706, 2147483648
  %v716 = vmul.f32 %v715, 1.442695
  %v717 = vpow.pop %v716
  %v718 = vadd.f32 %v717, 1.0
  %v719 = vrcp.pop %v718
  %v720 = vmul.f32 1.0, %v719
  %v721 = vtanh.pop %v707
  %v722 = vxor.u32 %v708, 2147483648
  %v723 = vmul.f32 %v722, 1.442695
  %v724 = vpow.pop %v723
  %v725 = vadd.f32 %v724, 1.0
  %v726 = vrcp.pop %v725
  %v727 = vmul.f32 1.0, %v726
  %v728 = vmul.f32 %v720, %v613
  %v729 = vmul.f32 %v714, %v721
  %v730 = vadd.f32 %v728, %v729
  %v731 = vtanh.pop %v730
  %v732 = vmul.f32 %v727, %v731
  %v733 = vpack.c.bf16 %v732, %v732
  %s734 = sadd.s32 0, 1
  %s735 = smul.addr %s734, 4
  %s736 = scalar_lea.vmem [#allocation3], %s735
  %737 = vst [vmem:[%s736] sm:$0xf] %v733
  %s738 = scalar_lea.vmem [#allocation2], 64
  %v739 = vld [vmem:[%s738] sm:$0xff]
  %v740 = vld [vmem:[%s738 + $0x8] sm:$0xff]
  %v741 = vld [vmem:[%s738 + $0x10] sm:$0xff]
  %v742 = vld [vmem:[%s738 + $0x18] sm:$0xff]
  %743 = vmatprep.subr.bf16.mxu0 %v443
  %744 = vmatpush1.bf16.msra.mxu0 %v442
  %745 = vmatprep.subr.bf16.mxu0 %v447
  %746 = vmatpush1.bf16.msra.mxu0 %v446
  %747 = vmatprep.subr.bf16.mxu0 %v451
  %748 = vmatpush1.bf16.msra.mxu0 %v450
  %749 = vmatprep.subr.bf16.mxu0 %v455
  %750 = vmatpush1.bf16.msra.mxu0 %v454
  %751 = vmatprep.subr.bf16.mxu0 %v459
  %752 = vmatpush1.bf16.msra.mxu0 %v458
  %753 = vmatprep.subr.bf16.mxu0 %v463
  %754 = vmatpush1.bf16.msra.mxu0 %v462
  %755 = vmatprep.subr.bf16.mxu0 %v467
  %756 = vmatpush1.bf16.msra.mxu0 %v466
  %757 = vmatprep.subr.bf16.mxu0 %v471
  %758 = vmatpush1.bf16.msra.mxu0 %v470
  %759 = vmatprep.subr.bf16.mxu0 0
  %760 = vmatpush1.bf16.msra.mxu0 0
  %761 = vmatprep.subr.bf16.mxu0 0
  %762 = vmatpush1.bf16.msra.mxu0 0
  %763 = vmatprep.subr.bf16.mxu0 0
  %764 = vmatpush1.bf16.msra.mxu0 0
  %765 = vmatprep.subr.bf16.mxu0 0
  %766 = vmatpush1.bf16.msra.mxu0 0
  %767 = vmatprep.subr.bf16.mxu0 0
  %768 = vmatpush1.bf16.msra.mxu0 0
  %769 = vmatprep.subr.bf16.mxu0 0
  %770 = vmatpush1.bf16.msra.mxu0 0
  %771 = vmatprep.subr.bf16.mxu0 0
  %772 = vmatpush1.bf16.msra.mxu0 0
  %773 = vmatprep.subr.bf16.mxu0 0
  %774 = vmatpush1.bf16.msra.mxu0 0
  %775 = vmatprep.mubr.bf16.mxu0 0
  %776 = vmatmul.mubr.bf16.gmra.mrb[0].mxu0 %v733
  %v777 = vpop.f32.mrb[0].mxu0
  %v778 = vadd.f32 0.0, %v777
  %v779 = vpop.f32.mrb[0].mxu0
  %v780 = vadd.f32 0.0, %v779
  %v781 = vpop.f32.mrb[0].mxu0
  %v782 = vpop.f32.mrb[0].mxu0
  %783 = vdwg.mxu0
  %784 = vmatprep.subr.bf16.mxu0 %v445
  %785 = vmatpush1.bf16.msra.mxu0 %v444
  %786 = vmatprep.subr.bf16.mxu0 %v449
  %787 = vmatpush1.bf16.msra.mxu0 %v448
  %788 = vmatprep.subr.bf16.mxu0 %v453
  %789 = vmatpush1.bf16.msra.mxu0 %v452
  %790 = vmatprep.subr.bf16.mxu0 %v457
  %791 = vmatpush1.bf16.msra.mxu0 %v456
  %792 = vmatprep.subr.bf16.mxu0 %v461
  %793 = vmatpush1.bf16.msra.mxu0 %v460
  %794 = vmatprep.subr.bf16.mxu0 %v465
  %795 = vmatpush1.bf16.msra.mxu0 %v464
  %796 = vmatprep.subr.bf16.mxu0 %v469
  %797 = vmatpush1.bf16.msra.mxu0 %v468
  %798 = vmatprep.subr.bf16.mxu0 %v473
  %799 = vmatpush1.bf16.msra.mxu0 %v472
  %800 = vmatprep.subr.bf16.mxu0 0
  %801 = vmatpush1.bf16.msra.mxu0 0
  %802 = vmatprep.subr.bf16.mxu0 0
  %803 = vmatpush1.bf16.msra.mxu0 0
  %804 = vmatprep.subr.bf16.mxu0 0
  %805 = vmatpush1.bf16.msra.mxu0 0
  %806 = vmatprep.subr.bf16.mxu0 0
  %807 = vmatpush1.bf16.msra.mxu0 0
  %808 = vmatprep.subr.bf16.mxu0 0
  %809 = vmatpush1.bf16.msra.mxu0 0
  %810 = vmatprep.subr.bf16.mxu0 0
  %811 = vmatpush1.bf16.msra.mxu0 0
  %812 = vmatprep.subr.bf16.mxu0 0
  %813 = vmatpush1.bf16.msra.mxu0 0
  %814 = vmatprep.subr.bf16.mxu0 0
  %815 = vmatpush1.bf16.msra.mxu0 0
  %816 = vmatprep.mubr.bf16.mxu0 0
  %817 = vmatmul.mubr.bf16.gmra.mrb[0].mxu0 %v733
  %v818 = vpop.f32.mrb[0].mxu0
  %v819 = vadd.f32 0.0, %v818
  %v820 = vpop.f32.mrb[0].mxu0
  %v821 = vadd.f32 0.0, %v820
  %v822 = vpop.f32.mrb[0].mxu0
  %v823 = vpop.f32.mrb[0].mxu0
  %824 = vdwg.mxu0
  %v825 = vadd.f32 %v739, %v778
  %v826 = vadd.f32 %v740, %v780
  %v827 = vadd.f32 %v741, %v819
  %v828 = vadd.f32 %v742, %v821
  %v829 = vxor.u32 %v825, 2147483648
  %v830 = vmul.f32 %v829, 1.442695
  %v831 = vpow.pop %v830
  %v832 = vadd.f32 %v831, 1.0
  %v833 = vrcp.pop %v832
  %v834 = vmul.f32 1.0, %v833
  %v835 = vxor.u32 %v826, 2147483648
  %v836 = vmul.f32 %v835, 1.442695
  %v837 = vpow.pop %v836
  %v838 = vadd.f32 %v837, 1.0
  %v839 = vrcp.pop %v838
  %v840 = vmul.f32 1.0, %v839
  %v841 = vtanh.pop %v827
  %v842 = vxor.u32 %v828, 2147483648
  %v843 = vmul.f32 %v842, 1.442695
  %v844 = vpow.pop %v843
  %v845 = vadd.f32 %v844, 1.0
  %v846 = vrcp.pop %v845
  %v847 = vmul.f32 1.0, %v846
  %v848 = vmul.f32 %v840, %v730
  %v849 = vmul.f32 %v834, %v841
  %v850 = vadd.f32 %v848, %v849
  %v851 = vtanh.pop %v850
  %v852 = vmul.f32 %v847, %v851
  %v853 = vpack.c.bf16 %v852, %v852
  %s854 = sadd.s32 0, 2
  %s855 = smul.addr %s854, 4
  %s856 = scalar_lea.vmem [#allocation3], %s855
  %857 = vst [vmem:[%s856] sm:$0xf] %v853
  %s858 = scalar_lea.vmem [#allocation2], 96
  %v859 = vld [vmem:[%s858] sm:$0xff]
  %v860 = vld [vmem:[%s858 + $0x8] sm:$0xff]
  %v861 = vld [vmem:[%s858 + $0x10] sm:$0xff]
  %v862 = vld [vmem:[%s858 + $0x18] sm:$0xff]
  %863 = vmatprep.subr.bf16.mxu0 %v443
  %864 = vmatpush1.bf16.msra.mxu0 %v442
  %865 = vmatprep.subr.bf16.mxu0 %v447
  %866 = vmatpush1.bf16.msra.mxu0 %v446
  %867 = vmatprep.subr.bf16.mxu0 %v451
  %868 = vmatpush1.bf16.msra.mxu0 %v450
  %869 = vmatprep.subr.bf16.mxu0 %v455
  %870 = vmatpush1.bf16.msra.mxu0 %v454
  %871 = vmatprep.subr.bf16.mxu0 %v459
  %872 = vmatpush1.bf16.msra.mxu0 %v458
  %873 = vmatprep.subr.bf16.mxu0 %v463
  %874 = vmatpush1.bf16.msra.mxu0 %v462
  %875 = vmatprep.subr.bf16.mxu0 %v467
  %876 = vmatpush1.bf16.msra.mxu0 %v466
  %877 = vmatprep.subr.bf16.mxu0 %v471
  %878 = vmatpush1.bf16.msra.mxu0 %v470
  %879 = vmatprep.subr.bf16.mxu0 0
  %880 = vmatpush1.bf16.msra.mxu0 0
  %881 = vmatprep.subr.bf16.mxu0 0
  %882 = vmatpush1.bf16.msra.mxu0 0
  %883 = vmatprep.subr.bf16.mxu0 0
  %884 = vmatpush1.bf16.msra.mxu0 0
  %885 = vmatprep.subr.bf16.mxu0 0
  %886 = vmatpush1.bf16.msra.mxu0 0
  %887 = vmatprep.subr.bf16.mxu0 0
  %888 = vmatpush1.bf16.msra.mxu0 0
  %889 = vmatprep.subr.bf16.mxu0 0
  %890 = vmatpush1.bf16.msra.mxu0 0
  %891 = vmatprep.subr.bf16.mxu0 0
  %892 = vmatpush1.bf16.msra.mxu0 0
  %893 = vmatprep.subr.bf16.mxu0 0
  %894 = vmatpush1.bf16.msra.mxu0 0
  %895 = vmatprep.mubr.bf16.mxu0 0
  %896 = vmatmul.mubr.bf16.gmra.mrb[0].mxu0 %v853
  %v897 = vpop.f32.mrb[0].mxu0
  %v898 = vadd.f32 0.0, %v897
  %v899 = vpop.f32.mrb[0].mxu0
  %v900 = vadd.f32 0.0, %v899
  %v901 = vpop.f32.mrb[0].mxu0
  %v902 = vpop.f32.mrb[0].mxu0
  %903 = vdwg.mxu0
  %904 = vmatprep.subr.bf16.mxu0 %v445
  %905 = vmatpush1.bf16.msra.mxu0 %v444
  %906 = vmatprep.subr.bf16.mxu0 %v449
  %907 = vmatpush1.bf16.msra.mxu0 %v448
  %908 = vmatprep.subr.bf16.mxu0 %v453
  %909 = vmatpush1.bf16.msra.mxu0 %v452
  %910 = vmatprep.subr.bf16.mxu0 %v457
  %911 = vmatpush1.bf16.msra.mxu0 %v456
  %912 = vmatprep.subr.bf16.mxu0 %v461
  %913 = vmatpush1.bf16.msra.mxu0 %v460
  %914 = vmatprep.subr.bf16.mxu0 %v465
  %915 = vmatpush1.bf16.msra.mxu0 %v464
  %916 = vmatprep.subr.bf16.mxu0 %v469
  %917 = vmatpush1.bf16.msra.mxu0 %v468
  %918 = vmatprep.subr.bf16.mxu0 %v473
  %919 = vmatpush1.bf16.msra.mxu0 %v472
  %920 = vmatprep.subr.bf16.mxu0 0
  %921 = vmatpush1.bf16.msra.mxu0 0
  %922 = vmatprep.subr.bf16.mxu0 0
  %923 = vmatpush1.bf16.msra.mxu0 0
  %924 = vmatprep.subr.bf16.mxu0 0
  %925 = vmatpush1.bf16.msra.mxu0 0
  %926 = vmatprep.subr.bf16.mxu0 0
  %927 = vmatpush1.bf16.msra.mxu0 0
  %928 = vmatprep.subr.bf16.mxu0 0
  %929 = vmatpush1.bf16.msra.mxu0 0
  %930 = vmatprep.subr.bf16.mxu0 0
  %931 = vmatpush1.bf16.msra.mxu0 0
  %932 = vmatprep.subr.bf16.mxu0 0
  %933 = vmatpush1.bf16.msra.mxu0 0
  %934 = vmatprep.subr.bf16.mxu0 0
  %935 = vmatpush1.bf16.msra.mxu0 0
  %936 = vmatprep.mubr.bf16.mxu0 0
  %937 = vmatmul.mubr.bf16.gmra.mrb[0].mxu0 %v853
  %v938 = vpop.f32.mrb[0].mxu0
  %v939 = vadd.f32 0.0, %v938
  %v940 = vpop.f32.mrb[0].mxu0
  %v941 = vadd.f32 0.0, %v940
  %v942 = vpop.f32.mrb[0].mxu0
  %v943 = vpop.f32.mrb[0].mxu0
  %944 = vdwg.mxu0
  %v945 = vadd.f32 %v859, %v898
  %v946 = vadd.f32 %v860, %v900
  %v947 = vadd.f32 %v861, %v939
  %v948 = vadd.f32 %v862, %v941
  %v949 = vxor.u32 %v945, 2147483648
  %v950 = vmul.f32 %v949, 1.442695
  %v951 = vpow.pop %v950
  %v952 = vadd.f32 %v951, 1.0
  %v953 = vrcp.pop %v952
  %v954 = vmul.f32 1.0, %v953
  %v955 = vxor.u32 %v946, 2147483648
  %v956 = vmul.f32 %v955, 1.442695
  %v957 = vpow.pop %v956
  %v958 = vadd.f32 %v957, 1.0
  %v959 = vrcp.pop %v958
  %v960 = vmul.f32 1.0, %v959
  %v961 = vtanh.pop %v947
  %v962 = vxor.u32 %v948, 2147483648
  %v963 = vmul.f32 %v962, 1.442695
  %v964 = vpow.pop %v963
  %v965 = vadd.f32 %v964, 1.0
  %v966 = vrcp.pop %v965
  %v967 = vmul.f32 1.0, %v966
  %v968 = vmul.f32 %v960, %v850
  %v969 = vmul.f32 %v954, %v961
  %v970 = vadd.f32 %v968, %v969
  %v971 = vtanh.pop %v970
  %v972 = vmul.f32 %v967, %v971
  %v973 = vpack.c.bf16 %v972, %v972
  %s974 = sadd.s32 0, 3
  %s975 = smul.addr %s974, 4
  %s976 = scalar_lea.vmem [#allocation3], %s975
  %977 = vst [vmem:[%s976] sm:$0xf] %v973
  %s978 = scalar_lea.vmem [#allocation2], 128
  %v979 = vld [vmem:[%s978] sm:$0xff]
  %v980 = vld [vmem:[%s978 + $0x8] sm:$0xff]
  %v981 = vld [vmem:[%s978 + $0x10] sm:$0xff]
  %v982 = vld [vmem:[%s978 + $0x18] sm:$0xff]
  %983 = vmatprep.subr.bf16.mxu0 %v443
  %984 = vmatpush1.bf16.msra.mxu0 %v442
  %985 = vmatprep.subr.bf16.mxu0 %v447
  %986 = vmatpush1.bf16.msra.mxu0 %v446
  %987 = vmatprep.subr.bf16.mxu0 %v451
  %988 = vmatpush1.bf16.msra.mxu0 %v450
  %989 = vmatprep.subr.bf16.mxu0 %v455
  %990 = vmatpush1.bf16.msra.mxu0 %v454
  %991 = vmatprep.subr.bf16.mxu0 %v459
  %992 = vmatpush1.bf16.msra.mxu0 %v458
  %993 = vmatprep.subr.bf16.mxu0 %v463
  %994 = vmatpush1.bf16.msra.mxu0 %v462
  %995 = vmatprep.subr.bf16.mxu0 %v467
  %996 = vmatpush1.bf16.msra.mxu0 %v466
  %997 = vmatprep.subr.bf16.mxu0 %v471
  %998 = vmatpush1.bf16.msra.mxu0 %v470
  %999 = vmatprep.subr.bf16.mxu0 0
  %1000 = vmatpush1.bf16.msra.mxu0 0
  %1001 = vmatprep.subr.bf16.mxu0 0
  %1002 = vmatpush1.bf16.msra.mxu0 0
  %1003 = vmatprep.subr.bf16.mxu0 0
  %1004 = vmatpush1.bf16.msra.mxu0 0
  %1005 = vmatprep.subr.bf16.mxu0 0
  %1006 = vmatpush1.bf16.msra.mxu0 0
  %1007 = vmatprep.subr.bf16.mxu0 0
  %1008 = vmatpush1.bf16.msra.mxu0 0
  %1009 = vmatprep.subr.bf16.mxu0 0
  %1010 = vmatpush1.bf16.msra.mxu0 0
  %1011 = vmatprep.subr.bf16.mxu0 0
  %1012 = vmatpush1.bf16.msra.mxu0 0
  %1013 = vmatprep.subr.bf16.mxu0 0
  %1014 = vmatpush1.bf16.msra.mxu0 0
  %1015 = vmatprep.mubr.bf16.mxu0 0
  %1016 = vmatmul.mubr.bf16.gmra.mrb[0].mxu0 %v973
  %v1017 = vpop.f32.mrb[0].mxu0
  %v1018 = vadd.f32 0.0, %v1017
  %v1019 = vpop.f32.mrb[0].mxu0
  %v1020 = vadd.f32 0.0, %v1019
  %v1021 = vpop.f32.mrb[0].mxu0
  %v1022 = vpop.f32.mrb[0].mxu0
  %1023 = vdwg.mxu0
  %1024 = vmatprep.subr.bf16.mxu0 %v445
  %1025 = vmatpush1.bf16.msra.mxu0 %v444
  %1026 = vmatprep.subr.bf16.mxu0 %v449
  %1027 = vmatpush1.bf16.msra.mxu0 %v448
  %1028 = vmatprep.subr.bf16.mxu0 %v453
  %1029 = vmatpush1.bf16.msra.mxu0 %v452
  %1030 = vmatprep.subr.bf16.mxu0 %v457
  %1031 = vmatpush1.bf16.msra.mxu0 %v456
  %1032 = vmatprep.subr.bf16.mxu0 %v461
  %1033 = vmatpush1.bf16.msra.mxu0 %v460
  %1034 = vmatprep.subr.bf16.mxu0 %v465
  %1035 = vmatpush1.bf16.msra.mxu0 %v464
  %1036 = vmatprep.subr.bf16.mxu0 %v469
  %1037 = vmatpush1.bf16.msra.mxu0 %v468
  %1038 = vmatprep.subr.bf16.mxu0 %v473
  %1039 = vmatpush1.bf16.msra.mxu0 %v472
  %1040 = vmatprep.subr.bf16.mxu0 0
  %1041 = vmatpush1.bf16.msra.mxu0 0
  %1042 = vmatprep.subr.bf16.mxu0 0
  %1043 = vmatpush1.bf16.msra.mxu0 0
  %1044 = vmatprep.subr.bf16.mxu0 0
  %1045 = vmatpush1.bf16.msra.mxu0 0
  %1046 = vmatprep.subr.bf16.mxu0 0
  %1047 = vmatpush1.bf16.msra.mxu0 0
  %1048 = vmatprep.subr.bf16.mxu0 0
  %1049 = vmatpush1.bf16.msra.mxu0 0
  %1050 = vmatprep.subr.bf16.mxu0 0
  %1051 = vmatpush1.bf16.msra.mxu0 0
  %1052 = vmatprep.subr.bf16.mxu0 0
  %1053 = vmatpush1.bf16.msra.mxu0 0
  %1054 = vmatprep.subr.bf16.mxu0 0
  %1055 = vmatpush1.bf16.msra.mxu0 0
  %1056 = vmatprep.mubr.bf16.mxu0 0
  %1057 = vmatmul.mubr.bf16.gmra.mrb[0].mxu0 %v973
  %v1058 = vpop.f32.mrb[0].mxu0
  %v1059 = vadd.f32 0.0, %v1058
  %v1060 = vpop.f32.mrb[0].mxu0
  %v1061 = vadd.f32 0.0, %v1060
  %v1062 = vpop.f32.mrb[0].mxu0
  %v1063 = vpop.f32.mrb[0].mxu0
  %1064 = vdwg.mxu0
  %v1065 = vadd.f32 %v979, %v1018
  %v1066 = vadd.f32 %v980, %v1020
  %v1067 = vadd.f32 %v981, %v1059
  %v1068 = vadd.f32 %v982, %v1061
  %v1069 = vxor.u32 %v1065, 2147483648
  %v1070 = vmul.f32 %v1069, 1.442695
  %v1071 = vpow.pop %v1070
  %v1072 = vadd.f32 %v1071, 1.0
  %v1073 = vrcp.pop %v1072
  %v1074 = vmul.f32 1.0, %v1073
  %v1075 = vxor.u32 %v1066, 2147483648
  %v1076 = vmul.f32 %v1075, 1.442695
  %v1077 = vpow.pop %v1076
  %v1078 = vadd.f32 %v1077, 1.0
  %v1079 = vrcp.pop %v1078
  %v1080 = vmul.f32 1.0, %v1079
  %v1081 = vtanh.pop %v1067
  %v1082 = vxor.u32 %v1068, 2147483648
  %v1083 = vmul.f32 %v1082, 1.442695
  %v1084 = vpow.pop %v1083
  %v1085 = vadd.f32 %v1084, 1.0
  %v1086 = vrcp.pop %v1085
  %v1087 = vmul.f32 1.0, %v1086
  %v1088 = vmul.f32 %v1080, %v970
  %v1089 = vmul.f32 %v1074, %v1081
  %v1090 = vadd.f32 %v1088, %v1089
  %v1091 = vtanh.pop %v1090
  %v1092 = vmul.f32 %v1087, %v1091
  %v1093 = vpack.c.bf16 %v1092, %v1092
  %s1094 = sadd.s32 0, 4
  %s1095 = smul.addr %s1094, 4
  %s1096 = scalar_lea.vmem [#allocation3], %s1095
  %1097 = vst [vmem:[%s1096] sm:$0xf] %v1093
  %s1098 = scalar_lea.vmem [#allocation2], 160
  %v1099 = vld [vmem:[%s1098] sm:$0xff]
  %v1100 = vld [vmem:[%s1098 + $0x8] sm:$0xff]
  %v1101 = vld [vmem:[%s1098 + $0x10] sm:$0xff]
  %v1102 = vld [vmem:[%s1098 + $0x18] sm:$0xff]
  %1103 = vmatprep.subr.bf16.mxu0 %v443
  %1104 = vmatpush1.bf16.msra.mxu0 %v442
  %1105 = vmatprep.subr.bf16.mxu0 %v447
  %1106 = vmatpush1.bf16.msra.mxu0 %v446
  %1107 = vmatprep.subr.bf16.mxu0 %v451
  %1108 = vmatpush1.bf16.msra.mxu0 %v450
  %1109 = vmatprep.subr.bf16.mxu0 %v455
  %1110 = vmatpush1.bf16.msra.mxu0 %v454
  %1111 = vmatprep.subr.bf16.mxu0 %v459
  %1112 = vmatpush1.bf16.msra.mxu0 %v458
  %1113 = vmatprep.subr.bf16.mxu0 %v463
  %1114 = vmatpush1.bf16.msra.mxu0 %v462
  %1115 = vmatprep.subr.bf16.mxu0 %v467
  %1116 = vmatpush1.bf16.msra.mxu0 %v466
  %1117 = vmatprep.subr.bf16.mxu0 %v471
  %1118 = vmatpush1.bf16.msra.mxu0 %v470
  %1119 = vmatprep.subr.bf16.mxu0 0
  %1120 = vmatpush1.bf16.msra.mxu0 0
  %1121 = vmatprep.subr.bf16.mxu0 0
  %1122 = vmatpush1.bf16.msra.mxu0 0
  %1123 = vmatprep.subr.bf16.mxu0 0
  %1124 = vmatpush1.bf16.msra.mxu0 0
  %1125 = vmatprep.subr.bf16.mxu0 0
  %1126 = vmatpush1.bf16.msra.mxu0 0
  %1127 = vmatprep.subr.bf16.mxu0 0
  %1128 = vmatpush1.bf16.msra.mxu0 0
  %1129 = vmatprep.subr.bf16.mxu0 0
  %1130 = vmatpush1.bf16.msra.mxu0 0
  %1131 = vmatprep.subr.bf16.mxu0 0
  %1132 = vmatpush1.bf16.msra.mxu0 0
  %1133 = vmatprep.subr.bf16.mxu0 0
  %1134 = vmatpush1.bf16.msra.mxu0 0
  %1135 = vmatprep.mubr.bf16.mxu0 0
  %1136 = vmatmul.mubr.bf16.gmra.mrb[0].mxu0 %v1093
  %v1137 = vpop.f32.mrb[0].mxu0
  %v1138 = vadd.f32 0.0, %v1137
  %v1139 = vpop.f32.mrb[0].mxu0
  %v1140 = vadd.f32 0.0, %v1139
  %v1141 = vpop.f32.mrb[0].mxu0
  %v1142 = vpop.f32.mrb[0].mxu0
  %1143 = vdwg.mxu0
  %1144 = vmatprep.subr.bf16.mxu0 %v445
  %1145 = vmatpush1.bf16.msra.mxu0 %v444
  %1146 = vmatprep.subr.bf16.mxu0 %v449
  %1147 = vmatpush1.bf16.msra.mxu0 %v448
  %1148 = vmatprep.subr.bf16.mxu0 %v453
  %1149 = vmatpush1.bf16.msra.mxu0 %v452
  %1150 = vmatprep.subr.bf16.mxu0 %v457
  %1151 = vmatpush1.bf16.msra.mxu0 %v456
  %1152 = vmatprep.subr.bf16.mxu0 %v461
  %1153 = vmatpush1.bf16.msra.mxu0 %v460
  %1154 = vmatprep.subr.bf16.mxu0 %v465
  %1155 = vmatpush1.bf16.msra.mxu0 %v464
  %1156 = vmatprep.subr.bf16.mxu0 %v469
  %1157 = vmatpush1.bf16.msra.mxu0 %v468
  %1158 = vmatprep.subr.bf16.mxu0 %v473
  %1159 = vmatpush1.bf16.msra.mxu0 %v472
  %1160 = vmatprep.subr.bf16.mxu0 0
  %1161 = vmatpush1.bf16.msra.mxu0 0
  %1162 = vmatprep.subr.bf16.mxu0 0
  %1163 = vmatpush1.bf16.msra.mxu0 0
  %1164 = vmatprep.subr.bf16.mxu0 0
  %1165 = vmatpush1.bf16.msra.mxu0 0
  %1166 = vmatprep.subr.bf16.mxu0 0
  %1167 = vmatpush1.bf16.msra.mxu0 0
  %1168 = vmatprep.subr.bf16.mxu0 0
  %1169 = vmatpush1.bf16.msra.mxu0 0
  %1170 = vmatprep.subr.bf16.mxu0 0
  %1171 = vmatpush1.bf16.msra.mxu0 0
  %1172 = vmatprep.subr.bf16.mxu0 0
  %1173 = vmatpush1.bf16.msra.mxu0 0
  %1174 = vmatprep.subr.bf16.mxu0 0
  %1175 = vmatpush1.bf16.msra.mxu0 0
  %1176 = vmatprep.mubr.bf16.mxu0 0
  %1177 = vmatmul.mubr.bf16.gmra.mrb[0].mxu0 %v1093
  %v1178 = vpop.f32.mrb[0].mxu0
  %v1179 = vadd.f32 0.0, %v1178
  %v1180 = vpop.f32.mrb[0].mxu0
  %v1181 = vadd.f32 0.0, %v1180
  %v1182 = vpop.f32.mrb[0].mxu0
  %v1183 = vpop.f32.mrb[0].mxu0
  %1184 = vdwg.mxu0
  %v1185 = vadd.f32 %v1099, %v1138
  %v1186 = vadd.f32 %v1100, %v1140
  %v1187 = vadd.f32 %v1101, %v1179
  %v1188 = vadd.f32 %v1102, %v1181
  %v1189 = vxor.u32 %v1185, 2147483648
  %v1190 = vmul.f32 %v1189, 1.442695
  %v1191 = vpow.pop %v1190
  %v1192 = vadd.f32 %v1191, 1.0
  %v1193 = vrcp.pop %v1192
  %v1194 = vmul.f32 1.0, %v1193
  %v1195 = vxor.u32 %v1186, 2147483648
  %v1196 = vmul.f32 %v1195, 1.442695
  %v1197 = vpow.pop %v1196
  %v1198 = vadd.f32 %v1197, 1.0
  %v1199 = vrcp.pop %v1198
  %v1200 = vmul.f32 1.0, %v1199
  %v1201 = vtanh.pop %v1187
  %v1202 = vxor.u32 %v1188, 2147483648
  %v1203 = vmul.f32 %v1202, 1.442695
  %v1204 = vpow.pop %v1203
  %v1205 = vadd.f32 %v1204, 1.0
  %v1206 = vrcp.pop %v1205
  %v1207 = vmul.f32 1.0, %v1206
  %v1208 = vmul.f32 %v1200, %v1090
  %v1209 = vmul.f32 %v1194, %v1201
  %v1210 = vadd.f32 %v1208, %v1209
  %v1211 = vtanh.pop %v1210
  %v1212 = vmul.f32 %v1207, %v1211
  %v1213 = vpack.c.bf16 %v1212, %v1212
  %s1214 = sadd.s32 0, 5
  %s1215 = smul.addr %s1214, 4
  %s1216 = scalar_lea.vmem [#allocation3], %s1215
  %1217 = vst [vmem:[%s1216] sm:$0xf] %v1213
  %s1218 = scalar_lea.vmem [#allocation2], 192
  %v1219 = vld [vmem:[%s1218] sm:$0xff]
  %v1220 = vld [vmem:[%s1218 + $0x8] sm:$0xff]
  %v1221 = vld [vmem:[%s1218 + $0x10] sm:$0xff]
  %v1222 = vld [vmem:[%s1218 + $0x18] sm:$0xff]
  %1223 = vmatprep.subr.bf16.mxu0 %v443
  %1224 = vmatpush1.bf16.msra.mxu0 %v442
  %1225 = vmatprep.subr.bf16.mxu0 %v447
  %1226 = vmatpush1.bf16.msra.mxu0 %v446
  %1227 = vmatprep.subr.bf16.mxu0 %v451
  %1228 = vmatpush1.bf16.msra.mxu0 %v450
  %1229 = vmatprep.subr.bf16.mxu0 %v455
  %1230 = vmatpush1.bf16.msra.mxu0 %v454
  %1231 = vmatprep.subr.bf16.mxu0 %v459
  %1232 = vmatpush1.bf16.msra.mxu0 %v458
  %1233 = vmatprep.subr.bf16.mxu0 %v463
  %1234 = vmatpush1.bf16.msra.mxu0 %v462
  %1235 = vmatprep.subr.bf16.mxu0 %v467
  %1236 = vmatpush1.bf16.msra.mxu0 %v466
  %1237 = vmatprep.subr.bf16.mxu0 %v471
  %1238 = vmatpush1.bf16.msra.mxu0 %v470
  %1239 = vmatprep.subr.bf16.mxu0 0
  %1240 = vmatpush1.bf16.msra.mxu0 0
  %1241 = vmatprep.subr.bf16.mxu0 0
  %1242 = vmatpush1.bf16.msra.mxu0 0
  %1243 = vmatprep.subr.bf16.mxu0 0
  %1244 = vmatpush1.bf16.msra.mxu0 0
  %1245 = vmatprep.subr.bf16.mxu0 0
  %1246 = vmatpush1.bf16.msra.mxu0 0
  %1247 = vmatprep.subr.bf16.mxu0 0
  %1248 = vmatpush1.bf16.msra.mxu0 0
  %1249 = vmatprep.subr.bf16.mxu0 0
  %1250 = vmatpush1.bf16.msra.mxu0 0
  %1251 = vmatprep.subr.bf16.mxu0 0
  %1252 = vmatpush1.bf16.msra.mxu0 0
  %1253 = vmatprep.subr.bf16.mxu0 0
  %1254 = vmatpush1.bf16.msra.mxu0 0
  %1255 = vmatprep.mubr.bf16.mxu0 0
  %1256 = vmatmul.mubr.bf16.gmra.mrb[0].mxu0 %v1213
  %v1257 = vpop.f32.mrb[0].mxu0
  %v1258 = vadd.f32 0.0, %v1257
  %v1259 = vpop.f32.mrb[0].mxu0
  %v1260 = vadd.f32 0.0, %v1259
  %v1261 = vpop.f32.mrb[0].mxu0
  %v1262 = vpop.f32.mrb[0].mxu0
  %1263 = vdwg.mxu0
  %1264 = vmatprep.subr.bf16.mxu0 %v445
  %1265 = vmatpush1.bf16.msra.mxu0 %v444
  %1266 = vmatprep.subr.bf16.mxu0 %v449
  %1267 = vmatpush1.bf16.msra.mxu0 %v448
  %1268 = vmatprep.subr.bf16.mxu0 %v453
  %1269 = vmatpush1.bf16.msra.mxu0 %v452
  %1270 = vmatprep.subr.bf16.mxu0 %v457
  %1271 = vmatpush1.bf16.msra.mxu0 %v456
  %1272 = vmatprep.subr.bf16.mxu0 %v461
  %1273 = vmatpush1.bf16.msra.mxu0 %v460
  %1274 = vmatprep.subr.bf16.mxu0 %v465
  %1275 = vmatpush1.bf16.msra.mxu0 %v464
  %1276 = vmatprep.subr.bf16.mxu0 %v469
  %1277 = vmatpush1.bf16.msra.mxu0 %v468
  %1278 = vmatprep.subr.bf16.mxu0 %v473
  %1279 = vmatpush1.bf16.msra.mxu0 %v472
  %1280 = vmatprep.subr.bf16.mxu0 0
  %1281 = vmatpush1.bf16.msra.mxu0 0
  %1282 = vmatprep.subr.bf16.mxu0 0
  %1283 = vmatpush1.bf16.msra.mxu0 0
  %1284 = vmatprep.subr.bf16.mxu0 0
  %1285 = vmatpush1.bf16.msra.mxu0 0
  %1286 = vmatprep.subr.bf16.mxu0 0
  %1287 = vmatpush1.bf16.msra.mxu0 0
  %1288 = vmatprep.subr.bf16.mxu0 0
  %1289 = vmatpush1.bf16.msra.mxu0 0
  %1290 = vmatprep.subr.bf16.mxu0 0
  %1291 = vmatpush1.bf16.msra.mxu0 0
  %1292 = vmatprep.subr.bf16.mxu0 0
  %1293 = vmatpush1.bf16.msra.mxu0 0
  %1294 = vmatprep.subr.bf16.mxu0 0
  %1295 = vmatpush1.bf16.msra.mxu0 0
  %1296 = vmatprep.mubr.bf16.mxu0 0
  %1297 = vmatmul.mubr.bf16.gmra.mrb[0].mxu0 %v1213
  %v1298 = vpop.f32.mrb[0].mxu0
  %v1299 = vadd.f32 0.0, %v1298
  %v1300 = vpop.f32.mrb[0].mxu0
  %v1301 = vadd.f32 0.0, %v1300
  %v1302 = vpop.f32.mrb[0].mxu0
  %v1303 = vpop.f32.mrb[0].mxu0
  %1304 = vdwg.mxu0
  %v1305 = vadd.f32 %v1219, %v1258
  %v1306 = vadd.f32 %v1220, %v1260
  %v1307 = vadd.f32 %v1221, %v1299
  %v1308 = vadd.f32 %v1222, %v1301
  %v1309 = vxor.u32 %v1305, 2147483648
  %v1310 = vmul.f32 %v1309, 1.442695
  %v1311 = vpow.pop %v1310
  %v1312 = vadd.f32 %v1311, 1.0
  %v1313 = vrcp.pop %v1312
  %v1314 = vmul.f32 1.0, %v1313
  %v1315 = vxor.u32 %v1306, 2147483648
  %v1316 = vmul.f32 %v1315, 1.442695
  %v1317 = vpow.pop %v1316
  %v1318 = vadd.f32 %v1317, 1.0
  %v1319 = vrcp.pop %v1318
  %v1320 = vmul.f32 1.0, %v1319
  %v1321 = vtanh.pop %v1307
  %v1322 = vxor.u32 %v1308, 2147483648
  %v1323 = vmul.f32 %v1322, 1.442695
  %v1324 = vpow.pop %v1323
  %v1325 = vadd.f32 %v1324, 1.0
  %v1326 = vrcp.pop %v1325
  %v1327 = vmul.f32 1.0, %v1326
  %v1328 = vmul.f32 %v1320, %v1210
  %v1329 = vmul.f32 %v1314, %v1321
  %v1330 = vadd.f32 %v1328, %v1329
  %v1331 = vtanh.pop %v1330
  %v1332 = vmul.f32 %v1327, %v1331
  %v1333 = vpack.c.bf16 %v1332, %v1332
  %s1334 = sadd.s32 0, 6
  %s1335 = smul.addr %s1334, 4
  %s1336 = scalar_lea.vmem [#allocation3], %s1335
  %1337 = vst [vmem:[%s1336] sm:$0xf] %v1333
  %s1338 = scalar_lea.vmem [#allocation2], 224
  %v1339 = vld [vmem:[%s1338] sm:$0xff]
  %v1340 = vld [vmem:[%s1338 + $0x8] sm:$0xff]
  %v1341 = vld [vmem:[%s1338 + $0x10] sm:$0xff]
  %v1342 = vld [vmem:[%s1338 + $0x18] sm:$0xff]
  %1343 = vmatprep.subr.bf16.mxu0 %v443
  %1344 = vmatpush1.bf16.msra.mxu0 %v442
  %1345 = vmatprep.subr.bf16.mxu0 %v447
  %1346 = vmatpush1.bf16.msra.mxu0 %v446
  %1347 = vmatprep.subr.bf16.mxu0 %v451
  %1348 = vmatpush1.bf16.msra.mxu0 %v450
  %1349 = vmatprep.subr.bf16.mxu0 %v455
  %1350 = vmatpush1.bf16.msra.mxu0 %v454
  %1351 = vmatprep.subr.bf16.mxu0 %v459
  %1352 = vmatpush1.bf16.msra.mxu0 %v458
  %1353 = vmatprep.subr.bf16.mxu0 %v463
  %1354 = vmatpush1.bf16.msra.mxu0 %v462
  %1355 = vmatprep.subr.bf16.mxu0 %v467
  %1356 = vmatpush1.bf16.msra.mxu0 %v466
  %1357 = vmatprep.subr.bf16.mxu0 %v471
  %1358 = vmatpush1.bf16.msra.mxu0 %v470
  %1359 = vmatprep.subr.bf16.mxu0 0
  %1360 = vmatpush1.bf16.msra.mxu0 0
  %1361 = vmatprep.subr.bf16.mxu0 0
  %1362 = vmatpush1.bf16.msra.mxu0 0
  %1363 = vmatprep.subr.bf16.mxu0 0
  %1364 = vmatpush1.bf16.msra.mxu0 0
  %1365 = vmatprep.subr.bf16.mxu0 0
  %1366 = vmatpush1.bf16.msra.mxu0 0
  %1367 = vmatprep.subr.bf16.mxu0 0
  %1368 = vmatpush1.bf16.msra.mxu0 0
  %1369 = vmatprep.subr.bf16.mxu0 0
  %1370 = vmatpush1.bf16.msra.mxu0 0
  %1371 = vmatprep.subr.bf16.mxu0 0
  %1372 = vmatpush1.bf16.msra.mxu0 0
  %1373 = vmatprep.subr.bf16.mxu0 0
  %1374 = vmatpush1.bf16.msra.mxu0 0
  %1375 = vmatprep.mubr.bf16.mxu0 0
  %1376 = vmatmul.mubr.bf16.gmra.mrb[0].mxu0 %v1333
  %v1377 = vpop.f32.mrb[0].mxu0
  %v1378 = vadd.f32 0.0, %v1377
  %v1379 = vpop.f32.mrb[0].mxu0
  %v1380 = vadd.f32 0.0, %v1379
  %v1381 = vpop.f32.mrb[0].mxu0
  %v1382 = vpop.f32.mrb[0].mxu0
  %1383 = vdwg.mxu0
  %1384 = vmatprep.subr.bf16.mxu0 %v445
  %1385 = vmatpush1.bf16.msra.mxu0 %v444
  %1386 = vmatprep.subr.bf16.mxu0 %v449
  %1387 = vmatpush1.bf16.msra.mxu0 %v448
  %1388 = vmatprep.subr.bf16.mxu0 %v453
  %1389 = vmatpush1.bf16.msra.mxu0 %v452
  %1390 = vmatprep.subr.bf16.mxu0 %v457
  %1391 = vmatpush1.bf16.msra.mxu0 %v456
  %1392 = vmatprep.subr.bf16.mxu0 %v461
  %1393 = vmatpush1.bf16.msra.mxu0 %v460
  %1394 = vmatprep.subr.bf16.mxu0 %v465
  %1395 = vmatpush1.bf16.msra.mxu0 %v464
  %1396 = vmatprep.subr.bf16.mxu0 %v469
  %1397 = vmatpush1.bf16.msra.mxu0 %v468
  %1398 = vmatprep.subr.bf16.mxu0 %v473
  %1399 = vmatpush1.bf16.msra.mxu0 %v472
  %1400 = vmatprep.subr.bf16.mxu0 0
  %1401 = vmatpush1.bf16.msra.mxu0 0
  %1402 = vmatprep.subr.bf16.mxu0 0
  %1403 = vmatpush1.bf16.msra.mxu0 0
  %1404 = vmatprep.subr.bf16.mxu0 0
  %1405 = vmatpush1.bf16.msra.mxu0 0
  %1406 = vmatprep.subr.bf16.mxu0 0
  %1407 = vmatpush1.bf16.msra.mxu0 0
  %1408 = vmatprep.subr.bf16.mxu0 0
  %1409 = vmatpush1.bf16.msra.mxu0 0
  %1410 = vmatprep.subr.bf16.mxu0 0
  %1411 = vmatpush1.bf16.msra.mxu0 0
  %1412 = vmatprep.subr.bf16.mxu0 0
  %1413 = vmatpush1.bf16.msra.mxu0 0
  %1414 = vmatprep.subr.bf16.mxu0 0
  %1415 = vmatpush1.bf16.msra.mxu0 0
  %1416 = vmatprep.mubr.bf16.mxu0 0
  %1417 = vmatmul.mubr.bf16.gmra.mrb[0].mxu0 %v1333
  %v1418 = vpop.f32.mrb[0].mxu0
  %v1419 = vadd.f32 0.0, %v1418
  %v1420 = vpop.f32.mrb[0].mxu0
  %v1421 = vadd.f32 0.0, %v1420
  %v1422 = vpop.f32.mrb[0].mxu0
  %v1423 = vpop.f32.mrb[0].mxu0
  %1424 = vdwg.mxu0
  %v1425 = vadd.f32 %v1339, %v1378
  %v1426 = vadd.f32 %v1340, %v1380
  %v1427 = vadd.f32 %v1341, %v1419
  %v1428 = vadd.f32 %v1342, %v1421
  %v1429 = vxor.u32 %v1425, 2147483648
  %v1430 = vmul.f32 %v1429, 1.442695
  %v1431 = vpow.pop %v1430
  %v1432 = vadd.f32 %v1431, 1.0
  %v1433 = vrcp.pop %v1432
  %v1434 = vmul.f32 1.0, %v1433
  %v1435 = vxor.u32 %v1426, 2147483648
  %v1436 = vmul.f32 %v1435, 1.442695
  %v1437 = vpow.pop %v1436
  %v1438 = vadd.f32 %v1437, 1.0
  %v1439 = vrcp.pop %v1438
  %v1440 = vmul.f32 1.0, %v1439
  %v1441 = vtanh.pop %v1427
  %v1442 = vxor.u32 %v1428, 2147483648
  %v1443 = vmul.f32 %v1442, 1.442695
  %v1444 = vpow.pop %v1443
  %v1445 = vadd.f32 %v1444, 1.0
  %v1446 = vrcp.pop %v1445
  %v1447 = vmul.f32 1.0, %v1446
  %v1448 = vmul.f32 %v1440, %v1330
  %v1449 = vmul.f32 %v1434, %v1441
  %v1450 = vadd.f32 %v1448, %v1449
  %v1451 = vtanh.pop %v1450
  %v1452 = vmul.f32 %v1447, %v1451
  %v1453 = vpack.c.bf16 %v1452, %v1452
  %s1454 = sadd.s32 0, 7
  %s1455 = smul.addr %s1454, 4
  %s1456 = scalar_lea.vmem [#allocation3], %s1455
  %1457 = vst [vmem:[%s1456] sm:$0xf] %v1453
  %1458 = vst [vmem:[%s12] sm:$0xff] %v1452
  %1459 = vst [vmem:[%s13] sm:$0xff] %v1450
  %v1460 = vld [vmem:[%s7] sm:$0xff]
  %v1461 = vld [vmem:[%s7 + $0x8] sm:$0xff]
  %v1462 = vld [vmem:[%s7 + $0x10] sm:$0xff]
  %v1463 = vld [vmem:[%s7 + $0x18] sm:$0xff]
  %v1464 = vld [vmem:[%s7 + $0x20] sm:$0xff]
  %v1465 = vld [vmem:[%s7 + $0x28] sm:$0xff]
  %v1466 = vld [vmem:[%s7 + $0x30] sm:$0xff]
  %v1467 = vld [vmem:[%s7 + $0x38] sm:$0xff]
  %v1468 = vld [vmem:[%s7 + $0x40] sm:$0xff]
  %v1469 = vld [vmem:[%s7 + $0x48] sm:$0xff]
  %v1470 = vld [vmem:[%s7 + $0x50] sm:$0xff]
  %v1471 = vld [vmem:[%s7 + $0x58] sm:$0xff]
  %v1472 = vld [vmem:[%s7 + $0x60] sm:$0xff]
  %v1473 = vld [vmem:[%s7 + $0x68] sm:$0xff]
  %v1474 = vld [vmem:[%s7 + $0x70] sm:$0xff]
  %v1475 = vld [vmem:[%s7 + $0x78] sm:$0xff]
  %v1476 = vld [vmem:[%s7 + $0x80] sm:$0xff]
  %v1477 = vld [vmem:[%s7 + $0x88] sm:$0xff]
  %v1478 = vld [vmem:[%s7 + $0x90] sm:$0xff]
  %v1479 = vld [vmem:[%s7 + $0x98] sm:$0xff]
  %v1480 = vld [vmem:[%s7 + $0xa0] sm:$0xff]
  %v1481 = vld [vmem:[%s7 + $0xa8] sm:$0xff]
  %v1482 = vld [vmem:[%s7 + $0xb0] sm:$0xff]
  %v1483 = vld [vmem:[%s7 + $0xb8] sm:$0xff]
  %v1484 = vld [vmem:[%s7 + $0xc0] sm:$0xff]
  %v1485 = vld [vmem:[%s7 + $0xc8] sm:$0xff]
  %v1486 = vld [vmem:[%s7 + $0xd0] sm:$0xff]
  %v1487 = vld [vmem:[%s7 + $0xd8] sm:$0xff]
  %v1488 = vld [vmem:[%s7 + $0xe0] sm:$0xff]
  %v1489 = vld [vmem:[%s7 + $0xe8] sm:$0xff]
  %v1490 = vld [vmem:[%s7 + $0xf0] sm:$0xff]
  %v1491 = vld [vmem:[%s7 + $0xf8] sm:$0xff]
  %v1492 = vld [vmem:[%s8] sm:$0xf]
  %s1493 = scalar_lea.vmem %s1, 8
  %v1494 = vld [vmem:[%s1493] sm:$0xff]
  %s1495 = scalar_lea.vmem %s2, 8
  %v1496 = vld [vmem:[%s1495] sm:$0xff]
  %v1497 = vld [vmem:[#allocation3] sm:$0xf]
  %v1498 = vld [vmem:[#allocation3 + $0x4] sm:$0xf]
  %v1499 = vld [vmem:[#allocation3 + $0x8] sm:$0xf]
  %v1500 = vld [vmem:[#allocation3 + $0xc] sm:$0xf]
  %v1501 = vld [vmem:[#allocation3 + $0x10] sm:$0xf]
  %v1502 = vld [vmem:[#allocation3 + $0x14] sm:$0xf]
  %v1503 = vld [vmem:[#allocation3 + $0x18] sm:$0xf]
  %v1504 = vld [vmem:[#allocation3 + $0x1c] sm:$0xf]
  %v1505 = vld [vmem:[%s6] sm:$0xff]
  %v1506 = vld [vmem:[%s6 + $0x8] sm:$0xff]
  %v1507 = vld [vmem:[%s6 + $0x10] sm:$0xff]
  %v1508 = vld [vmem:[%s6 + $0x18] sm:$0xff]
  %v1509 = vld [vmem:[%s6 + $0x20] sm:$0xff]
  %v1510 = vld [vmem:[%s6 + $0x28] sm:$0xff]
  %v1511 = vld [vmem:[%s6 + $0x30] sm:$0xff]
  %v1512 = vld [vmem:[%s6 + $0x38] sm:$0xff]
  %v1513 = vld [vmem:[%s6 + $0x40] sm:$0xff]
  %v1514 = vld [vmem:[%s6 + $0x48] sm:$0xff]
  %v1515 = vld [vmem:[%s6 + $0x50] sm:$0xff]
  %v1516 = vld [vmem:[%s6 + $0x58] sm:$0xff]
  %v1517 = vld [vmem:[%s6 + $0x60] sm:$0xff]
  %v1518 = vld [vmem:[%s6 + $0x68] sm:$0xff]
  %v1519 = vld [vmem:[%s6 + $0x70] sm:$0xff]
  %v1520 = vld [vmem:[%s6 + $0x78] sm:$0xff]
  %v1521 = vld [vmem:[%s6 + $0x80] sm:$0xff]
  %v1522 = vld [vmem:[%s6 + $0x88] sm:$0xff]
  %v1523 = vld [vmem:[%s6 + $0x90] sm:$0xff]
  %v1524 = vld [vmem:[%s6 + $0x98] sm:$0xff]
  %v1525 = vld [vmem:[%s6 + $0xa0] sm:$0xff]
  %v1526 = vld [vmem:[%s6 + $0xa8] sm:$0xff]
  %v1527 = vld [vmem:[%s6 + $0xb0] sm:$0xff]
  %v1528 = vld [vmem:[%s6 + $0xb8] sm:$0xff]
  %v1529 = vld [vmem:[%s6 + $0xc0] sm:$0xff]
  %v1530 = vld [vmem:[%s6 + $0xc8] sm:$0xff]
  %v1531 = vld [vmem:[%s6 + $0xd0] sm:$0xff]
  %v1532 = vld [vmem:[%s6 + $0xd8] sm:$0xff]
  %v1533 = vld [vmem:[%s6 + $0xe0] sm:$0xff]
  %v1534 = vld [vmem:[%s6 + $0xe8] sm:$0xff]
  %v1535 = vld [vmem:[%s6 + $0xf0] sm:$0xff]
  %v1536 = vld [vmem:[%s6 + $0xf8] sm:$0xff]
  %v1538 = vlaneseq
  %v1539 = vshrl.u32 %v1538, 7
  %v1540 = vsub.s32 0, %v1539
  %v1541 = vrot.slane %v1492, %v1540
  %v1542 = vlaneseq
  %v1543 = vshrl.u32 %v1542, 7
  %v1544 = vsub.s32 1, %v1543
  %v1545 = vrot.slane %v1492, %v1544
  %v1546 = vlaneseq
  %v1547 = vshrl.u32 %v1546, 7
  %v1548 = vsub.s32 2, %v1547
  %v1549 = vrot.slane %v1492, %v1548
  %v1550 = vlaneseq
  %v1551 = vshrl.u32 %v1550, 7
  %v1552 = vsub.s32 3, %v1551
  %v1553 = vrot.slane %v1492, %v1552
  %v1566 = vunpack.c.l.b16 %v1497
  %v1567 = vunpack.c.l.b16 %v1498
  %v1568 = vunpack.c.l.b16 %v1499
  %v1569 = vunpack.c.l.b16 %v1500
  %v1570 = vunpack.c.l.b16 %v1501
  %v1571 = vunpack.c.l.b16 %v1502
  %v1572 = vunpack.c.l.b16 %v1503
  %v1573 = vunpack.c.l.b16 %v1504
  %v1574 = vpack.c.b16 %v1567, %v1566
  %v1575 = vpack.c.b16 %v1569, %v1568
  %v1576 = vpack.c.b16 %v1571, %v1570
  %v1577 = vpack.c.b16 %v1573, %v1572
  %v1614 = vunpack.c.l.b16 %v1505
  %v1615 = vunpack.c.h.b16 %v1505
  %v1616 = vunpack.c.l.b16 %v1506
  %v1617 = vunpack.c.h.b16 %v1506
  %v1618 = vunpack.c.l.b16 %v1507
  %v1619 = vunpack.c.h.b16 %v1507
  %v1620 = vunpack.c.l.b16 %v1508
  %v1621 = vunpack.c.h.b16 %v1508
  %v1622 = vunpack.c.l.b16 %v1509
  %v1623 = vunpack.c.h.b16 %v1509
  %v1624 = vunpack.c.l.b16 %v1510
  %v1625 = vunpack.c.h.b16 %v1510
  %v1626 = vunpack.c.l.b16 %v1511
  %v1627 = vunpack.c.h.b16 %v1511
  %v1628 = vunpack.c.l.b16 %v1512
  %v1629 = vunpack.c.h.b16 %v1512
  %v1630 = vunpack.c.l.b16 %v1513
  %v1631 = vunpack.c.h.b16 %v1513
  %v1632 = vunpack.c.l.b16 %v1514
  %v1633 = vunpack.c.h.b16 %v1514
  %v1634 = vunpack.c.l.b16 %v1515
  %v1635 = vunpack.c.h.b16 %v1515
  %v1636 = vunpack.c.l.b16 %v1516
  %v1637 = vunpack.c.h.b16 %v1516
  %v1638 = vunpack.c.l.b16 %v1517
  %v1639 = vunpack.c.h.b16 %v1517
  %v1640 = vunpack.c.l.b16 %v1518
  %v1641 = vunpack.c.h.b16 %v1518
  %v1642 = vunpack.c.l.b16 %v1519
  %v1643 = vunpack.c.h.b16 %v1519
  %v1644 = vunpack.c.l.b16 %v1520
  %v1645 = vunpack.c.h.b16 %v1520
  %v1646 = vunpack.c.l.b16 %v1521
  %v1647 = vunpack.c.h.b16 %v1521
  %v1648 = vunpack.c.l.b16 %v1522
  %v1649 = vunpack.c.h.b16 %v1522
  %v1650 = vunpack.c.l.b16 %v1523
  %v1651 = vunpack.c.h.b16 %v1523
  %v1652 = vunpack.c.l.b16 %v1524
  %v1653 = vunpack.c.h.b16 %v1524
  %v1654 = vunpack.c.l.b16 %v1525
  %v1655 = vunpack.c.h.b16 %v1525
  %v1656 = vunpack.c.l.b16 %v1526
  %v1657 = vunpack.c.h.b16 %v1526
  %v1658 = vunpack.c.l.b16 %v1527
  %v1659 = vunpack.c.h.b16 %v1527
  %v1660 = vunpack.c.l.b16 %v1528
  %v1661 = vunpack.c.h.b16 %v1528
  %v1662 = vunpack.c.l.b16 %v1529
  %v1663 = vunpack.c.h.b16 %v1529
  %v1664 = vunpack.c.l.b16 %v1530
  %v1665 = vunpack.c.h.b16 %v1530
  %v1666 = vunpack.c.l.b16 %v1531
  %v1667 = vunpack.c.h.b16 %v1531
  %v1668 = vunpack.c.l.b16 %v1532
  %v1669 = vunpack.c.h.b16 %v1532
  %v1670 = vunpack.c.l.b16 %v1533
  %v1671 = vunpack.c.h.b16 %v1533
  %v1672 = vunpack.c.l.b16 %v1534
  %v1673 = vunpack.c.h.b16 %v1534
  %v1674 = vunpack.c.l.b16 %v1535
  %v1675 = vunpack.c.h.b16 %v1535
  %v1676 = vunpack.c.l.b16 %v1536
  %v1677 = vunpack.c.h.b16 %v1536
  %v1678 = vpack.c.b16 %v1618, %v1614
  %v1679 = vpack.c.b16 %v1619, %v1615
  %v1680 = vpack.c.b16 %v1620, %v1616
  %v1681 = vpack.c.b16 %v1621, %v1617
  %v1682 = vpack.c.b16 %v1626, %v1622
  %v1683 = vpack.c.b16 %v1627, %v1623
  %v1684 = vpack.c.b16 %v1628, %v1624
  %v1685 = vpack.c.b16 %v1629, %v1625
  %v1686 = vpack.c.b16 %v1634, %v1630
  %v1687 = vpack.c.b16 %v1635, %v1631
  %v1688 = vpack.c.b16 %v1636, %v1632
  %v1689 = vpack.c.b16 %v1637, %v1633
  %v1690 = vpack.c.b16 %v1642, %v1638
  %v1691 = vpack.c.b16 %v1643, %v1639
  %v1692 = vpack.c.b16 %v1644, %v1640
  %v1693 = vpack.c.b16 %v1645, %v1641
  %v1694 = vpack.c.b16 %v1650, %v1646
  %v1695 = vpack.c.b16 %v1651, %v1647
  %v1696 = vpack.c.b16 %v1652, %v1648
  %v1697 = vpack.c.b16 %v1653, %v1649
  %v1698 = vpack.c.b16 %v1658, %v1654
  %v1699 = vpack.c.b16 %v1659, %v1655
  %v1700 = vpack.c.b16 %v1660, %v1656
  %v1701 = vpack.c.b16 %v1661, %v1657
  %v1702 = vpack.c.b16 %v1666, %v1662
  %v1703 = vpack.c.b16 %v1667, %v1663
  %v1704 = vpack.c.b16 %v1668, %v1664
  %v1705 = vpack.c.b16 %v1669, %v1665
  %v1706 = vpack.c.b16 %v1674, %v1670
  %v1707 = vpack.c.b16 %v1675, %v1671
  %v1708 = vpack.c.b16 %v1676, %v1672
  %v1709 = vpack.c.b16 %v1677, %v1673
  %1742 = vmatprep.subr.bf16.mxu0 %v1679
  %1743 = vmatpush1.bf16.msra.mxu0 %v1678
  %1744 = vmatprep.subr.bf16.mxu0 %v1683
  %1745 = vmatpush1.bf16.msra.mxu0 %v1682
  %1746 = vmatprep.subr.bf16.mxu0 %v1687
  %1747 = vmatpush1.bf16.msra.mxu0 %v1686
  %1748 = vmatprep.subr.bf16.mxu0 %v1691
  %1749 = vmatpush1.bf16.msra.mxu0 %v1690
  %1750 = vmatprep.subr.bf16.mxu0 %v1695
  %1751 = vmatpush1.bf16.msra.mxu0 %v1694
  %1752 = vmatprep.subr.bf16.mxu0 %v1699
  %1753 = vmatpush1.bf16.msra.mxu0 %v1698
  %1754 = vmatprep.subr.bf16.mxu0 %v1703
  %1755 = vmatpush1.bf16.msra.mxu0 %v1702
  %1756 = vmatprep.subr.bf16.mxu0 %v1707
  %1757 = vmatpush1.bf16.msra.mxu0 %v1706
  %1758 = vmatprep.subr.bf16.mxu0 0
  %1759 = vmatpush1.bf16.msra.mxu0 0
  %1760 = vmatprep.subr.bf16.mxu0 0
  %1761 = vmatpush1.bf16.msra.mxu0 0
  %1762 = vmatprep.subr.bf16.mxu0 0
  %1763 = vmatpush1.bf16.msra.mxu0 0
  %1764 = vmatprep.subr.bf16.mxu0 0
  %1765 = vmatpush1.bf16.msra.mxu0 0
  %1766 = vmatprep.subr.bf16.mxu0 0
  %1767 = vmatpush1.bf16.msra.mxu0 0
  %1768 = vmatprep.subr.bf16.mxu0 0
  %1769 = vmatpush1.bf16.msra.mxu0 0
  %1770 = vmatprep.subr.bf16.mxu0 0
  %1771 = vmatpush1.bf16.msra.mxu0 0
  %1772 = vmatprep.subr.bf16.mxu0 0
  %1773 = vmatpush1.bf16.msra.mxu0 0
  %1774 = vmatprep.mubr.bf16.mxu0 0
  %1775 = vmatmul.mubr.bf16.gmra.mrb[0].mxu0 %v1574
  %v1776 = vpop.f32.mrb[0].mxu0
  %v1777 = vadd.f32 %v1541, %v1776
  %v1778 = vpop.f32.mrb[0].mxu0
  %v1779 = vadd.f32 %v1545, %v1778
  %v1780 = vpop.f32.mrb[0].mxu0
  %v1781 = vadd.f32 %v1541, %v1780
  %v1782 = vpop.f32.mrb[0].mxu0
  %v1783 = vadd.f32 %v1545, %v1782
  %1784 = vmatprep.mubr.bf16.mxu0 0
  %1785 = vmatmul.mubr.bf16.gmra.mrb[0].mxu0 %v1575
  %v1786 = vpop.f32.mrb[0].mxu0
  %v1787 = vadd.f32 %v1541, %v1786
  %v1788 = vpop.f32.mrb[0].mxu0
  %v1789 = vadd.f32 %v1545, %v1788
  %v1790 = vpop.f32.mrb[0].mxu0
  %v1791 = vadd.f32 %v1541, %v1790
  %v1792 = vpop.f32.mrb[0].mxu0
  %v1793 = vadd.f32 %v1545, %v1792
  %1794 = vmatprep.mubr.bf16.mxu0 0
  %1795 = vmatmul.mubr.bf16.gmra.mrb[0].mxu0 %v1576
  %v1796 = vpop.f32.mrb[0].mxu0
  %v1797 = vadd.f32 %v1541, %v1796
  %v1798 = vpop.f32.mrb[0].mxu0
  %v1799 = vadd.f32 %v1545, %v1798
  %v1800 = vpop.f32.mrb[0].mxu0
  %v1801 = vadd.f32 %v1541, %v1800
  %v1802 = vpop.f32.mrb[0].mxu0
  %v1803 = vadd.f32 %v1545, %v1802
  %1804 = vmatprep.mubr.bf16.mxu0 0
  %1805 = vmatmul.mubr.bf16.gmra.mrb[0].mxu0 %v1577
  %v1806 = vpop.f32.mrb[0].mxu0
  %v1807 = vadd.f32 %v1541, %v1806
  %v1808 = vpop.f32.mrb[0].mxu0
  %v1809 = vadd.f32 %v1545, %v1808
  %v1810 = vpop.f32.mrb[0].mxu0
  %v1811 = vadd.f32 %v1541, %v1810
  %v1812 = vpop.f32.mrb[0].mxu0
  %v1813 = vadd.f32 %v1545, %v1812
  %1814 = vdwg.mxu0
  %1815 = vmatprep.subr.bf16.mxu0 %v1681
  %1816 = vmatpush1.bf16.msra.mxu0 %v1680
  %1817 = vmatprep.subr.bf16.mxu0 %v1685
  %1818 = vmatpush1.bf16.msra.mxu0 %v1684
  %1819 = vmatprep.subr.bf16.mxu0 %v1689
  %1820 = vmatpush1.bf16.msra.mxu0 %v1688
  %1821 = vmatprep.subr.bf16.mxu0 %v1693
  %1822 = vmatpush1.bf16.msra.mxu0 %v1692
  %1823 = vmatprep.subr.bf16.mxu0 %v1697
  %1824 = vmatpush1.bf16.msra.mxu0 %v1696
  %1825 = vmatprep.subr.bf16.mxu0 %v1701
  %1826 = vmatpush1.bf16.msra.mxu0 %v1700
  %1827 = vmatprep.subr.bf16.mxu0 %v1705
  %1828 = vmatpush1.bf16.msra.mxu0 %v1704
  %1829 = vmatprep.subr.bf16.mxu0 %v1709
  %1830 = vmatpush1.bf16.msra.mxu0 %v1708
  %1831 = vmatprep.subr.bf16.mxu0 0
  %1832 = vmatpush1.bf16.msra.mxu0 0
  %1833 = vmatprep.subr.bf16.mxu0 0
  %1834 = vmatpush1.bf16.msra.mxu0 0
  %1835 = vmatprep.subr.bf16.mxu0 0
  %1836 = vmatpush1.bf16.msra.mxu0 0
  %1837 = vmatprep.subr.bf16.mxu0 0
  %1838 = vmatpush1.bf16.msra.mxu0 0
  %1839 = vmatprep.subr.bf16.mxu0 0
  %1840 = vmatpush1.bf16.msra.mxu0 0
  %1841 = vmatprep.subr.bf16.mxu0 0
  %1842 = vmatpush1.bf16.msra.mxu0 0
  %1843 = vmatprep.subr.bf16.mxu0 0
  %1844 = vmatpush1.bf16.msra.mxu0 0
  %1845 = vmatprep.subr.bf16.mxu0 0
  %1846 = vmatpush1.bf16.msra.mxu0 0
  %1847 = vmatprep.mubr.bf16.mxu0 0
  %1848 = vmatmul.mubr.bf16.gmra.mrb[0].mxu0 %v1574
  %v1849 = vpop.f32.mrb[0].mxu0
  %v1850 = vadd.f32 %v1549, %v1849
  %v1851 = vpop.f32.mrb[0].mxu0
  %v1852 = vadd.f32 %v1553, %v1851
  %v1853 = vpop.f32.mrb[0].mxu0
  %v1854 = vadd.f32 %v1549, %v1853
  %v1855 = vpop.f32.mrb[0].mxu0
  %v1856 = vadd.f32 %v1553, %v1855
  %1857 = vmatprep.mubr.bf16.mxu0 0
  %1858 = vmatmul.mubr.bf16.gmra.mrb[0].mxu0 %v1575
  %v1859 = vpop.f32.mrb[0].mxu0
  %v1860 = vadd.f32 %v1549, %v1859
  %v1861 = vpop.f32.mrb[0].mxu0
  %v1862 = vadd.f32 %v1553, %v1861
  %v1863 = vpop.f32.mrb[0].mxu0
  %v1864 = vadd.f32 %v1549, %v1863
  %v1865 = vpop.f32.mrb[0].mxu0
  %v1866 = vadd.f32 %v1553, %v1865
  %1867 = vmatprep.mubr.bf16.mxu0 0
  %1868 = vmatmul.mubr.bf16.gmra.mrb[0].mxu0 %v1576
  %v1869 = vpop.f32.mrb[0].mxu0
  %v1870 = vadd.f32 %v1549, %v1869
  %v1871 = vpop.f32.mrb[0].mxu0
  %v1872 = vadd.f32 %v1553, %v1871
  %v1873 = vpop.f32.mrb[0].mxu0
  %v1874 = vadd.f32 %v1549, %v1873
  %v1875 = vpop.f32.mrb[0].mxu0
  %v1876 = vadd.f32 %v1553, %v1875
  %1877 = vmatprep.mubr.bf16.mxu0 0
  %1878 = vmatmul.mubr.bf16.gmra.mrb[0].mxu0 %v1577
  %v1879 = vpop.f32.mrb[0].mxu0
  %v1880 = vadd.f32 %v1549, %v1879
  %v1881 = vpop.f32.mrb[0].mxu0
  %v1882 = vadd.f32 %v1553, %v1881
  %v1883 = vpop.f32.mrb[0].mxu0
  %v1884 = vadd.f32 %v1549, %v1883
  %v1885 = vpop.f32.mrb[0].mxu0
  %v1886 = vadd.f32 %v1553, %v1885
  %1887 = vdwg.mxu0
  %1888 = vst [vmem:[#allocation2] sm:$0xff] %v1777
  %1889 = vst [vmem:[#allocation2 + $0x8] sm:$0xff] %v1779
  %1890 = vst [vmem:[#allocation2 + $0x10] sm:$0xff] %v1850
  %1891 = vst [vmem:[#allocation2 + $0x18] sm:$0xff] %v1852
  %1892 = vst [vmem:[#allocation2 + $0x20] sm:$0xff] %v1781
  %1893 = vst [vmem:[#allocation2 + $0x28] sm:$0xff] %v1783
  %1894 = vst [vmem:[#allocation2 + $0x30] sm:$0xff] %v1854
  %1895 = vst [vmem:[#allocation2 + $0x38] sm:$0xff] %v1856
  %1896 = vst [vmem:[#allocation2 + $0x40] sm:$0xff] %v1787
  %1897 = vst [vmem:[#allocation2 + $0x48] sm:$0xff] %v1789
  %1898 = vst [vmem:[#allocation2 + $0x50] sm:$0xff] %v1860
  %1899 = vst [vmem:[#allocation2 + $0x58] sm:$0xff] %v1862
  %1900 = vst [vmem:[#allocation2 + $0x60] sm:$0xff] %v1791
  %1901 = vst [vmem:[#allocation2 + $0x68] sm:$0xff] %v1793
  %1902 = vst [vmem:[#allocation2 + $0x70] sm:$0xff] %v1864
  %1903 = vst [vmem:[#allocation2 + $0x78] sm:$0xff] %v1866
  %1904 = vst [vmem:[#allocation2 + $0x80] sm:$0xff] %v1797
  %1905 = vst [vmem:[#allocation2 + $0x88] sm:$0xff] %v1799
  %1906 = vst [vmem:[#allocation2 + $0x90] sm:$0xff] %v1870
  %1907 = vst [vmem:[#allocation2 + $0x98] sm:$0xff] %v1872
  %1908 = vst [vmem:[#allocation2 + $0xa0] sm:$0xff] %v1801
  %1909 = vst [vmem:[#allocation2 + $0xa8] sm:$0xff] %v1803
  %1910 = vst [vmem:[#allocation2 + $0xb0] sm:$0xff] %v1874
  %1911 = vst [vmem:[#allocation2 + $0xb8] sm:$0xff] %v1876
  %1912 = vst [vmem:[#allocation2 + $0xc0] sm:$0xff] %v1807
  %1913 = vst [vmem:[#allocation2 + $0xc8] sm:$0xff] %v1809
  %1914 = vst [vmem:[#allocation2 + $0xd0] sm:$0xff] %v1880
  %1915 = vst [vmem:[#allocation2 + $0xd8] sm:$0xff] %v1882
  %1916 = vst [vmem:[#allocation2 + $0xe0] sm:$0xff] %v1811
  %1917 = vst [vmem:[#allocation2 + $0xe8] sm:$0xff] %v1813
  %1918 = vst [vmem:[#allocation2 + $0xf0] sm:$0xff] %v1884
  %1919 = vst [vmem:[#allocation2 + $0xf8] sm:$0xff] %v1886
  %v1920 = vld [vmem:[#allocation2] sm:$0xff]
  %v1921 = vld [vmem:[#allocation2 + $0x8] sm:$0xff]
  %v1922 = vld [vmem:[#allocation2 + $0x10] sm:$0xff]
  %v1923 = vld [vmem:[#allocation2 + $0x18] sm:$0xff]
  %v1924 = vpack.c.bf16 %v1494, %v1494
  %v1957 = vunpack.c.l.b16 %v1460
  %v1958 = vunpack.c.h.b16 %v1460
  %v1959 = vunpack.c.l.b16 %v1461
  %v1960 = vunpack.c.h.b16 %v1461
  %v1961 = vunpack.c.l.b16 %v1462
  %v1962 = vunpack.c.h.b16 %v1462
  %v1963 = vunpack.c.l.b16 %v1463
  %v1964 = vunpack.c.h.b16 %v1463
  %v1965 = vunpack.c.l.b16 %v1464
  %v1966 = vunpack.c.h.b16 %v1464
  %v1967 = vunpack.c.l.b16 %v1465
  %v1968 = vunpack.c.h.b16 %v1465
  %v1969 = vunpack.c.l.b16 %v1466
  %v1970 = vunpack.c.h.b16 %v1466
  %v1971 = vunpack.c.l.b16 %v1467
  %v1972 = vunpack.c.h.b16 %v1467
  %v1973 = vunpack.c.l.b16 %v1468
  %v1974 = vunpack.c.h.b16 %v1468
  %v1975 = vunpack.c.l.b16 %v1469
  %v1976 = vunpack.c.h.b16 %v1469
  %v1977 = vunpack.c.l.b16 %v1470
  %v1978 = vunpack.c.h.b16 %v1470
  %v1979 = vunpack.c.l.b16 %v1471
  %v1980 = vunpack.c.h.b16 %v1471
  %v1981 = vunpack.c.l.b16 %v1472
  %v1982 = vunpack.c.h.b16 %v1472
  %v1983 = vunpack.c.l.b16 %v1473
  %v1984 = vunpack.c.h.b16 %v1473
  %v1985 = vunpack.c.l.b16 %v1474
  %v1986 = vunpack.c.h.b16 %v1474
  %v1987 = vunpack.c.l.b16 %v1475
  %v1988 = vunpack.c.h.b16 %v1475
  %v1989 = vunpack.c.l.b16 %v1476
  %v1990 = vunpack.c.h.b16 %v1476
  %v1991 = vunpack.c.l.b16 %v1477
  %v1992 = vunpack.c.h.b16 %v1477
  %v1993 = vunpack.c.l.b16 %v1478
  %v1994 = vunpack.c.h.b16 %v1478
  %v1995 = vunpack.c.l.b16 %v1479
  %v1996 = vunpack.c.h.b16 %v1479
  %v1997 = vunpack.c.l.b16 %v1480
  %v1998 = vunpack.c.h.b16 %v1480
  %v1999 = vunpack.c.l.b16 %v1481
  %v2000 = vunpack.c.h.b16 %v1481
  %v2001 = vunpack.c.l.b16 %v1482
  %v2002 = vunpack.c.h.b16 %v1482
  %v2003 = vunpack.c.l.b16 %v1483
  %v2004 = vunpack.c.h.b16 %v1483
  %v2005 = vunpack.c.l.b16 %v1484
  %v2006 = vunpack.c.h.b16 %v1484
  %v2007 = vunpack.c.l.b16 %v1485
  %v2008 = vunpack.c.h.b16 %v1485
  %v2009 = vunpack.c.l.b16 %v1486
  %v2010 = vunpack.c.h.b16 %v1486
  %v2011 = vunpack.c.l.b16 %v1487
  %v2012 = vunpack.c.h.b16 %v1487
  %v2013 = vunpack.c.l.b16 %v1488
  %v2014 = vunpack.c.h.b16 %v1488
  %v2015 = vunpack.c.l.b16 %v1489
  %v2016 = vunpack.c.h.b16 %v1489
  %v2017 = vunpack.c.l.b16 %v1490
  %v2018 = vunpack.c.h.b16 %v1490
  %v2019 = vunpack.c.l.b16 %v1491
  %v2020 = vunpack.c.h.b16 %v1491
  %v2021 = vpack.c.b16 %v1961, %v1957
  %v2022 = vpack.c.b16 %v1962, %v1958
  %v2023 = vpack.c.b16 %v1963, %v1959
  %v2024 = vpack.c.b16 %v1964, %v1960
  %v2025 = vpack.c.b16 %v1969, %v1965
  %v2026 = vpack.c.b16 %v1970, %v1966
  %v2027 = vpack.c.b16 %v1971, %v1967
  %v2028 = vpack.c.b16 %v1972, %v1968
  %v2029 = vpack.c.b16 %v1977, %v1973
  %v2030 = vpack.c.b16 %v1978, %v1974
  %v2031 = vpack.c.b16 %v1979, %v1975
  %v2032 = vpack.c.b16 %v1980, %v1976
  %v2033 = vpack.c.b16 %v1985, %v1981
  %v2034 = vpack.c.b16 %v1986, %v1982
  %v2035 = vpack.c.b16 %v1987, %v1983
  %v2036 = vpack.c.b16 %v1988, %v1984
  %v2037 = vpack.c.b16 %v1993, %v1989
  %v2038 = vpack.c.b16 %v1994, %v1990
  %v2039 = vpack.c.b16 %v1995, %v1991
  %v2040 = vpack.c.b16 %v1996, %v1992
  %v2041 = vpack.c.b16 %v2001, %v1997
  %v2042 = vpack.c.b16 %v2002, %v1998
  %v2043 = vpack.c.b16 %v2003, %v1999
  %v2044 = vpack.c.b16 %v2004, %v2000
  %v2045 = vpack.c.b16 %v2009, %v2005
  %v2046 = vpack.c.b16 %v2010, %v2006
  %v2047 = vpack.c.b16 %v2011, %v2007
  %v2048 = vpack.c.b16 %v2012, %v2008
  %v2049 = vpack.c.b16 %v2017, %v2013
  %v2050 = vpack.c.b16 %v2018, %v2014
  %v2051 = vpack.c.b16 %v2019, %v2015
  %v2052 = vpack.c.b16 %v2020, %v2016
  %2085 = vmatprep.subr.bf16.mxu0 %v2022
  %2086 = vmatpush1.bf16.msra.mxu0 %v2021
  %2087 = vmatprep.subr.bf16.mxu0 %v2026
  %2088 = vmatpush1.bf16.msra.mxu0 %v2025
  %2089 = vmatprep.subr.bf16.mxu0 %v2030
  %2090 = vmatpush1.bf16.msra.mxu0 %v2029
  %2091 = vmatprep.subr.bf16.mxu0 %v2034
  %2092 = vmatpush1.bf16.msra.mxu0 %v2033
  %2093 = vmatprep.subr.bf16.mxu0 %v2038
  %2094 = vmatpush1.bf16.msra.mxu0 %v2037
  %2095 = vmatprep.subr.bf16.mxu0 %v2042
  %2096 = vmatpush1.bf16.msra.mxu0 %v2041
  %2097 = vmatprep.subr.bf16.mxu0 %v2046
  %2098 = vmatpush1.bf16.msra.mxu0 %v2045
  %2099 = vmatprep.subr.bf16.mxu0 %v2050
  %2100 = vmatpush1.bf16.msra.mxu0 %v2049
  %2101 = vmatprep.subr.bf16.mxu0 0
  %2102 = vmatpush1.bf16.msra.mxu0 0
  %2103 = vmatprep.subr.bf16.mxu0 0
  %2104 = vmatpush1.bf16.msra.mxu0 0
  %2105 = vmatprep.subr.bf16.mxu0 0
  %2106 = vmatpush1.bf16.msra.mxu0 0
  %2107 = vmatprep.subr.bf16.mxu0 0
  %2108 = vmatpush1.bf16.msra.mxu0 0
  %2109 = vmatprep.subr.bf16.mxu0 0
  %2110 = vmatpush1.bf16.msra.mxu0 0
  %2111 = vmatprep.subr.bf16.mxu0 0
  %2112 = vmatpush1.bf16.msra.mxu0 0
  %2113 = vmatprep.subr.bf16.mxu0 0
  %2114 = vmatpush1.bf16.msra.mxu0 0
  %2115 = vmatprep.subr.bf16.mxu0 0
  %2116 = vmatpush1.bf16.msra.mxu0 0
  %2117 = vmatprep.mubr.bf16.mxu0 0
  %2118 = vmatmul.mubr.bf16.gmra.mrb[0].mxu0 %v1924
  %v2119 = vpop.f32.mrb[0].mxu0
  %v2120 = vadd.f32 0.0, %v2119
  %v2121 = vpop.f32.mrb[0].mxu0
  %v2122 = vadd.f32 0.0, %v2121
  %v2123 = vpop.f32.mrb[0].mxu0
  %v2124 = vpop.f32.mrb[0].mxu0
  %2125 = vdwg.mxu0
  %2126 = vmatprep.subr.bf16.mxu0 %v2024
  %2127 = vmatpush1.bf16.msra.mxu0 %v2023
  %2128 = vmatprep.subr.bf16.mxu0 %v2028
  %2129 = vmatpush1.bf16.msra.mxu0 %v2027
  %2130 = vmatprep.subr.bf16.mxu0 %v2032
  %2131 = vmatpush1.bf16.msra.mxu0 %v2031
  %2132 = vmatprep.subr.bf16.mxu0 %v2036
  %2133 = vmatpush1.bf16.msra.mxu0 %v2035
  %2134 = vmatprep.subr.bf16.mxu0 %v2040
  %2135 = vmatpush1.bf16.msra.mxu0 %v2039
  %2136 = vmatprep.subr.bf16.mxu0 %v2044
  %2137 = vmatpush1.bf16.msra.mxu0 %v2043
  %2138 = vmatprep.subr.bf16.mxu0 %v2048
  %2139 = vmatpush1.bf16.msra.mxu0 %v2047
  %2140 = vmatprep.subr.bf16.mxu0 %v2052
  %2141 = vmatpush1.bf16.msra.mxu0 %v2051
  %2142 = vmatprep.subr.bf16.mxu0 0
  %2143 = vmatpush1.bf16.msra.mxu0 0
  %2144 = vmatprep.subr.bf16.mxu0 0
  %2145 = vmatpush1.bf16.msra.mxu0 0
  %2146 = vmatprep.subr.bf16.mxu0 0
  %2147 = vmatpush1.bf16.msra.mxu0 0
  %2148 = vmatprep.subr.bf16.mxu0 0
  %2149 = vmatpush1.bf16.msra.mxu0 0
  %2150 = vmatprep.subr.bf16.mxu0 0
  %2151 = vmatpush1.bf16.msra.mxu0 0
  %2152 = vmatprep.subr.bf16.mxu0 0
  %2153 = vmatpush1.bf16.msra.mxu0 0
  %2154 = vmatprep.subr.bf16.mxu0 0
  %2155 = vmatpush1.bf16.msra.mxu0 0
  %2156 = vmatprep.subr.bf16.mxu0 0
  %2157 = vmatpush1.bf16.msra.mxu0 0
  %2158 = vmatprep.mubr.bf16.mxu0 0
  %2159 = vmatmul.mubr.bf16.gmra.mrb[0].mxu0 %v1924
  %v2160 = vpop.f32.mrb[0].mxu0
  %v2161 = vadd.f32 0.0, %v2160
  %v2162 = vpop.f32.mrb[0].mxu0
  %v2163 = vadd.f32 0.0, %v2162
  %v2164 = vpop.f32.mrb[0].mxu0
  %v2165 = vpop.f32.mrb[0].mxu0
  %2166 = vdwg.mxu0
  %v2167 = vadd.f32 %v1920, %v2120
  %v2168 = vadd.f32 %v1921, %v2122
  %v2169 = vadd.f32 %v1922, %v2161
  %v2170 = vadd.f32 %v1923, %v2163
  %v2171 = vxor.u32 %v2167, 2147483648
  %v2172 = vmul.f32 %v2171, 1.442695
  %v2173 = vpow.pop %v2172
  %v2174 = vadd.f32 %v2173, 1.0
  %v2175 = vrcp.pop %v2174
  %v2176 = vmul.f32 1.0, %v2175
  %v2177 = vxor.u32 %v2168, 2147483648
  %v2178 = vmul.f32 %v2177, 1.442695
  %v2179 = vpow.pop %v2178
  %v2180 = vadd.f32 %v2179, 1.0
  %v2181 = vrcp.pop %v2180
  %v2182 = vmul.f32 1.0, %v2181
  %v2183 = vtanh.pop %v2169
  %v2184 = vxor.u32 %v2170, 2147483648
  %v2185 = vmul.f32 %v2184, 1.442695
  %v2186 = vpow.pop %v2185
  %v2187 = vadd.f32 %v2186, 1.0
  %v2188 = vrcp.pop %v2187
  %v2189 = vmul.f32 1.0, %v2188
  %v2190 = vmul.f32 %v2182, %v1496
  %v2191 = vmul.f32 %v2176, %v2183
  %v2192 = vadd.f32 %v2190, %v2191
  %v2193 = vtanh.pop %v2192
  %v2194 = vmul.f32 %v2189, %v2193
  %v2195 = vpack.c.bf16 %v2194, %v2194
  %2196 = vst [vmem:[#allocation3] sm:$0xf] %v2195
  %v2197 = vld [vmem:[%s618] sm:$0xff]
  %v2198 = vld [vmem:[%s618 + $0x8] sm:$0xff]
  %v2199 = vld [vmem:[%s618 + $0x10] sm:$0xff]
  %v2200 = vld [vmem:[%s618 + $0x18] sm:$0xff]
  %2201 = vmatprep.subr.bf16.mxu0 %v2022
  %2202 = vmatpush1.bf16.msra.mxu0 %v2021
  %2203 = vmatprep.subr.bf16.mxu0 %v2026
  %2204 = vmatpush1.bf16.msra.mxu0 %v2025
  %2205 = vmatprep.subr.bf16.mxu0 %v2030
  %2206 = vmatpush1.bf16.msra.mxu0 %v2029
  %2207 = vmatprep.subr.bf16.mxu0 %v2034
  %2208 = vmatpush1.bf16.msra.mxu0 %v2033
  %2209 = vmatprep.subr.bf16.mxu0 %v2038
  %2210 = vmatpush1.bf16.msra.mxu0 %v2037
  %2211 = vmatprep.subr.bf16.mxu0 %v2042
  %2212 = vmatpush1.bf16.msra.mxu0 %v2041
  %2213 = vmatprep.subr.bf16.mxu0 %v2046
  %2214 = vmatpush1.bf16.msra.mxu0 %v2045
  %2215 = vmatprep.subr.bf16.mxu0 %v2050
  %2216 = vmatpush1.bf16.msra.mxu0 %v2049
  %2217 = vmatprep.subr.bf16.mxu0 0
  %2218 = vmatpush1.bf16.msra.mxu0 0
  %2219 = vmatprep.subr.bf16.mxu0 0
  %2220 = vmatpush1.bf16.msra.mxu0 0
  %2221 = vmatprep.subr.bf16.mxu0 0
  %2222 = vmatpush1.bf16.msra.mxu0 0
  %2223 = vmatprep.subr.bf16.mxu0 0
  %2224 = vmatpush1.bf16.msra.mxu0 0
  %2225 = vmatprep.subr.bf16.mxu0 0
  %2226 = vmatpush1.bf16.msra.mxu0 0
  %2227 = vmatprep.subr.bf16.mxu0 0
  %2228 = vmatpush1.bf16.msra.mxu0 0
  %2229 = vmatprep.subr.bf16.mxu0 0
  %2230 = vmatpush1.bf16.msra.mxu0 0
  %2231 = vmatprep.subr.bf16.mxu0 0
  %2232 = vmatpush1.bf16.msra.mxu0 0
  %2233 = vmatprep.mubr.bf16.mxu0 0
  %2234 = vmatmul.mubr.bf16.gmra.mrb[0].mxu0 %v2195
  %v2235 = vpop.f32.mrb[0].mxu0
  %v2236 = vadd.f32 0.0, %v2235
  %v2237 = vpop.f32.mrb[0].mxu0
  %v2238 = vadd.f32 0.0, %v2237
  %v2239 = vpop.f32.mrb[0].mxu0
  %v2240 = vpop.f32.mrb[0].mxu0
  %2241 = vdwg.mxu0
  %2242 = vmatprep.subr.bf16.mxu0 %v2024
  %2243 = vmatpush1.bf16.msra.mxu0 %v2023
  %2244 = vmatprep.subr.bf16.mxu0 %v2028
  %2245 = vmatpush1.bf16.msra.mxu0 %v2027
  %2246 = vmatprep.subr.bf16.mxu0 %v2032
  %2247 = vmatpush1.bf16.msra.mxu0 %v2031
  %2248 = vmatprep.subr.bf16.mxu0 %v2036
  %2249 = vmatpush1.bf16.msra.mxu0 %v2035
  %2250 = vmatprep.subr.bf16.mxu0 %v2040
  %2251 = vmatpush1.bf16.msra.mxu0 %v2039
  %2252 = vmatprep.subr.bf16.mxu0 %v2044
  %2253 = vmatpush1.bf16.msra.mxu0 %v2043
  %2254 = vmatprep.subr.bf16.mxu0 %v2048
  %2255 = vmatpush1.bf16.msra.mxu0 %v2047
  %2256 = vmatprep.subr.bf16.mxu0 %v2052
  %2257 = vmatpush1.bf16.msra.mxu0 %v2051
  %2258 = vmatprep.subr.bf16.mxu0 0
  %2259 = vmatpush1.bf16.msra.mxu0 0
  %2260 = vmatprep.subr.bf16.mxu0 0
  %2261 = vmatpush1.bf16.msra.mxu0 0
  %2262 = vmatprep.subr.bf16.mxu0 0
  %2263 = vmatpush1.bf16.msra.mxu0 0
  %2264 = vmatprep.subr.bf16.mxu0 0
  %2265 = vmatpush1.bf16.msra.mxu0 0
  %2266 = vmatprep.subr.bf16.mxu0 0
  %2267 = vmatpush1.bf16.msra.mxu0 0
  %2268 = vmatprep.subr.bf16.mxu0 0
  %2269 = vmatpush1.bf16.msra.mxu0 0
  %2270 = vmatprep.subr.bf16.mxu0 0
  %2271 = vmatpush1.bf16.msra.mxu0 0
  %2272 = vmatprep.subr.bf16.mxu0 0
  %2273 = vmatpush1.bf16.msra.mxu0 0
  %2274 = vmatprep.mubr.bf16.mxu0 0
  %2275 = vmatmul.mubr.bf16.gmra.mrb[0].mxu0 %v2195
  %v2276 = vpop.f32.mrb[0].mxu0
  %v2277 = vadd.f32 0.0, %v2276
  %v2278 = vpop.f32.mrb[0].mxu0
  %v2279 = vadd.f32 0.0, %v2278
  %v2280 = vpop.f32.mrb[0].mxu0
  %v2281 = vpop.f32.mrb[0].mxu0
  %2282 = vdwg.mxu0
  %v2283 = vadd.f32 %v2197, %v2236
  %v2284 = vadd.f32 %v2198, %v2238
  %v2285 = vadd.f32 %v2199, %v2277
  %v2286 = vadd.f32 %v2200, %v2279
  %v2287 = vxor.u32 %v2283, 2147483648
  %v2288 = vmul.f32 %v2287, 1.442695
  %v2289 = vpow.pop %v2288
  %v2290 = vadd.f32 %v2289, 1.0
  %v2291 = vrcp.pop %v2290
  %v2292 = vmul.f32 1.0, %v2291
  %v2293 = vxor.u32 %v2284, 2147483648
  %v2294 = vmul.f32 %v2293, 1.442695
  %v2295 = vpow.pop %v2294
  %v2296 = vadd.f32 %v2295, 1.0
  %v2297 = vrcp.pop %v2296
  %v2298 = vmul.f32 1.0, %v2297
  %v2299 = vtanh.pop %v2285
  %v2300 = vxor.u32 %v2286, 2147483648
  %v2301 = vmul.f32 %v2300, 1.442695
  %v2302 = vpow.pop %v2301
  %v2303 = vadd.f32 %v2302, 1.0
  %v2304 = vrcp.pop %v2303
  %v2305 = vmul.f32 1.0, %v2304
  %v2306 = vmul.f32 %v2298, %v2192
  %v2307 = vmul.f32 %v2292, %v2299
  %v2308 = vadd.f32 %v2306, %v2307
  %v2309 = vtanh.pop %v2308
  %v2310 = vmul.f32 %v2305, %v2309
  %v2311 = vpack.c.bf16 %v2310, %v2310
  %2312 = vst [vmem:[%s736] sm:$0xf] %v2311
  %v2313 = vld [vmem:[%s738] sm:$0xff]
  %v2314 = vld [vmem:[%s738 + $0x8] sm:$0xff]
  %v2315 = vld [vmem:[%s738 + $0x10] sm:$0xff]
  %v2316 = vld [vmem:[%s738 + $0x18] sm:$0xff]
  %2317 = vmatprep.subr.bf16.mxu0 %v2022
  %2318 = vmatpush1.bf16.msra.mxu0 %v2021
  %2319 = vmatprep.subr.bf16.mxu0 %v2026
  %2320 = vmatpush1.bf16.msra.mxu0 %v2025
  %2321 = vmatprep.subr.bf16.mxu0 %v2030
  %2322 = vmatpush1.bf16.msra.mxu0 %v2029
  %2323 = vmatprep.subr.bf16.mxu0 %v2034
  %2324 = vmatpush1.bf16.msra.mxu0 %v2033
  %2325 = vmatprep.subr.bf16.mxu0 %v2038
  %2326 = vmatpush1.bf16.msra.mxu0 %v2037
  %2327 = vmatprep.subr.bf16.mxu0 %v2042
  %2328 = vmatpush1.bf16.msra.mxu0 %v2041
  %2329 = vmatprep.subr.bf16.mxu0 %v2046
  %2330 = vmatpush1.bf16.msra.mxu0 %v2045
  %2331 = vmatprep.subr.bf16.mxu0 %v2050
  %2332 = vmatpush1.bf16.msra.mxu0 %v2049
  %2333 = vmatprep.subr.bf16.mxu0 0
  %2334 = vmatpush1.bf16.msra.mxu0 0
  %2335 = vmatprep.subr.bf16.mxu0 0
  %2336 = vmatpush1.bf16.msra.mxu0 0
  %2337 = vmatprep.subr.bf16.mxu0 0
  %2338 = vmatpush1.bf16.msra.mxu0 0
  %2339 = vmatprep.subr.bf16.mxu0 0
  %2340 = vmatpush1.bf16.msra.mxu0 0
  %2341 = vmatprep.subr.bf16.mxu0 0
  %2342 = vmatpush1.bf16.msra.mxu0 0
  %2343 = vmatprep.subr.bf16.mxu0 0
  %2344 = vmatpush1.bf16.msra.mxu0 0
  %2345 = vmatprep.subr.bf16.mxu0 0
  %2346 = vmatpush1.bf16.msra.mxu0 0
  %2347 = vmatprep.subr.bf16.mxu0 0
  %2348 = vmatpush1.bf16.msra.mxu0 0
  %2349 = vmatprep.mubr.bf16.mxu0 0
  %2350 = vmatmul.mubr.bf16.gmra.mrb[0].mxu0 %v2311
  %v2351 = vpop.f32.mrb[0].mxu0
  %v2352 = vadd.f32 0.0, %v2351
  %v2353 = vpop.f32.mrb[0].mxu0
  %v2354 = vadd.f32 0.0, %v2353
  %v2355 = vpop.f32.mrb[0].mxu0
  %v2356 = vpop.f32.mrb[0].mxu0
  %2357 = vdwg.mxu0
  %2358 = vmatprep.subr.bf16.mxu0 %v2024
  %2359 = vmatpush1.bf16.msra.mxu0 %v2023
  %2360 = vmatprep.subr.bf16.mxu0 %v2028
  %2361 = vmatpush1.bf16.msra.mxu0 %v2027
  %2362 = vmatprep.subr.bf16.mxu0 %v2032
  %2363 = vmatpush1.bf16.msra.mxu0 %v2031
  %2364 = vmatprep.subr.bf16.mxu0 %v2036
  %2365 = vmatpush1.bf16.msra.mxu0 %v2035
  %2366 = vmatprep.subr.bf16.mxu0 %v2040
  %2367 = vmatpush1.bf16.msra.mxu0 %v2039
  %2368 = vmatprep.subr.bf16.mxu0 %v2044
  %2369 = vmatpush1.bf16.msra.mxu0 %v2043
  %2370 = vmatprep.subr.bf16.mxu0 %v2048
  %2371 = vmatpush1.bf16.msra.mxu0 %v2047
  %2372 = vmatprep.subr.bf16.mxu0 %v2052
  %2373 = vmatpush1.bf16.msra.mxu0 %v2051
  %2374 = vmatprep.subr.bf16.mxu0 0
  %2375 = vmatpush1.bf16.msra.mxu0 0
  %2376 = vmatprep.subr.bf16.mxu0 0
  %2377 = vmatpush1.bf16.msra.mxu0 0
  %2378 = vmatprep.subr.bf16.mxu0 0
  %2379 = vmatpush1.bf16.msra.mxu0 0
  %2380 = vmatprep.subr.bf16.mxu0 0
  %2381 = vmatpush1.bf16.msra.mxu0 0
  %2382 = vmatprep.subr.bf16.mxu0 0
  %2383 = vmatpush1.bf16.msra.mxu0 0
  %2384 = vmatprep.subr.bf16.mxu0 0
  %2385 = vmatpush1.bf16.msra.mxu0 0
  %2386 = vmatprep.subr.bf16.mxu0 0
  %2387 = vmatpush1.bf16.msra.mxu0 0
  %2388 = vmatprep.subr.bf16.mxu0 0
  %2389 = vmatpush1.bf16.msra.mxu0 0
  %2390 = vmatprep.mubr.bf16.mxu0 0
  %2391 = vmatmul.mubr.bf16.gmra.mrb[0].mxu0 %v2311
  %v2392 = vpop.f32.mrb[0].mxu0
  %v2393 = vadd.f32 0.0, %v2392
  %v2394 = vpop.f32.mrb[0].mxu0
  %v2395 = vadd.f32 0.0, %v2394
  %v2396 = vpop.f32.mrb[0].mxu0
  %v2397 = vpop.f32.mrb[0].mxu0
  %2398 = vdwg.mxu0
  %v2399 = vadd.f32 %v2313, %v2352
  %v2400 = vadd.f32 %v2314, %v2354
  %v2401 = vadd.f32 %v2315, %v2393
  %v2402 = vadd.f32 %v2316, %v2395
  %v2403 = vxor.u32 %v2399, 2147483648
  %v2404 = vmul.f32 %v2403, 1.442695
  %v2405 = vpow.pop %v2404
  %v2406 = vadd.f32 %v2405, 1.0
  %v2407 = vrcp.pop %v2406
  %v2408 = vmul.f32 1.0, %v2407
  %v2409 = vxor.u32 %v2400, 2147483648
  %v2410 = vmul.f32 %v2409, 1.442695
  %v2411 = vpow.pop %v2410
  %v2412 = vadd.f32 %v2411, 1.0
  %v2413 = vrcp.pop %v2412
  %v2414 = vmul.f32 1.0, %v2413
  %v2415 = vtanh.pop %v2401
  %v2416 = vxor.u32 %v2402, 2147483648
  %v2417 = vmul.f32 %v2416, 1.442695
  %v2418 = vpow.pop %v2417
  %v2419 = vadd.f32 %v2418, 1.0
  %v2420 = vrcp.pop %v2419
  %v2421 = vmul.f32 1.0, %v2420
  %v2422 = vmul.f32 %v2414, %v2308
  %v2423 = vmul.f32 %v2408, %v2415
  %v2424 = vadd.f32 %v2422, %v2423
  %v2425 = vtanh.pop %v2424
  %v2426 = vmul.f32 %v2421, %v2425
  %v2427 = vpack.c.bf16 %v2426, %v2426
  %2428 = vst [vmem:[%s856] sm:$0xf] %v2427
  %v2429 = vld [vmem:[%s858] sm:$0xff]
  %v2430 = vld [vmem:[%s858 + $0x8] sm:$0xff]
  %v2431 = vld [vmem:[%s858 + $0x10] sm:$0xff]
  %v2432 = vld [vmem:[%s858 + $0x18] sm:$0xff]
  %2433 = vmatprep.subr.bf16.mxu0 %v2022
  %2434 = vmatpush1.bf16.msra.mxu0 %v2021
  %2435 = vmatprep.subr.bf16.mxu0 %v2026
  %2436 = vmatpush1.bf16.msra.mxu0 %v2025
  %2437 = vmatprep.subr.bf16.mxu0 %v2030
  %2438 = vmatpush1.bf16.msra.mxu0 %v2029
  %2439 = vmatprep.subr.bf16.mxu0 %v2034
  %2440 = vmatpush1.bf16.msra.mxu0 %v2033
  %2441 = vmatprep.subr.bf16.mxu0 %v2038
  %2442 = vmatpush1.bf16.msra.mxu0 %v2037
  %2443 = vmatprep.subr.bf16.mxu0 %v2042
  %2444 = vmatpush1.bf16.msra.mxu0 %v2041
  %2445 = vmatprep.subr.bf16.mxu0 %v2046
  %2446 = vmatpush1.bf16.msra.mxu0 %v2045
  %2447 = vmatprep.subr.bf16.mxu0 %v2050
  %2448 = vmatpush1.bf16.msra.mxu0 %v2049
  %2449 = vmatprep.subr.bf16.mxu0 0
  %2450 = vmatpush1.bf16.msra.mxu0 0
  %2451 = vmatprep.subr.bf16.mxu0 0
  %2452 = vmatpush1.bf16.msra.mxu0 0
  %2453 = vmatprep.subr.bf16.mxu0 0
  %2454 = vmatpush1.bf16.msra.mxu0 0
  %2455 = vmatprep.subr.bf16.mxu0 0
  %2456 = vmatpush1.bf16.msra.mxu0 0
  %2457 = vmatprep.subr.bf16.mxu0 0
  %2458 = vmatpush1.bf16.msra.mxu0 0
  %2459 = vmatprep.subr.bf16.mxu0 0
  %2460 = vmatpush1.bf16.msra.mxu0 0
  %2461 = vmatprep.subr.bf16.mxu0 0
  %2462 = vmatpush1.bf16.msra.mxu0 0
  %2463 = vmatprep.subr.bf16.mxu0 0
  %2464 = vmatpush1.bf16.msra.mxu0 0
  %2465 = vmatprep.mubr.bf16.mxu0 0
  %2466 = vmatmul.mubr.bf16.gmra.mrb[0].mxu0 %v2427
  %v2467 = vpop.f32.mrb[0].mxu0
  %v2468 = vadd.f32 0.0, %v2467
  %v2469 = vpop.f32.mrb[0].mxu0
  %v2470 = vadd.f32 0.0, %v2469
  %v2471 = vpop.f32.mrb[0].mxu0
  %v2472 = vpop.f32.mrb[0].mxu0
  %2473 = vdwg.mxu0
  %2474 = vmatprep.subr.bf16.mxu0 %v2024
  %2475 = vmatpush1.bf16.msra.mxu0 %v2023
  %2476 = vmatprep.subr.bf16.mxu0 %v2028
  %2477 = vmatpush1.bf16.msra.mxu0 %v2027
  %2478 = vmatprep.subr.bf16.mxu0 %v2032
  %2479 = vmatpush1.bf16.msra.mxu0 %v2031
  %2480 = vmatprep.subr.bf16.mxu0 %v2036
  %2481 = vmatpush1.bf16.msra.mxu0 %v2035
  %2482 = vmatprep.subr.bf16.mxu0 %v2040
  %2483 = vmatpush1.bf16.msra.mxu0 %v2039
  %2484 = vmatprep.subr.bf16.mxu0 %v2044
  %2485 = vmatpush1.bf16.msra.mxu0 %v2043
  %2486 = vmatprep.subr.bf16.mxu0 %v2048
  %2487 = vmatpush1.bf16.msra.mxu0 %v2047
  %2488 = vmatprep.subr.bf16.mxu0 %v2052
  %2489 = vmatpush1.bf16.msra.mxu0 %v2051
  %2490 = vmatprep.subr.bf16.mxu0 0
  %2491 = vmatpush1.bf16.msra.mxu0 0
  %2492 = vmatprep.subr.bf16.mxu0 0
  %2493 = vmatpush1.bf16.msra.mxu0 0
  %2494 = vmatprep.subr.bf16.mxu0 0
  %2495 = vmatpush1.bf16.msra.mxu0 0
  %2496 = vmatprep.subr.bf16.mxu0 0
  %2497 = vmatpush1.bf16.msra.mxu0 0
  %2498 = vmatprep.subr.bf16.mxu0 0
  %2499 = vmatpush1.bf16.msra.mxu0 0
  %2500 = vmatprep.subr.bf16.mxu0 0
  %2501 = vmatpush1.bf16.msra.mxu0 0
  %2502 = vmatprep.subr.bf16.mxu0 0
  %2503 = vmatpush1.bf16.msra.mxu0 0
  %2504 = vmatprep.subr.bf16.mxu0 0
  %2505 = vmatpush1.bf16.msra.mxu0 0
  %2506 = vmatprep.mubr.bf16.mxu0 0
  %2507 = vmatmul.mubr.bf16.gmra.mrb[0].mxu0 %v2427
  %v2508 = vpop.f32.mrb[0].mxu0
  %v2509 = vadd.f32 0.0, %v2508
  %v2510 = vpop.f32.mrb[0].mxu0
  %v2511 = vadd.f32 0.0, %v2510
  %v2512 = vpop.f32.mrb[0].mxu0
  %v2513 = vpop.f32.mrb[0].mxu0
  %2514 = vdwg.mxu0
  %v2515 = vadd.f32 %v2429, %v2468
  %v2516 = vadd.f32 %v2430, %v2470
  %v2517 = vadd.f32 %v2431, %v2509
  %v2518 = vadd.f32 %v2432, %v2511
  %v2519 = vxor.u32 %v2515, 2147483648
  %v2520 = vmul.f32 %v2519, 1.442695
  %v2521 = vpow.pop %v2520
  %v2522 = vadd.f32 %v2521, 1.0
  %v2523 = vrcp.pop %v2522
  %v2524 = vmul.f32 1.0, %v2523
  %v2525 = vxor.u32 %v2516, 2147483648
  %v2526 = vmul.f32 %v2525, 1.442695
  %v2527 = vpow.pop %v2526
  %v2528 = vadd.f32 %v2527, 1.0
  %v2529 = vrcp.pop %v2528
  %v2530 = vmul.f32 1.0, %v2529
  %v2531 = vtanh.pop %v2517
  %v2532 = vxor.u32 %v2518, 2147483648
  %v2533 = vmul.f32 %v2532, 1.442695
  %v2534 = vpow.pop %v2533
  %v2535 = vadd.f32 %v2534, 1.0
  %v2536 = vrcp.pop %v2535
  %v2537 = vmul.f32 1.0, %v2536
  %v2538 = vmul.f32 %v2530, %v2424
  %v2539 = vmul.f32 %v2524, %v2531
  %v2540 = vadd.f32 %v2538, %v2539
  %v2541 = vtanh.pop %v2540
  %v2542 = vmul.f32 %v2537, %v2541
  %v2543 = vpack.c.bf16 %v2542, %v2542
  %2544 = vst [vmem:[%s976] sm:$0xf] %v2543
  %v2545 = vld [vmem:[%s978] sm:$0xff]
  %v2546 = vld [vmem:[%s978 + $0x8] sm:$0xff]
  %v2547 = vld [vmem:[%s978 + $0x10] sm:$0xff]
  %v2548 = vld [vmem:[%s978 + $0x18] sm:$0xff]
  %2549 = vmatprep.subr.bf16.mxu0 %v2022
  %2550 = vmatpush1.bf16.msra.mxu0 %v2021
  %2551 = vmatprep.subr.bf16.mxu0 %v2026
  %2552 = vmatpush1.bf16.msra.mxu0 %v2025
  %2553 = vmatprep.subr.bf16.mxu0 %v2030
  %2554 = vmatpush1.bf16.msra.mxu0 %v2029
  %2555 = vmatprep.subr.bf16.mxu0 %v2034
  %2556 = vmatpush1.bf16.msra.mxu0 %v2033
  %2557 = vmatprep.subr.bf16.mxu0 %v2038
  %2558 = vmatpush1.bf16.msra.mxu0 %v2037
  %2559 = vmatprep.subr.bf16.mxu0 %v2042
  %2560 = vmatpush1.bf16.msra.mxu0 %v2041
  %2561 = vmatprep.subr.bf16.mxu0 %v2046
  %2562 = vmatpush1.bf16.msra.mxu0 %v2045
  %2563 = vmatprep.subr.bf16.mxu0 %v2050
  %2564 = vmatpush1.bf16.msra.mxu0 %v2049
  %2565 = vmatprep.subr.bf16.mxu0 0
  %2566 = vmatpush1.bf16.msra.mxu0 0
  %2567 = vmatprep.subr.bf16.mxu0 0
  %2568 = vmatpush1.bf16.msra.mxu0 0
  %2569 = vmatprep.subr.bf16.mxu0 0
  %2570 = vmatpush1.bf16.msra.mxu0 0
  %2571 = vmatprep.subr.bf16.mxu0 0
  %2572 = vmatpush1.bf16.msra.mxu0 0
  %2573 = vmatprep.subr.bf16.mxu0 0
  %2574 = vmatpush1.bf16.msra.mxu0 0
  %2575 = vmatprep.subr.bf16.mxu0 0
  %2576 = vmatpush1.bf16.msra.mxu0 0
  %2577 = vmatprep.subr.bf16.mxu0 0
  %2578 = vmatpush1.bf16.msra.mxu0 0
  %2579 = vmatprep.subr.bf16.mxu0 0
  %2580 = vmatpush1.bf16.msra.mxu0 0
  %2581 = vmatprep.mubr.bf16.mxu0 0
  %2582 = vmatmul.mubr.bf16.gmra.mrb[0].mxu0 %v2543
  %v2583 = vpop.f32.mrb[0].mxu0
  %v2584 = vadd.f32 0.0, %v2583
  %v2585 = vpop.f32.mrb[0].mxu0
  %v2586 = vadd.f32 0.0, %v2585
  %v2587 = vpop.f32.mrb[0].mxu0
  %v2588 = vpop.f32.mrb[0].mxu0
  %2589 = vdwg.mxu0
  %2590 = vmatprep.subr.bf16.mxu0 %v2024
  %2591 = vmatpush1.bf16.msra.mxu0 %v2023
  %2592 = vmatprep.subr.bf16.mxu0 %v2028
  %2593 = vmatpush1.bf16.msra.mxu0 %v2027
  %2594 = vmatprep.subr.bf16.mxu0 %v2032
  %2595 = vmatpush1.bf16.msra.mxu0 %v2031
  %2596 = vmatprep.subr.bf16.mxu0 %v2036
  %2597 = vmatpush1.bf16.msra.mxu0 %v2035
  %2598 = vmatprep.subr.bf16.mxu0 %v2040
  %2599 = vmatpush1.bf16.msra.mxu0 %v2039
  %2600 = vmatprep.subr.bf16.mxu0 %v2044
  %2601 = vmatpush1.bf16.msra.mxu0 %v2043
  %2602 = vmatprep.subr.bf16.mxu0 %v2048
  %2603 = vmatpush1.bf16.msra.mxu0 %v2047
  %2604 = vmatprep.subr.bf16.mxu0 %v2052
  %2605 = vmatpush1.bf16.msra.mxu0 %v2051
  %2606 = vmatprep.subr.bf16.mxu0 0
  %2607 = vmatpush1.bf16.msra.mxu0 0
  %2608 = vmatprep.subr.bf16.mxu0 0
  %2609 = vmatpush1.bf16.msra.mxu0 0
  %2610 = vmatprep.subr.bf16.mxu0 0
  %2611 = vmatpush1.bf16.msra.mxu0 0
  %2612 = vmatprep.subr.bf16.mxu0 0
  %2613 = vmatpush1.bf16.msra.mxu0 0
  %2614 = vmatprep.subr.bf16.mxu0 0
  %2615 = vmatpush1.bf16.msra.mxu0 0
  %2616 = vmatprep.subr.bf16.mxu0 0
  %2617 = vmatpush1.bf16.msra.mxu0 0
  %2618 = vmatprep.subr.bf16.mxu0 0
  %2619 = vmatpush1.bf16.msra.mxu0 0
  %2620 = vmatprep.subr.bf16.mxu0 0
  %2621 = vmatpush1.bf16.msra.mxu0 0
  %2622 = vmatprep.mubr.bf16.mxu0 0
  %2623 = vmatmul.mubr.bf16.gmra.mrb[0].mxu0 %v2543
  %v2624 = vpop.f32.mrb[0].mxu0
  %v2625 = vadd.f32 0.0, %v2624
  %v2626 = vpop.f32.mrb[0].mxu0
  %v2627 = vadd.f32 0.0, %v2626
  %v2628 = vpop.f32.mrb[0].mxu0
  %v2629 = vpop.f32.mrb[0].mxu0
  %2630 = vdwg.mxu0
  %v2631 = vadd.f32 %v2545, %v2584
  %v2632 = vadd.f32 %v2546, %v2586
  %v2633 = vadd.f32 %v2547, %v2625
  %v2634 = vadd.f32 %v2548, %v2627
  %v2635 = vxor.u32 %v2631, 2147483648
  %v2636 = vmul.f32 %v2635, 1.442695
  %v2637 = vpow.pop %v2636
  %v2638 = vadd.f32 %v2637, 1.0
  %v2639 = vrcp.pop %v2638
  %v2640 = vmul.f32 1.0, %v2639
  %v2641 = vxor.u32 %v2632, 2147483648
  %v2642 = vmul.f32 %v2641, 1.442695
  %v2643 = vpow.pop %v2642
  %v2644 = vadd.f32 %v2643, 1.0
  %v2645 = vrcp.pop %v2644
  %v2646 = vmul.f32 1.0, %v2645
  %v2647 = vtanh.pop %v2633
  %v2648 = vxor.u32 %v2634, 2147483648
  %v2649 = vmul.f32 %v2648, 1.442695
  %v2650 = vpow.pop %v2649
  %v2651 = vadd.f32 %v2650, 1.0
  %v2652 = vrcp.pop %v2651
  %v2653 = vmul.f32 1.0, %v2652
  %v2654 = vmul.f32 %v2646, %v2540
  %v2655 = vmul.f32 %v2640, %v2647
  %v2656 = vadd.f32 %v2654, %v2655
  %v2657 = vtanh.pop %v2656
  %v2658 = vmul.f32 %v2653, %v2657
  %v2659 = vpack.c.bf16 %v2658, %v2658
  %2660 = vst [vmem:[%s1096] sm:$0xf] %v2659
  %v2661 = vld [vmem:[%s1098] sm:$0xff]
  %v2662 = vld [vmem:[%s1098 + $0x8] sm:$0xff]
  %v2663 = vld [vmem:[%s1098 + $0x10] sm:$0xff]
  %v2664 = vld [vmem:[%s1098 + $0x18] sm:$0xff]
  %2665 = vmatprep.subr.bf16.mxu0 %v2022
  %2666 = vmatpush1.bf16.msra.mxu0 %v2021
  %2667 = vmatprep.subr.bf16.mxu0 %v2026
  %2668 = vmatpush1.bf16.msra.mxu0 %v2025
  %2669 = vmatprep.subr.bf16.mxu0 %v2030
  %2670 = vmatpush1.bf16.msra.mxu0 %v2029
  %2671 = vmatprep.subr.bf16.mxu0 %v2034
  %2672 = vmatpush1.bf16.msra.mxu0 %v2033
  %2673 = vmatprep.subr.bf16.mxu0 %v2038
  %2674 = vmatpush1.bf16.msra.mxu0 %v2037
  %2675 = vmatprep.subr.bf16.mxu0 %v2042
  %2676 = vmatpush1.bf16.msra.mxu0 %v2041
  %2677 = vmatprep.subr.bf16.mxu0 %v2046
  %2678 = vmatpush1.bf16.msra.mxu0 %v2045
  %2679 = vmatprep.subr.bf16.mxu0 %v2050
  %2680 = vmatpush1.bf16.msra.mxu0 %v2049
  %2681 = vmatprep.subr.bf16.mxu0 0
  %2682 = vmatpush1.bf16.msra.mxu0 0
  %2683 = vmatprep.subr.bf16.mxu0 0
  %2684 = vmatpush1.bf16.msra.mxu0 0
  %2685 = vmatprep.subr.bf16.mxu0 0
  %2686 = vmatpush1.bf16.msra.mxu0 0
  %2687 = vmatprep.subr.bf16.mxu0 0
  %2688 = vmatpush1.bf16.msra.mxu0 0
  %2689 = vmatprep.subr.bf16.mxu0 0
  %2690 = vmatpush1.bf16.msra.mxu0 0
  %2691 = vmatprep.subr.bf16.mxu0 0
  %2692 = vmatpush1.bf16.msra.mxu0 0
  %2693 = vmatprep.subr.bf16.mxu0 0
  %2694 = vmatpush1.bf16.msra.mxu0 0
  %2695 = vmatprep.subr.bf16.mxu0 0
  %2696 = vmatpush1.bf16.msra.mxu0 0
  %2697 = vmatprep.mubr.bf16.mxu0 0
  %2698 = vmatmul.mubr.bf16.gmra.mrb[0].mxu0 %v2659
  %v2699 = vpop.f32.mrb[0].mxu0
  %v2700 = vadd.f32 0.0, %v2699
  %v2701 = vpop.f32.mrb[0].mxu0
  %v2702 = vadd.f32 0.0, %v2701
  %v2703 = vpop.f32.mrb[0].mxu0
  %v2704 = vpop.f32.mrb[0].mxu0
  %2705 = vdwg.mxu0
  %2706 = vmatprep.subr.bf16.mxu0 %v2024
  %2707 = vmatpush1.bf16.msra.mxu0 %v2023
  %2708 = vmatprep.subr.bf16.mxu0 %v2028
  %2709 = vmatpush1.bf16.msra.mxu0 %v2027
  %2710 = vmatprep.subr.bf16.mxu0 %v2032
  %2711 = vmatpush1.bf16.msra.mxu0 %v2031
  %2712 = vmatprep.subr.bf16.mxu0 %v2036
  %2713 = vmatpush1.bf16.msra.mxu0 %v2035
  %2714 = vmatprep.subr.bf16.mxu0 %v2040
  %2715 = vmatpush1.bf16.msra.mxu0 %v2039
  %2716 = vmatprep.subr.bf16.mxu0 %v2044
  %2717 = vmatpush1.bf16.msra.mxu0 %v2043
  %2718 = vmatprep.subr.bf16.mxu0 %v2048
  %2719 = vmatpush1.bf16.msra.mxu0 %v2047
  %2720 = vmatprep.subr.bf16.mxu0 %v2052
  %2721 = vmatpush1.bf16.msra.mxu0 %v2051
  %2722 = vmatprep.subr.bf16.mxu0 0
  %2723 = vmatpush1.bf16.msra.mxu0 0
  %2724 = vmatprep.subr.bf16.mxu0 0
  %2725 = vmatpush1.bf16.msra.mxu0 0
  %2726 = vmatprep.subr.bf16.mxu0 0
  %2727 = vmatpush1.bf16.msra.mxu0 0
  %2728 = vmatprep.subr.bf16.mxu0 0
  %2729 = vmatpush1.bf16.msra.mxu0 0
  %2730 = vmatprep.subr.bf16.mxu0 0
  %2731 = vmatpush1.bf16.msra.mxu0 0
  %2732 = vmatprep.subr.bf16.mxu0 0
  %2733 = vmatpush1.bf16.msra.mxu0 0
  %2734 = vmatprep.subr.bf16.mxu0 0
  %2735 = vmatpush1.bf16.msra.mxu0 0
  %2736 = vmatprep.subr.bf16.mxu0 0
  %2737 = vmatpush1.bf16.msra.mxu0 0
  %2738 = vmatprep.mubr.bf16.mxu0 0
  %2739 = vmatmul.mubr.bf16.gmra.mrb[0].mxu0 %v2659
  %v2740 = vpop.f32.mrb[0].mxu0
  %v2741 = vadd.f32 0.0, %v2740
  %v2742 = vpop.f32.mrb[0].mxu0
  %v2743 = vadd.f32 0.0, %v2742
  %v2744 = vpop.f32.mrb[0].mxu0
  %v2745 = vpop.f32.mrb[0].mxu0
  %2746 = vdwg.mxu0
  %v2747 = vadd.f32 %v2661, %v2700
  %v2748 = vadd.f32 %v2662, %v2702
  %v2749 = vadd.f32 %v2663, %v2741
  %v2750 = vadd.f32 %v2664, %v2743
  %v2751 = vxor.u32 %v2747, 2147483648
  %v2752 = vmul.f32 %v2751, 1.442695
  %v2753 = vpow.pop %v2752
  %v2754 = vadd.f32 %v2753, 1.0
  %v2755 = vrcp.pop %v2754
  %v2756 = vmul.f32 1.0, %v2755
  %v2757 = vxor.u32 %v2748, 2147483648
  %v2758 = vmul.f32 %v2757, 1.442695
  %v2759 = vpow.pop %v2758
  %v2760 = vadd.f32 %v2759, 1.0
  %v2761 = vrcp.pop %v2760
  %v2762 = vmul.f32 1.0, %v2761
  %v2763 = vtanh.pop %v2749
  %v2764 = vxor.u32 %v2750, 2147483648
  %v2765 = vmul.f32 %v2764, 1.442695
  %v2766 = vpow.pop %v2765
  %v2767 = vadd.f32 %v2766, 1.0
  %v2768 = vrcp.pop %v2767
  %v2769 = vmul.f32 1.0, %v2768
  %v2770 = vmul.f32 %v2762, %v2656
  %v2771 = vmul.f32 %v2756, %v2763
  %v2772 = vadd.f32 %v2770, %v2771
  %v2773 = vtanh.pop %v2772
  %v2774 = vmul.f32 %v2769, %v2773
  %v2775 = vpack.c.bf16 %v2774, %v2774
  %2776 = vst [vmem:[%s1216] sm:$0xf] %v2775
  %v2777 = vld [vmem:[%s1218] sm:$0xff]
  %v2778 = vld [vmem:[%s1218 + $0x8] sm:$0xff]
  %v2779 = vld [vmem:[%s1218 + $0x10] sm:$0xff]
  %v2780 = vld [vmem:[%s1218 + $0x18] sm:$0xff]
  %2781 = vmatprep.subr.bf16.mxu0 %v2022
  %2782 = vmatpush1.bf16.msra.mxu0 %v2021
  %2783 = vmatprep.subr.bf16.mxu0 %v2026
  %2784 = vmatpush1.bf16.msra.mxu0 %v2025
  %2785 = vmatprep.subr.bf16.mxu0 %v2030
  %2786 = vmatpush1.bf16.msra.mxu0 %v2029
  %2787 = vmatprep.subr.bf16.mxu0 %v2034
  %2788 = vmatpush1.bf16.msra.mxu0 %v2033
  %2789 = vmatprep.subr.bf16.mxu0 %v2038
  %2790 = vmatpush1.bf16.msra.mxu0 %v2037
  %2791 = vmatprep.subr.bf16.mxu0 %v2042
  %2792 = vmatpush1.bf16.msra.mxu0 %v2041
  %2793 = vmatprep.subr.bf16.mxu0 %v2046
  %2794 = vmatpush1.bf16.msra.mxu0 %v2045
  %2795 = vmatprep.subr.bf16.mxu0 %v2050
  %2796 = vmatpush1.bf16.msra.mxu0 %v2049
  %2797 = vmatprep.subr.bf16.mxu0 0
  %2798 = vmatpush1.bf16.msra.mxu0 0
  %2799 = vmatprep.subr.bf16.mxu0 0
  %2800 = vmatpush1.bf16.msra.mxu0 0
  %2801 = vmatprep.subr.bf16.mxu0 0
  %2802 = vmatpush1.bf16.msra.mxu0 0
  %2803 = vmatprep.subr.bf16.mxu0 0
  %2804 = vmatpush1.bf16.msra.mxu0 0
  %2805 = vmatprep.subr.bf16.mxu0 0
  %2806 = vmatpush1.bf16.msra.mxu0 0
  %2807 = vmatprep.subr.bf16.mxu0 0
  %2808 = vmatpush1.bf16.msra.mxu0 0
  %2809 = vmatprep.subr.bf16.mxu0 0
  %2810 = vmatpush1.bf16.msra.mxu0 0
  %2811 = vmatprep.subr.bf16.mxu0 0
  %2812 = vmatpush1.bf16.msra.mxu0 0
  %2813 = vmatprep.mubr.bf16.mxu0 0
  %2814 = vmatmul.mubr.bf16.gmra.mrb[0].mxu0 %v2775
  %v2815 = vpop.f32.mrb[0].mxu0
  %v2816 = vadd.f32 0.0, %v2815
  %v2817 = vpop.f32.mrb[0].mxu0
  %v2818 = vadd.f32 0.0, %v2817
  %v2819 = vpop.f32.mrb[0].mxu0
  %v2820 = vpop.f32.mrb[0].mxu0
  %2821 = vdwg.mxu0
  %2822 = vmatprep.subr.bf16.mxu0 %v2024
  %2823 = vmatpush1.bf16.msra.mxu0 %v2023
  %2824 = vmatprep.subr.bf16.mxu0 %v2028
  %2825 = vmatpush1.bf16.msra.mxu0 %v2027
  %2826 = vmatprep.subr.bf16.mxu0 %v2032
  %2827 = vmatpush1.bf16.msra.mxu0 %v2031
  %2828 = vmatprep.subr.bf16.mxu0 %v2036
  %2829 = vmatpush1.bf16.msra.mxu0 %v2035
  %2830 = vmatprep.subr.bf16.mxu0 %v2040
  %2831 = vmatpush1.bf16.msra.mxu0 %v2039
  %2832 = vmatprep.subr.bf16.mxu0 %v2044
  %2833 = vmatpush1.bf16.msra.mxu0 %v2043
  %2834 = vmatprep.subr.bf16.mxu0 %v2048
  %2835 = vmatpush1.bf16.msra.mxu0 %v2047
  %2836 = vmatprep.subr.bf16.mxu0 %v2052
  %2837 = vmatpush1.bf16.msra.mxu0 %v2051
  %2838 = vmatprep.subr.bf16.mxu0 0
  %2839 = vmatpush1.bf16.msra.mxu0 0
  %2840 = vmatprep.subr.bf16.mxu0 0
  %2841 = vmatpush1.bf16.msra.mxu0 0
  %2842 = vmatprep.subr.bf16.mxu0 0
  %2843 = vmatpush1.bf16.msra.mxu0 0
  %2844 = vmatprep.subr.bf16.mxu0 0
  %2845 = vmatpush1.bf16.msra.mxu0 0
  %2846 = vmatprep.subr.bf16.mxu0 0
  %2847 = vmatpush1.bf16.msra.mxu0 0
  %2848 = vmatprep.subr.bf16.mxu0 0
  %2849 = vmatpush1.bf16.msra.mxu0 0
  %2850 = vmatprep.subr.bf16.mxu0 0
  %2851 = vmatpush1.bf16.msra.mxu0 0
  %2852 = vmatprep.subr.bf16.mxu0 0
  %2853 = vmatpush1.bf16.msra.mxu0 0
  %2854 = vmatprep.mubr.bf16.mxu0 0
  %2855 = vmatmul.mubr.bf16.gmra.mrb[0].mxu0 %v2775
  %v2856 = vpop.f32.mrb[0].mxu0
  %v2857 = vadd.f32 0.0, %v2856
  %v2858 = vpop.f32.mrb[0].mxu0
  %v2859 = vadd.f32 0.0, %v2858
  %v2860 = vpop.f32.mrb[0].mxu0
  %v2861 = vpop.f32.mrb[0].mxu0
  %2862 = vdwg.mxu0
  %v2863 = vadd.f32 %v2777, %v2816
  %v2864 = vadd.f32 %v2778, %v2818
  %v2865 = vadd.f32 %v2779, %v2857
  %v2866 = vadd.f32 %v2780, %v2859
  %v2867 = vxor.u32 %v2863, 2147483648
  %v2868 = vmul.f32 %v2867, 1.442695
  %v2869 = vpow.pop %v2868
  %v2870 = vadd.f32 %v2869, 1.0
  %v2871 = vrcp.pop %v2870
  %v2872 = vmul.f32 1.0, %v2871
  %v2873 = vxor.u32 %v2864, 2147483648
  %v2874 = vmul.f32 %v2873, 1.442695
  %v2875 = vpow.pop %v2874
  %v2876 = vadd.f32 %v2875, 1.0
  %v2877 = vrcp.pop %v2876
  %v2878 = vmul.f32 1.0, %v2877
  %v2879 = vtanh.pop %v2865
  %v2880 = vxor.u32 %v2866, 2147483648
  %v2881 = vmul.f32 %v2880, 1.442695
  %v2882 = vpow.pop %v2881
  %v2883 = vadd.f32 %v2882, 1.0
  %v2884 = vrcp.pop %v2883
  %v2885 = vmul.f32 1.0, %v2884
  %v2886 = vmul.f32 %v2878, %v2772
  %v2887 = vmul.f32 %v2872, %v2879
  %v2888 = vadd.f32 %v2886, %v2887
  %v2889 = vtanh.pop %v2888
  %v2890 = vmul.f32 %v2885, %v2889
  %v2891 = vpack.c.bf16 %v2890, %v2890
  %2892 = vst [vmem:[%s1336] sm:$0xf] %v2891
  %v2893 = vld [vmem:[%s1338] sm:$0xff]
  %v2894 = vld [vmem:[%s1338 + $0x8] sm:$0xff]
  %v2895 = vld [vmem:[%s1338 + $0x10] sm:$0xff]
  %v2896 = vld [vmem:[%s1338 + $0x18] sm:$0xff]
  %2897 = vmatprep.subr.bf16.mxu0 %v2022
  %2898 = vmatpush1.bf16.msra.mxu0 %v2021
  %2899 = vmatprep.subr.bf16.mxu0 %v2026
  %2900 = vmatpush1.bf16.msra.mxu0 %v2025
  %2901 = vmatprep.subr.bf16.mxu0 %v2030
  %2902 = vmatpush1.bf16.msra.mxu0 %v2029
  %2903 = vmatprep.subr.bf16.mxu0 %v2034
  %2904 = vmatpush1.bf16.msra.mxu0 %v2033
  %2905 = vmatprep.subr.bf16.mxu0 %v2038
  %2906 = vmatpush1.bf16.msra.mxu0 %v2037
  %2907 = vmatprep.subr.bf16.mxu0 %v2042
  %2908 = vmatpush1.bf16.msra.mxu0 %v2041
  %2909 = vmatprep.subr.bf16.mxu0 %v2046
  %2910 = vmatpush1.bf16.msra.mxu0 %v2045
  %2911 = vmatprep.subr.bf16.mxu0 %v2050
  %2912 = vmatpush1.bf16.msra.mxu0 %v2049
  %2913 = vmatprep.subr.bf16.mxu0 0
  %2914 = vmatpush1.bf16.msra.mxu0 0
  %2915 = vmatprep.subr.bf16.mxu0 0
  %2916 = vmatpush1.bf16.msra.mxu0 0
  %2917 = vmatprep.subr.bf16.mxu0 0
  %2918 = vmatpush1.bf16.msra.mxu0 0
  %2919 = vmatprep.subr.bf16.mxu0 0
  %2920 = vmatpush1.bf16.msra.mxu0 0
  %2921 = vmatprep.subr.bf16.mxu0 0
  %2922 = vmatpush1.bf16.msra.mxu0 0
  %2923 = vmatprep.subr.bf16.mxu0 0
  %2924 = vmatpush1.bf16.msra.mxu0 0
  %2925 = vmatprep.subr.bf16.mxu0 0
  %2926 = vmatpush1.bf16.msra.mxu0 0
  %2927 = vmatprep.subr.bf16.mxu0 0
  %2928 = vmatpush1.bf16.msra.mxu0 0
  %2929 = vmatprep.mubr.bf16.mxu0 0
  %2930 = vmatmul.mubr.bf16.gmra.mrb[0].mxu0 %v2891
  %v2931 = vpop.f32.mrb[0].mxu0
  %v2932 = vadd.f32 0.0, %v2931
  %v2933 = vpop.f32.mrb[0].mxu0
  %v2934 = vadd.f32 0.0, %v2933
  %v2935 = vpop.f32.mrb[0].mxu0
  %v2936 = vpop.f32.mrb[0].mxu0
  %2937 = vdwg.mxu0
  %2938 = vmatprep.subr.bf16.mxu0 %v2024
  %2939 = vmatpush1.bf16.msra.mxu0 %v2023
  %2940 = vmatprep.subr.bf16.mxu0 %v2028
  %2941 = vmatpush1.bf16.msra.mxu0 %v2027
  %2942 = vmatprep.subr.bf16.mxu0 %v2032
  %2943 = vmatpush1.bf16.msra.mxu0 %v2031
  %2944 = vmatprep.subr.bf16.mxu0 %v2036
  %2945 = vmatpush1.bf16.msra.mxu0 %v2035
  %2946 = vmatprep.subr.bf16.mxu0 %v2040
  %2947 = vmatpush1.bf16.msra.mxu0 %v2039
  %2948 = vmatprep.subr.bf16.mxu0 %v2044
  %2949 = vmatpush1.bf16.msra.mxu0 %v2043
  %2950 = vmatprep.subr.bf16.mxu0 %v2048
  %2951 = vmatpush1.bf16.msra.mxu0 %v2047
  %2952 = vmatprep.subr.bf16.mxu0 %v2052
  %2953 = vmatpush1.bf16.msra.mxu0 %v2051
  %2954 = vmatprep.subr.bf16.mxu0 0
  %2955 = vmatpush1.bf16.msra.mxu0 0
  %2956 = vmatprep.subr.bf16.mxu0 0
  %2957 = vmatpush1.bf16.msra.mxu0 0
  %2958 = vmatprep.subr.bf16.mxu0 0
  %2959 = vmatpush1.bf16.msra.mxu0 0
  %2960 = vmatprep.subr.bf16.mxu0 0
  %2961 = vmatpush1.bf16.msra.mxu0 0
  %2962 = vmatprep.subr.bf16.mxu0 0
  %2963 = vmatpush1.bf16.msra.mxu0 0
  %2964 = vmatprep.subr.bf16.mxu0 0
  %2965 = vmatpush1.bf16.msra.mxu0 0
  %2966 = vmatprep.subr.bf16.mxu0 0
  %2967 = vmatpush1.bf16.msra.mxu0 0
  %2968 = vmatprep.subr.bf16.mxu0 0
  %2969 = vmatpush1.bf16.msra.mxu0 0
  %2970 = vmatprep.mubr.bf16.mxu0 0
  %2971 = vmatmul.mubr.bf16.gmra.mrb[0].mxu0 %v2891
  %v2972 = vpop.f32.mrb[0].mxu0
  %v2973 = vadd.f32 0.0, %v2972
  %v2974 = vpop.f32.mrb[0].mxu0
  %v2975 = vadd.f32 0.0, %v2974
  %v2976 = vpop.f32.mrb[0].mxu0
  %v2977 = vpop.f32.mrb[0].mxu0
  %2978 = vdwg.mxu0
  %v2979 = vadd.f32 %v2893, %v2932
  %v2980 = vadd.f32 %v2894, %v2934
  %v2981 = vadd.f32 %v2895, %v2973
  %v2982 = vadd.f32 %v2896, %v2975
  %v2983 = vxor.u32 %v2979, 2147483648
  %v2984 = vmul.f32 %v2983, 1.442695
  %v2985 = vpow.pop %v2984
  %v2986 = vadd.f32 %v2985, 1.0
  %v2987 = vrcp.pop %v2986
  %v2988 = vmul.f32 1.0, %v2987
  %v2989 = vxor.u32 %v2980, 2147483648
  %v2990 = vmul.f32 %v2989, 1.442695
  %v2991 = vpow.pop %v2990
  %v2992 = vadd.f32 %v2991, 1.0
  %v2993 = vrcp.pop %v2992
  %v2994 = vmul.f32 1.0, %v2993
  %v2995 = vtanh.pop %v2981
  %v2996 = vxor.u32 %v2982, 2147483648
  %v2997 = vmul.f32 %v2996, 1.442695
  %v2998 = vpow.pop %v2997
  %v2999 = vadd.f32 %v2998, 1.0
  %v3000 = vrcp.pop %v2999
  %v3001 = vmul.f32 1.0, %v3000
  %v3002 = vmul.f32 %v2994, %v2888
  %v3003 = vmul.f32 %v2988, %v2995
  %v3004 = vadd.f32 %v3002, %v3003
  %v3005 = vtanh.pop %v3004
  %v3006 = vmul.f32 %v3001, %v3005
  %v3007 = vpack.c.bf16 %v3006, %v3006
  %3008 = vst [vmem:[%s1456] sm:$0xf] %v3007
  %s3009 = scalar_lea.vmem %s12, 8
  %3010 = vst [vmem:[%s3009] sm:$0xff] %v3006
  %s3011 = scalar_lea.vmem %s13, 8
  %3012 = vst [vmem:[%s3011] sm:$0xff] %v3004
  %v3013 = vld [vmem:[#allocation3] sm:$0xf]
  %v3014 = vld [vmem:[#allocation3 + $0x4] sm:$0xf]
  %v3015 = vld [vmem:[#allocation3 + $0x8] sm:$0xf]
  %v3016 = vld [vmem:[#allocation3 + $0xc] sm:$0xf]
  %v3017 = vld [vmem:[#allocation3 + $0x10] sm:$0xf]
  %v3018 = vld [vmem:[#allocation3 + $0x14] sm:$0xf]
  %v3019 = vld [vmem:[#allocation3 + $0x18] sm:$0xf]
  %v3020 = vld [vmem:[#allocation3 + $0x1c] sm:$0xf]
  %v3021 = vmax.bf16 %v3013, 0
  %v3022 = vmax.bf16 %v3014, 0
  %v3023 = vmax.bf16 %v3015, 0
  %v3024 = vmax.bf16 %v3016, 0
  %v3025 = vmax.bf16 %v3017, 0
  %v3026 = vmax.bf16 %v3018, 0
  %v3027 = vmax.bf16 %v3019, 0
  %v3028 = vmax.bf16 %v3020, 0
  %v3029 = vld [vmem:[%s9] sm:$0xf]
  %v3030 = vld [vmem:[%s9 + $0x4] sm:$0xf]
  %v3031 = vld [vmem:[%s9 + $0x8] sm:$0xf]
  %v3032 = vld [vmem:[%s9 + $0xc] sm:$0xf]
  %v3033 = vld [vmem:[%s9 + $0x10] sm:$0xf]
  %v3034 = vld [vmem:[%s9 + $0x14] sm:$0xf]
  %v3035 = vld [vmem:[%s9 + $0x18] sm:$0xf]
  %v3036 = vld [vmem:[%s9 + $0x1c] sm:$0xf]
  %v3037 = vld [vmem:[%s9 + $0x20] sm:$0xf]
  %v3038 = vld [vmem:[%s9 + $0x24] sm:$0xf]
  %v3039 = vld [vmem:[%s9 + $0x28] sm:$0xf]
  %v3040 = vld [vmem:[%s9 + $0x2c] sm:$0xf]
  %v3041 = vld [vmem:[%s9 + $0x30] sm:$0xf]
  %v3042 = vld [vmem:[%s9 + $0x34] sm:$0xf]
  %v3043 = vld [vmem:[%s9 + $0x38] sm:$0xf]
  %v3044 = vld [vmem:[%s9 + $0x3c] sm:$0xf]
  %v3045 = vld [vmem:[%s10] sm:$0x1]
  %v3047 = vlaneseq
  %v3048 = vshrl.u32 %v3047, 7
  %v3049 = vsub.s32 0, %v3048
  %v3050 = vrot.slane %v3045, %v3049
  %v3060 = vunpack.c.l.b16 %v3021
  %v3061 = vunpack.c.l.b16 %v3022
  %v3062 = vunpack.c.l.b16 %v3023
  %v3063 = vunpack.c.l.b16 %v3024
  %v3064 = vunpack.c.l.b16 %v3025
  %v3065 = vunpack.c.l.b16 %v3026
  %v3066 = vunpack.c.l.b16 %v3027
  %v3067 = vunpack.c.l.b16 %v3028
  %v3068 = vpack.c.b16 %v3061, %v3060
  %v3069 = vpack.c.b16 %v3063, %v3062
  %v3070 = vpack.c.b16 %v3065, %v3064
  %v3071 = vpack.c.b16 %v3067, %v3066
  %v3092 = vunpack.c.l.b16 %v3029
  %v3093 = vunpack.c.l.b16 %v3030
  %v3094 = vunpack.c.l.b16 %v3031
  %v3095 = vunpack.c.l.b16 %v3032
  %v3096 = vunpack.c.l.b16 %v3033
  %v3097 = vunpack.c.l.b16 %v3034
  %v3098 = vunpack.c.l.b16 %v3035
  %v3099 = vunpack.c.l.b16 %v3036
  %v3100 = vunpack.c.l.b16 %v3037
  %v3101 = vunpack.c.l.b16 %v3038
  %v3102 = vunpack.c.l.b16 %v3039
  %v3103 = vunpack.c.l.b16 %v3040
  %v3104 = vunpack.c.l.b16 %v3041
  %v3105 = vunpack.c.l.b16 %v3042
  %v3106 = vunpack.c.l.b16 %v3043
  %v3107 = vunpack.c.l.b16 %v3044
  %v3108 = vpack.c.b16 %v3093, %v3092
  %v3109 = vpack.c.b16 %v3095, %v3094
  %v3110 = vpack.c.b16 %v3097, %v3096
  %v3111 = vpack.c.b16 %v3099, %v3098
  %v3112 = vpack.c.b16 %v3101, %v3100
  %v3113 = vpack.c.b16 %v3103, %v3102
  %v3114 = vpack.c.b16 %v3105, %v3104
  %v3115 = vpack.c.b16 %v3107, %v3106
  %3124 = vmatprep.subr.bf16.mxu0 0
  %3125 = vmatpush1.bf16.msra.mxu0 %v3108
  %3126 = vmatprep.subr.bf16.mxu0 0
  %3127 = vmatpush1.bf16.msra.mxu0 %v3109
  %3128 = vmatprep.subr.bf16.mxu0 0
  %3129 = vmatpush1.bf16.msra.mxu0 %v3110
  %3130 = vmatprep.subr.bf16.mxu0 0
  %3131 = vmatpush1.bf16.msra.mxu0 %v3111
  %3132 = vmatprep.subr.bf16.mxu0 0
  %3133 = vmatpush1.bf16.msra.mxu0 %v3112
  %3134 = vmatprep.subr.bf16.mxu0 0
  %3135 = vmatpush1.bf16.msra.mxu0 %v3113
  %3136 = vmatprep.subr.bf16.mxu0 0
  %3137 = vmatpush1.bf16.msra.mxu0 %v3114
  %3138 = vmatprep.subr.bf16.mxu0 0
  %3139 = vmatpush1.bf16.msra.mxu0 %v3115
  %3140 = vmatprep.subr.bf16.mxu0 0
  %3141 = vmatpush1.bf16.msra.mxu0 0
  %3142 = vmatprep.subr.bf16.mxu0 0
  %3143 = vmatpush1.bf16.msra.mxu0 0
  %3144 = vmatprep.subr.bf16.mxu0 0
  %3145 = vmatpush1.bf16.msra.mxu0 0
  %3146 = vmatprep.subr.bf16.mxu0 0
  %3147 = vmatpush1.bf16.msra.mxu0 0
  %3148 = vmatprep.subr.bf16.mxu0 0
  %3149 = vmatpush1.bf16.msra.mxu0 0
  %3150 = vmatprep.subr.bf16.mxu0 0
  %3151 = vmatpush1.bf16.msra.mxu0 0
  %3152 = vmatprep.subr.bf16.mxu0 0
  %3153 = vmatpush1.bf16.msra.mxu0 0
  %3154 = vmatprep.subr.bf16.mxu0 0
  %3155 = vmatpush1.bf16.msra.mxu0 0
  %3156 = vmatprep.mubr.bf16.mxu0 0
  %3157 = vmatmul.mubr.bf16.gmra.mrb[0].mxu0 %v3068
  %v3158 = vpop.f32.mrb[0].mxu0
  %v3159 = vadd.f32 %v3050, %v3158
  %v3160 = vpop.f32.mrb[0].mxu0
  %v3161 = vpop.f32.mrb[0].mxu0
  %v3162 = vadd.f32 %v3050, %v3161
  %v3163 = vpop.f32.mrb[0].mxu0
  %3164 = vmatprep.mubr.bf16.mxu0 0
  %3165 = vmatmul.mubr.bf16.gmra.mrb[0].mxu0 %v3069
  %v3166 = vpop.f32.mrb[0].mxu0
  %v3167 = vadd.f32 %v3050, %v3166
  %v3168 = vpop.f32.mrb[0].mxu0
  %v3169 = vpop.f32.mrb[0].mxu0
  %v3170 = vadd.f32 %v3050, %v3169
  %v3171 = vpop.f32.mrb[0].mxu0
  %3172 = vmatprep.mubr.bf16.mxu0 0
  %3173 = vmatmul.mubr.bf16.gmra.mrb[0].mxu0 %v3070
  %v3174 = vpop.f32.mrb[0].mxu0
  %v3175 = vadd.f32 %v3050, %v3174
  %v3176 = vpop.f32.mrb[0].mxu0
  %v3177 = vpop.f32.mrb[0].mxu0
  %v3178 = vadd.f32 %v3050, %v3177
  %v3179 = vpop.f32.mrb[0].mxu0
  %3180 = vmatprep.mubr.bf16.mxu0 0
  %3181 = vmatmul.mubr.bf16.gmra.mrb[0].mxu0 %v3071
  %v3182 = vpop.f32.mrb[0].mxu0
  %v3183 = vadd.f32 %v3050, %v3182
  %v3184 = vpop.f32.mrb[0].mxu0
  %v3185 = vpop.f32.mrb[0].mxu0
  %v3186 = vadd.f32 %v3050, %v3185
  %v3187 = vpop.f32.mrb[0].mxu0
  %3188 = vdwg.mxu0
  %v3189 = vlaneseq
  %v3190 = vand.u32 %v3189, 127
  %vm3191 = vcmp.lt.s32.totalorder %v3190, 18
  %v3192 = vsel %vm3191, %v3159, -1e+30
  %v3193 = vsel %vm3191, %v3162, -1e+30
  %v3194 = vsel %vm3191, %v3167, -1e+30
  %v3195 = vsel %vm3191, %v3170, -1e+30
  %v3196 = vsel %vm3191, %v3175, -1e+30
  %v3197 = vsel %vm3191, %v3178, -1e+30
  %v3198 = vsel %vm3191, %v3183, -1e+30
  %v3199 = vsel %vm3191, %v3186, -1e+30
  %3200 = vmax.xlane.f32.xlu0 %v3192
  %v3201 = vpop.xlane.xlu0 %3200
  %3202 = vmax.xlane.f32.xlu0 %v3193
  %v3203 = vpop.xlane.xlu0 %3202
  %3204 = vmax.xlane.f32.xlu0 %v3194
  %v3205 = vpop.xlane.xlu0 %3204
  %3206 = vmax.xlane.f32.xlu0 %v3195
  %v3207 = vpop.xlane.xlu0 %3206
  %3208 = vmax.xlane.f32.xlu0 %v3196
  %v3209 = vpop.xlane.xlu0 %3208
  %3210 = vmax.xlane.f32.xlu0 %v3197
  %v3211 = vpop.xlane.xlu0 %3210
  %3212 = vmax.xlane.f32.xlu0 %v3198
  %v3213 = vpop.xlane.xlu0 %3212
  %3214 = vmax.xlane.f32.xlu0 %v3199
  %v3215 = vpop.xlane.xlu0 %3214
  %v3216 = vsub.f32 %v3192, %v3201
  %v3217 = vsub.f32 %v3193, %v3203
  %v3218 = vsub.f32 %v3194, %v3205
  %v3219 = vsub.f32 %v3195, %v3207
  %v3220 = vsub.f32 %v3196, %v3209
  %v3221 = vsub.f32 %v3197, %v3211
  %v3222 = vsub.f32 %v3198, %v3213
  %v3223 = vsub.f32 %v3199, %v3215
  %v3224 = vmul.f32 %v3216, 1.442695
  %v3225 = vpow.pop %v3224
  %v3226 = vmul.f32 %v3217, 1.442695
  %v3227 = vpow.pop %v3226
  %v3228 = vmul.f32 %v3218, 1.442695
  %v3229 = vpow.pop %v3228
  %v3230 = vmul.f32 %v3219, 1.442695
  %v3231 = vpow.pop %v3230
  %v3232 = vmul.f32 %v3220, 1.442695
  %v3233 = vpow.pop %v3232
  %v3234 = vmul.f32 %v3221, 1.442695
  %v3235 = vpow.pop %v3234
  %v3236 = vmul.f32 %v3222, 1.442695
  %v3237 = vpow.pop %v3236
  %v3238 = vmul.f32 %v3223, 1.442695
  %v3239 = vpow.pop %v3238
  %3240 = vadd.xlane.f32.xlu0 %v3225
  %v3241 = vpop.xlane.xlu0 %3240
  %3242 = vadd.xlane.f32.xlu0 %v3227
  %v3243 = vpop.xlane.xlu0 %3242
  %3244 = vadd.xlane.f32.xlu0 %v3229
  %v3245 = vpop.xlane.xlu0 %3244
  %3246 = vadd.xlane.f32.xlu0 %v3231
  %v3247 = vpop.xlane.xlu0 %3246
  %3248 = vadd.xlane.f32.xlu0 %v3233
  %v3249 = vpop.xlane.xlu0 %3248
  %3250 = vadd.xlane.f32.xlu0 %v3235
  %v3251 = vpop.xlane.xlu0 %3250
  %3252 = vadd.xlane.f32.xlu0 %v3237
  %v3253 = vpop.xlane.xlu0 %3252
  %3254 = vadd.xlane.f32.xlu0 %v3239
  %v3255 = vpop.xlane.xlu0 %3254
  %v3256 = vlog2.pop %v3241
  %v3257 = vmul.f32 %v3256, 0.6931472
  %v3258 = vlog2.pop %v3243
  %v3259 = vmul.f32 %v3258, 0.6931472
  %v3260 = vlog2.pop %v3245
  %v3261 = vmul.f32 %v3260, 0.6931472
  %v3262 = vlog2.pop %v3247
  %v3263 = vmul.f32 %v3262, 0.6931472
  %v3264 = vlog2.pop %v3249
  %v3265 = vmul.f32 %v3264, 0.6931472
  %v3266 = vlog2.pop %v3251
  %v3267 = vmul.f32 %v3266, 0.6931472
  %v3268 = vlog2.pop %v3253
  %v3269 = vmul.f32 %v3268, 0.6931472
  %v3270 = vlog2.pop %v3255
  %v3271 = vmul.f32 %v3270, 0.6931472
  %v3272 = vadd.f32 %v3201, %v3257
  %v3273 = vadd.f32 %v3203, %v3259
  %v3274 = vadd.f32 %v3205, %v3261
  %v3275 = vadd.f32 %v3207, %v3263
  %v3276 = vadd.f32 %v3209, %v3265
  %v3277 = vadd.f32 %v3211, %v3267
  %v3278 = vadd.f32 %v3213, %v3269
  %v3279 = vadd.f32 %v3215, %v3271
  %v3280 = vsub.f32 %v3192, %v3272
  %v3281 = vsub.f32 %v3193, %v3273
  %v3282 = vsub.f32 %v3194, %v3274
  %v3283 = vsub.f32 %v3195, %v3275
  %v3284 = vsub.f32 %v3196, %v3276
  %v3285 = vsub.f32 %v3197, %v3277
  %v3286 = vsub.f32 %v3198, %v3278
  %v3287 = vsub.f32 %v3199, %v3279
  %3288 = vst [vmem:[%s11] sm:$0xff] %v3280
  %3289 = vst [vmem:[%s11 + $0x8] sm:$0xff] %v3281
  %3290 = vst [vmem:[%s11 + $0x10] sm:$0xff] %v3282
  %3291 = vst [vmem:[%s11 + $0x18] sm:$0xff] %v3283
  %3292 = vst [vmem:[%s11 + $0x20] sm:$0xff] %v3284
  %3293 = vst [vmem:[%s11 + $0x28] sm:$0xff] %v3285
  %3294 = vst [vmem:[%s11 + $0x30] sm:$0xff] %v3286
  %3295 = vst [vmem:[%s11 + $0x38] sm:$0xff] %v3287
  // Predicated region
  $region46: #{rnn_text_gen_forward.1} parent=0 // pred_check
    _
  $region47: #{rnn_text_gen_forward.1} parent=0 // pred_check_branch
    %3297 = sbr.rel (0) target = $region49
  $region48: #{rnn_text_gen_forward.1} parent=0 // pred_region
    _
  $region49: #{rnn_text_gen_forward.1} parent=0 // pred_fallthru
    _
  // Predicated region
  $region50: #{rnn_text_gen_forward.1} parent=0 // pred_check
    _
  $region51: #{rnn_text_gen_forward.1} parent=0 // pred_check_branch
    %3299 = sbr.rel (0) target = $region53
  $region52: #{rnn_text_gen_forward.1} parent=0 // pred_region
    _
  $region53: #{rnn_text_gen_forward.1} parent=0 // pred_fallthru
    _
  // Predicated region
  $region54: #{rnn_text_gen_forward.1} parent=0 // pred_check
    _
  $region55: #{rnn_text_gen_forward.1} parent=0 // pred_check_branch
    %3301 = sbr.rel (0) target = $region57
  $region56: #{rnn_text_gen_forward.1} parent=0 // pred_region
    _
  $region57: #{rnn_text_gen_forward.1} parent=0 // pred_fallthru
    _
  // Predicated region
  $region58: #{rnn_text_gen_forward.1} parent=0 // pred_check
    _
  $region59: #{rnn_text_gen_forward.1} parent=0 // pred_check_branch
    %3303 = sbr.rel (0) target = $region61
  $region60: #{rnn_text_gen_forward.1} parent=0 // pred_region
    _
  $region61: #{rnn_text_gen_forward.1} parent=0 // pred_fallthru
    _
  // Predicated region
  $region62: #{rnn_text_gen_forward.1} parent=0 // pred_check
    _
  $region63: #{rnn_text_gen_forward.1} parent=0 // pred_check_branch
    %3305 = sbr.rel (0) target = $region65
  $region64: #{rnn_text_gen_forward.1} parent=0 // pred_region
    _
  $region65: #{rnn_text_gen_forward.1} parent=0 // pred_fallthru
    _
  // Predicated region
  $region66: #{rnn_text_gen_forward.1} parent=0 // pred_check
    _
  $region67: #{rnn_text_gen_forward.1} parent=0 // pred_check_branch
    %3307 = sbr.rel (0) target = $region69
  $region68: #{rnn_text_gen_forward.1} parent=0 // pred_region
    _
  $region69: #{rnn_text_gen_forward.1} parent=0 // pred_fallthru
    _

</llo_original>
